<compile_context>
chip_gen: v5e
topology: v5e:2x2
jax: 0.10.0
libtpu: 0.0.40
codegen_flags: <defaults>
</compile_context>

<pallas_src>
import functools

import jax
import jax.numpy as jnp
from jax.experimental import pallas as pl
from jax.experimental.pallas import tpu as pltpu


# ----------------------------------------------------------------------------
# Fused Pallas kernels: conv-as-matmul (MXU) + BatchNorm + activation epilogue
# ----------------------------------------------------------------------------
def conv_bn_relu_kernel(w_ref, c_ref, g_ref, b_ref, o_ref, *, inv_count, eps):
    """o = relu(batchnorm(W @ cols)).  W:(Co,K) cols:(K,M) o:(Co,M)."""
    acc = jnp.dot(w_ref[...], c_ref[...], preferred_element_type=jnp.float32)
    mean = jnp.sum(acc, axis=1, keepdims=True) * inv_count
    xc = acc - mean
    var = jnp.sum(xc * xc, axis=1, keepdims=True) * inv_count
    scale = g_ref[...] * jax.lax.rsqrt(var + eps)
    o_ref[...] = jnp.maximum(xc * scale + b_ref[...], 0.0)


def conv_bn_add_kernel(w_ref, c_ref, g_ref, b_ref, r_ref, o_ref, *, inv_count, eps):
    """o = residual + batchnorm(W @ cols)   (ResnetBlock tail, no ReLU)."""
    acc = jnp.dot(w_ref[...], c_ref[...], preferred_element_type=jnp.float32)
    mean = jnp.sum(acc, axis=1, keepdims=True) * inv_count
    xc = acc - mean
    var = jnp.sum(xc * xc, axis=1, keepdims=True) * inv_count
    scale = g_ref[...] * jax.lax.rsqrt(var + eps)
    o_ref[...] = r_ref[...] + xc * scale + b_ref[...]


def conv_bias_tanh_kernel(w_ref, c_ref, bias_ref, o_ref):
    """o = tanh(W @ cols + bias)   (final layer; M axis tiled / parallel)."""
    acc = jnp.dot(w_ref[...], c_ref[...], preferred_element_type=jnp.float32)
    o_ref[...] = jnp.tanh(acc + bias_ref[...])


# ----------------------------------------------------------------------------
# Pallas wrappers (single-step grids, full-array blocks, no padding copies)
# ----------------------------------------------------------------------------
def fused_conv_bn(colsT, w2t, gamma, beta, residual=None, eps=1e-5):
    """out(Co,M) = epilogue(W(Co,K) @ cols(K,M)); BN (+ReLU or +residual) fused."""
    out_c, K = w2t.shape
    _, M = colsT.shape
    g2 = gamma.reshape(out_c, 1).astype(jnp.float32)
    b2 = beta.reshape(out_c, 1).astype(jnp.float32)

    in_specs = [
        pl.BlockSpec((out_c, K), lambda i: (0, 0)),
        pl.BlockSpec((K, M), lambda i: (0, 0)),
        pl.BlockSpec((out_c, 1), lambda i: (0, 0)),
        pl.BlockSpec((out_c, 1), lambda i: (0, 0)),
    ]
    args = [w2t, colsT, g2, b2]
    if residual is None:
        kern = functools.partial(conv_bn_relu_kernel, inv_count=1.0 / M, eps=eps)
    else:
        kern = functools.partial(conv_bn_add_kernel, inv_count=1.0 / M, eps=eps)
        in_specs.append(pl.BlockSpec((out_c, M), lambda i: (0, 0)))
        args.append(residual.astype(jnp.float32))

    return pl.pallas_call(
        kern,
        out_shape=jax.ShapeDtypeStruct((out_c, M), jnp.float32),
        grid=(1,),
        in_specs=in_specs,
        out_specs=pl.BlockSpec((out_c, M), lambda i: (0, 0)),
        compiler_params=pltpu.CompilerParams(dimension_semantics=("arbitrary",)),
    )(*args)


def fused_conv_tanh(colsT, w2t, bias, tm=256):
    """Final conv + bias + tanh; M tiled with 'parallel' semantics (megacore)."""
    out_c, K = w2t.shape
    _, M = colsT.shape
    if M % tm != 0:
        tm = M  # single step if M isn't a multiple of the lane-aligned tile
    b2 = bias.reshape(out_c, 1).astype(jnp.float32)

    return pl.pallas_call(
        conv_bias_tanh_kernel,
        out_shape=jax.ShapeDtypeStruct((out_c, M), jnp.float32),
        grid=(M // tm,),
        in_specs=[
            pl.BlockSpec((out_c, K), lambda i: (0, 0)),
            pl.BlockSpec((K, tm), lambda i: (0, i)),
            pl.BlockSpec((out_c, 1), lambda i: (0, 0)),
        ],
        out_specs=pl.BlockSpec((out_c, tm), lambda i: (0, i)),
        compiler_params=pltpu.CompilerParams(dimension_semantics=("parallel",)),
    )(w2t, colsT, b2)


# ----------------------------------------------------------------------------
# Plain-JAX glue: padding / im2col / transposed-conv dilation (data movement)
# Channel-major layout (C, N, H, W) so cols(K, M) comes out lane-dense in M.
# ----------------------------------------------------------------------------
def im2col_cm(x, kh, kw, stride):
    """x: (C, N, H, W) (already padded) -> cols (kh*kw*C, N*OH*OW).
    K index order = ((i*kw)+j)*C + c, matching the weight reshape below."""
    C, N, H, W = x.shape
    oh = (H - kh) // stride + 1
    ow = (W - kw) // stride + 1
    rows = []
    for i in range(kh):
        for j in range(kw):
            rows.append(
                x[:, :, i:i + stride * oh:stride, j:j + stride * ow:stride]
                .reshape(C, N * oh * ow))
    colsT = jnp.concatenate(rows, axis=0)  # (kh*kw*C, M)
    return colsT, (N, oh, ow)


def conv_operands(x, w, stride, pad_mode, pad):
    """x: (C,N,H,W), w: (out_c,in_c,kh,kw) -> (cols(K,M), wT(out_c,K), (N,oh,ow))."""
    if pad > 0:
        x = jnp.pad(x, ((0, 0), (0, 0), (pad, pad), (pad, pad)), mode=pad_mode)
    out_c, in_c, kh, kw = w.shape
    colsT, shp = im2col_cm(x, kh, kw, stride)
    w2t = jnp.transpose(w, (0, 2, 3, 1)).reshape(out_c, kh * kw * in_c)
    return colsT, w2t, shp


def conv_transpose_operands(x, w_t, stride, padding, output_padding):
    """ConvTranspose2d as a stride-1 conv of the zero-dilated, padded input
    with the flipped / channel-swapped kernel.  w_t: (in_c, out_c, kh, kw)."""
    C, N, H, W = x.shape
    in_c, out_c, kh, kw = w_t.shape
    xd = jnp.zeros((C, N, (H - 1) * stride + 1, (W - 1) * stride + 1), x.dtype)
    xd = xd.at[:, :, ::stride, ::stride].set(x)
    p_lo = kh - 1 - padding
    p_hi = kh - 1 - padding + output_padding
    xd = jnp.pad(xd, ((0, 0), (0, 0), (p_lo, p_hi), (p_lo, p_hi)))
    w = jnp.transpose(w_t, (1, 0, 2, 3))[:, :, ::-1, ::-1]  # (out, in, kh, kw), flipped
    return conv_operands(xd, w, 1, 'constant', 0)
    # NOTE: ~75% of the dilated input is zeros; a 4-phase subpixel decomposition
    # would shrink cols 4x, but at these tiny shapes the network is launch-bound.


# ----------------------------------------------------------------------------
# ResnetGenerator_down3 forward  (n_downsampling = 3)
# ----------------------------------------------------------------------------
def resnet_generator_forward(params, x_nchw):
    x = jnp.transpose(x_nchw, (1, 0, 2, 3)).astype(jnp.float32)  # NCHW -> CNHW

    def conv_bn_relu(x, w, g, b, stride, pad_mode, pad):
        colsT, w2t, (N, oh, ow) = conv_operands(x, w, stride, pad_mode, pad)
        y = fused_conv_bn(colsT, w2t, g, b)          # (out_c, N*oh*ow)
        return y.reshape(-1, N, oh, ow)

    # ReflectionPad2d(3) + Conv2d(input_nc, ngf, 7) + BN + ReLU
    x = conv_bn_relu(x, params['c1_w'], params['c1_g'], params['c1_b'], 1, 'reflect', 3)

    # 3 x stride-2 downsampling: Conv2d(k=3, s=2, p=1) + BN + ReLU
    for d in params['downs']:
        x = conv_bn_relu(x, d['w'], d['g'], d['b'], 2, 'constant', 1)

    # ResnetBlocks (reflect padding, no dropout):  out = x + conv_block(x)
    for blk in params['blocks']:
        C, N, H, W = x.shape
        res = x.reshape(C, N * H * W)
        h = conv_bn_relu(x, blk['w1'], blk['g1'], blk['b1'], 1, 'reflect', 1)
        colsT, w2t, _ = conv_operands(h, blk['w2'], 1, 'reflect', 1)
        y = fused_conv_bn(colsT, w2t, blk['g2'], blk['b2'], residual=res)
        x = y.reshape(C, N, H, W)

    # 3 x ConvTranspose2d(k=3, s=2, p=1, output_padding=1) + BN + ReLU
    for u in params['ups']:
        colsT, w2t, (N, oh, ow) = conv_transpose_operands(x, u['w'], 2, 1, 1)
        y = fused_conv_bn(colsT, w2t, u['g'], u['b'])
        x = y.reshape(-1, N, oh, ow)

    # ReflectionPad2d(3) + Conv2d(ngf, output_nc, 7, bias=True) + Tanh
    colsT, w2t, (N, oh, ow) = conv_operands(x, params['cf_w'], 1, 'reflect', 3)
    y = fused_conv_tanh(colsT, w2t, params['cf_bias'])
    out = y.reshape(-1, N, oh, ow)
    # learn_residual=False -> no residual add / clamp.
    return jnp.transpose(out, (1, 0, 2, 3))  # CNHW -> NCHW


# ----------------------------------------------------------------------------
# Deterministic parameter construction
# ----------------------------------------------------------------------------
def init_params(key, input_nc=3, output_nc=3, ngf=8, n_blocks=3):
    n_down = 3
    n_keys = 2 + n_down + 2 * n_blocks + n_down + 1
    keys = iter(jax.random.split(key, n_keys))

    def w(shape):
        return (0.05 * jax.random.normal(next(keys), shape)).astype(jnp.float32)

    def bn(c):
        # PyTorch BatchNorm2d default affine init: gamma=1, beta=0.
        return jnp.ones((c,), jnp.float32), jnp.zeros((c,), jnp.float32)

    p = {}
    p['c1_w'] = w((ngf, input_nc, 7, 7))
    p['c1_g'], p['c1_b'] = bn(ngf)

    downs = []
    for i in range(n_down):
        mult = 2 ** i
        g, b = bn(ngf * mult * 2)
        downs.append({'w': w((ngf * mult * 2, ngf * mult, 3, 3)), 'g': g, 'b': b})
    p['downs'] = downs

    dim = ngf * (2 ** n_down)
    blocks = []
    for _ in range(n_blocks):
        g1, b1 = bn(dim)
        g2, b2 = bn(dim)
        blocks.append({'w1': w((dim, dim, 3, 3)), 'g1': g1, 'b1': b1,
                       'w2': w((dim, dim, 3, 3)), 'g2': g2, 'b2': b2})
    p['blocks'] = blocks

    ups = []
    for i in range(n_down):
        mult = 2 ** (n_down - i)
        g, b = bn(ngf * mult // 2)
        # ConvTranspose2d weight layout: (in_channels, out_channels, kh, kw)
        ups.append({'w': w((ngf * mult, ngf * mult // 2, 3, 3)), 'g': g, 'b': b})
    p['ups'] = ups

    p['cf_w'] = w((output_nc, ngf, 7, 7))
    p['cf_bias'] = (0.05 * jax.random.normal(next(keys), (output_nc,))).astype(jnp.float32)
    return p


# TODO(synk): nn.Dropout branch (use_dropout=True) not implemented (default is False).
# TODO(synk): BatchNorm eval-mode running statistics not implemented (training-mode batch stats used).

if __name__ == "__main__":
    key = jax.random.PRNGKey(0)
    k_param, k_input = jax.random.split(key)

    params = init_params(k_param, input_nc=3, output_nc=3, ngf=8, n_blocks=3)
    x = jax.random.normal(k_input, (2, 3, 16, 16), dtype=jnp.float32)  # NCHW

    fwd = jax.jit(resnet_generator_forward)
    out = jax.block_until_ready(fwd(params, x))

    assert out.shape == (2, 3, 16, 16), out.shape
    assert bool(jnp.all(jnp.isfinite(out)))
    print("KERNEL_OK")
</pallas_src>

<mosaic_0001>
module attributes {stable_mosaic.version = 11 : i64} {
  func.func @conv_bn_relu_kernel(%arg0: i32, %arg1: memref<8x147xf32, #tpu.memory_space<vmem>>, %arg2: memref<147x512xf32, #tpu.memory_space<vmem>>, %arg3: memref<8x1xf32, #tpu.memory_space<vmem>>, %arg4: memref<8x1xf32, #tpu.memory_space<vmem>>, %arg5: memref<8x512xf32, #tpu.memory_space<vmem>>) attributes {dimension_semantics = [#tpu.dimension_semantics<arbitrary>], iteration_bounds = array<i64: 1>, scalar_prefetch = 0 : i64, scratch_operands = 0 : i64, tpu.core_type = #tpu.core_type<tc>, window_params = [{pipeline_mode = #tpu.pipeline_mode<synchronous>, transform_indices = @transform_0, window_bounds = array<i64: 8, 147>}, {pipeline_mode = #tpu.pipeline_mode<synchronous>, transform_indices = @transform_1, window_bounds = array<i64: 147, 512>}, {pipeline_mode = #tpu.pipeline_mode<synchronous>, transform_indices = @transform_2, window_bounds = array<i64: 8, 1>}, {pipeline_mode = #tpu.pipeline_mode<synchronous>, transform_indices = @transform_3, window_bounds = array<i64: 8, 1>}, {pipeline_mode = #tpu.pipeline_mode<synchronous>, transform_indices = @transform_4, window_bounds = array<i64: 8, 512>}]} {
    %c0 = arith.constant 0 : index
    %c0_0 = arith.constant 0 : index
    %0 = vector.load %arg1[%c0, %c0_0] : memref<8x147xf32, #tpu.memory_space<vmem>>, vector<8x147xf32>
    %c0_1 = arith.constant 0 : index
    %c0_2 = arith.constant 0 : index
    %1 = vector.load %arg2[%c0_1, %c0_2] : memref<147x512xf32, #tpu.memory_space<vmem>>, vector<147x512xf32>
    %cst = arith.constant dense<0.000000e+00> : vector<8x512xf32>
    %2 = tpu.matmul %0, %1, %cst {dimension_numbers = #tpu.dot_dimension_numbers<[1], [0], [0], [1], [0, 0, 1, 1], [], []>} : vector<8x147xf32>, vector<147x512xf32>, vector<8x512xf32> -> vector<8x512xf32>
    %cst_3 = arith.constant dense<0.000000e+00> : vector<8xf32>
    %3 = vector.multi_reduction <add>, %2, %cst_3 [1] : vector<8x512xf32> to vector<8xf32>
    %4 = vector.shape_cast %3 : vector<8xf32> to vector<8x1xf32>
    %cst_4 = arith.constant 0.001953125 : f32
    %5 = vector.broadcast %cst_4 : f32 to vector<8x1xf32>
    %6 = arith.mulf %4, %5 : vector<8x1xf32>
    %7 = vector.broadcast %6 : vector<8x1xf32> to vector<8x512xf32>
    %8 = arith.subf %2, %7 : vector<8x512xf32>
    %9 = arith.mulf %8, %8 : vector<8x512xf32>
    %cst_5 = arith.constant dense<0.000000e+00> : vector<8xf32>
    %10 = vector.multi_reduction <add>, %9, %cst_5 [1] : vector<8x512xf32> to vector<8xf32>
    %11 = vector.shape_cast %10 : vector<8xf32> to vector<8x1xf32>
    %cst_6 = arith.constant 0.001953125 : f32
    %12 = vector.broadcast %cst_6 : f32 to vector<8x1xf32>
    %13 = arith.mulf %11, %12 : vector<8x1xf32>
    %c0_7 = arith.constant 0 : index
    %c0_8 = arith.constant 0 : index
    %14 = vector.load %arg3[%c0_7, %c0_8] : memref<8x1xf32, #tpu.memory_space<vmem>>, vector<8x1xf32>
    %cst_9 = arith.constant 9.99999974E-6 : f32
    %15 = vector.broadcast %cst_9 : f32 to vector<8x1xf32>
    %16 = arith.addf %13, %15 : vector<8x1xf32>
    %17 = math.rsqrt %16 : vector<8x1xf32>
    %18 = arith.mulf %14, %17 : vector<8x1xf32>
    %19 = vector.broadcast %18 : vector<8x1xf32> to vector<8x512xf32>
    %20 = arith.mulf %8, %19 : vector<8x512xf32>
    %c0_10 = arith.constant 0 : index
    %c0_11 = arith.constant 0 : index
    %21 = vector.load %arg4[%c0_10, %c0_11] : memref<8x1xf32, #tpu.memory_space<vmem>>, vector<8x1xf32>
    %22 = vector.broadcast %21 : vector<8x1xf32> to vector<8x512xf32>
    %23 = arith.addf %20, %22 : vector<8x512xf32>
    %cst_12 = arith.constant 0.000000e+00 : f32
    %24 = vector.broadcast %cst_12 : f32 to vector<8x512xf32>
    %25 = arith.maximumf %23, %24 : vector<8x512xf32>
    %c0_13 = arith.constant 0 : index
    %c0_14 = arith.constant 0 : index
    %26 = vector.load %arg5[%c0_13, %c0_14] : memref<8x512xf32, #tpu.memory_space<vmem>>, vector<8x512xf32>
    tpu.vector_store %arg5[%c0_13, %c0_14], %25 {strides = array<i32>} : memref<8x512xf32, #tpu.memory_space<vmem>>, vector<8x512xf32>,
    return
  }
  func.func @transform_0(%arg0: i32) -> (i32, i32) {
    %c0_i32 = arith.constant 0 : i32
    %c0_i32_0 = arith.constant 0 : i32
    %c0_i32_1 = arith.constant 0 : i32
    return %c0_i32, %c0_i32_0 : i32, i32
  }
  func.func @transform_1(%arg0: i32) -> (i32, i32) {
    %c0_i32 = arith.constant 0 : i32
    %c0_i32_0 = arith.constant 0 : i32
    %c0_i32_1 = arith.constant 0 : i32
    return %c0_i32, %c0_i32_0 : i32, i32
  }
  func.func @transform_2(%arg0: i32) -> (i32, i32) {
    %c0_i32 = arith.constant 0 : i32
    %c0_i32_0 = arith.constant 0 : i32
    %c0_i32_1 = arith.constant 0 : i32
    return %c0_i32, %c0_i32_0 : i32, i32
  }
  func.func @transform_3(%arg0: i32) -> (i32, i32) {
    %c0_i32 = arith.constant 0 : i32
    %c0_i32_0 = arith.constant 0 : i32
    %c0_i32_1 = arith.constant 0 : i32
    return %c0_i32, %c0_i32_0 : i32, i32
  }
  func.func @transform_4(%arg0: i32) -> (i32, i32) {
    %c0_i32 = arith.constant 0 : i32
    %c0_i32_0 = arith.constant 0 : i32
    %c0_i32_1 = arith.constant 0 : i32
    return %c0_i32, %c0_i32_0 : i32, i32
  }
}

module attributes {stable_mosaic.version = 11 : i64} {
  func.func @conv_bn_relu_kernel(%arg0: i32, %arg1: memref<16x72xf32, #tpu.memory_space<vmem>>, %arg2: memref<72x128xf32, #tpu.memory_space<vmem>>, %arg3: memref<16x1xf32, #tpu.memory_space<vmem>>, %arg4: memref<16x1xf32, #tpu.memory_space<vmem>>, %arg5: memref<16x128xf32, #tpu.memory_space<vmem>>) attributes {dimension_semantics = [#tpu.dimension_semantics<arbitrary>], iteration_bounds = array<i64: 1>, scalar_prefetch = 0 : i64, scratch_operands = 0 : i64, tpu.core_type = #tpu.core_type<tc>, window_params = [{pipeline_mode = #tpu.pipeline_mode<synchronous>, transform_indices = @transform_0, window_bounds = array<i64: 16, 72>}, {pipeline_mode = #tpu.pipeline_mode<synchronous>, transform_indices = @transform_1, window_bounds = array<i64: 72, 128>}, {pipeline_mode = #tpu.pipeline_mode<synchronous>, transform_indices = @transform_2, window_bounds = array<i64: 16, 1>}, {pipeline_mode = #tpu.pipeline_mode<synchronous>, transform_indices = @transform_3, window_bounds = array<i64: 16, 1>}, {pipeline_mode = #tpu.pipeline_mode<synchronous>, transform_indices = @transform_4, window_bounds = array<i64: 16, 128>}]} {
    %c0 = arith.constant 0 : index
    %c0_0 = arith.constant 0 : index
    %0 = vector.load %arg1[%c0, %c0_0] : memref<16x72xf32, #tpu.memory_space<vmem>>, vector<16x72xf32>
    %c0_1 = arith.constant 0 : index
    %c0_2 = arith.constant 0 : index
    %1 = vector.load %arg2[%c0_1, %c0_2] : memref<72x128xf32, #tpu.memory_space<vmem>>, vector<72x128xf32>
    %cst = arith.constant dense<0.000000e+00> : vector<16x128xf32>
    %2 = tpu.matmul %0, %1, %cst {dimension_numbers = #tpu.dot_dimension_numbers<[1], [0], [0], [1], [0, 0, 1, 1], [], []>} : vector<16x72xf32>, vector<72x128xf32>, vector<16x128xf32> -> vector<16x128xf32>
    %cst_3 = arith.constant dense<0.000000e+00> : vector<16xf32>
    %3 = vector.multi_reduction <add>, %2, %cst_3 [1] : vector<16x128xf32> to vector<16xf32>
    %4 = vector.shape_cast %3 : vector<16xf32> to vector<16x1xf32>
    %cst_4 = arith.constant 7.812500e-03 : f32
    %5 = vector.broadcast %cst_4 : f32 to vector<16x1xf32>
    %6 = arith.mulf %4, %5 : vector<16x1xf32>
    %7 = vector.broadcast %6 : vector<16x1xf32> to vector<16x128xf32>
    %8 = arith.subf %2, %7 : vector<16x128xf32>
    %9 = arith.mulf %8, %8 : vector<16x128xf32>
    %cst_5 = arith.constant dense<0.000000e+00> : vector<16xf32>
    %10 = vector.multi_reduction <add>, %9, %cst_5 [1] : vector<16x128xf32> to vector<16xf32>
    %11 = vector.shape_cast %10 : vector<16xf32> to vector<16x1xf32>
    %cst_6 = arith.constant 7.812500e-03 : f32
    %12 = vector.broadcast %cst_6 : f32 to vector<16x1xf32>
    %13 = arith.mulf %11, %12 : vector<16x1xf32>
    %c0_7 = arith.constant 0 : index
    %c0_8 = arith.constant 0 : index
    %14 = vector.load %arg3[%c0_7, %c0_8] : memref<16x1xf32, #tpu.memory_space<vmem>>, vector<16x1xf32>
    %cst_9 = arith.constant 9.99999974E-6 : f32
    %15 = vector.broadcast %cst_9 : f32 to vector<16x1xf32>
    %16 = arith.addf %13, %15 : vector<16x1xf32>
    %17 = math.rsqrt %16 : vector<16x1xf32>
    %18 = arith.mulf %14, %17 : vector<16x1xf32>
    %19 = vector.broadcast %18 : vector<16x1xf32> to vector<16x128xf32>
    %20 = arith.mulf %8, %19 : vector<16x128xf32>
    %c0_10 = arith.constant 0 : index
    %c0_11 = arith.constant 0 : index
    %21 = vector.load %arg4[%c0_10, %c0_11] : memref<16x1xf32, #tpu.memory_space<vmem>>, vector<16x1xf32>
    %22 = vector.broadcast %21 : vector<16x1xf32> to vector<16x128xf32>
    %23 = arith.addf %20, %22 : vector<16x128xf32>
    %cst_12 = arith.constant 0.000000e+00 : f32
    %24 = vector.broadcast %cst_12 : f32 to vector<16x128xf32>
    %25 = arith.maximumf %23, %24 : vector<16x128xf32>
    %c0_13 = arith.constant 0 : index
    %c0_14 = arith.constant 0 : index
    %26 = vector.load %arg5[%c0_13, %c0_14] : memref<16x128xf32, #tpu.memory_space<vmem>>, vector<16x128xf32>
    tpu.vector_store %arg5[%c0_13, %c0_14], %25 {strides = array<i32>} : memref<16x128xf32, #tpu.memory_space<vmem>>, vector<16x128xf32>,
    return
  }
  func.func @transform_0(%arg0: i32) -> (i32, i32) {
    %c0_i32 = arith.constant 0 : i32
    %c0_i32_0 = arith.constant 0 : i32
    %c0_i32_1 = arith.constant 0 : i32
    return %c0_i32, %c0_i32_0 : i32, i32
  }
  func.func @transform_1(%arg0: i32) -> (i32, i32) {
    %c0_i32 = arith.constant 0 : i32
    %c0_i32_0 = arith.constant 0 : i32
    %c0_i32_1 = arith.constant 0 : i32
    return %c0_i32, %c0_i32_0 : i32, i32
  }
  func.func @transform_2(%arg0: i32) -> (i32, i32) {
    %c0_i32 = arith.constant 0 : i32
    %c0_i32_0 = arith.constant 0 : i32
    %c0_i32_1 = arith.constant 0 : i32
    return %c0_i32, %c0_i32_0 : i32, i32
  }
  func.func @transform_3(%arg0: i32) -> (i32, i32) {
    %c0_i32 = arith.constant 0 : i32
    %c0_i32_0 = arith.constant 0 : i32
    %c0_i32_1 = arith.constant 0 : i32
    return %c0_i32, %c0_i32_0 : i32, i32
  }
  func.func @transform_4(%arg0: i32) -> (i32, i32) {
    %c0_i32 = arith.constant 0 : i32
    %c0_i32_0 = arith.constant 0 : i32
    %c0_i32_1 = arith.constant 0 : i32
    return %c0_i32, %c0_i32_0 : i32, i32
  }
}

module attributes {stable_mosaic.version = 11 : i64} {
  func.func @conv_bn_relu_kernel(%arg0: i32, %arg1: memref<32x144xf32, #tpu.memory_space<vmem>>, %arg2: memref<144x32xf32, #tpu.memory_space<vmem>>, %arg3: memref<32x1xf32, #tpu.memory_space<vmem>>, %arg4: memref<32x1xf32, #tpu.memory_space<vmem>>, %arg5: memref<32x32xf32, #tpu.memory_space<vmem>>) attributes {dimension_semantics = [#tpu.dimension_semantics<arbitrary>], iteration_bounds = array<i64: 1>, scalar_prefetch = 0 : i64, scratch_operands = 0 : i64, tpu.core_type = #tpu.core_type<tc>, window_params = [{pipeline_mode = #tpu.pipeline_mode<synchronous>, transform_indices = @transform_0, window_bounds = array<i64: 32, 144>}, {pipeline_mode = #tpu.pipeline_mode<synchronous>, transform_indices = @transform_1, window_bounds = array<i64: 144, 32>}, {pipeline_mode = #tpu.pipeline_mode<synchronous>, transform_indices = @transform_2, window_bounds = array<i64: 32, 1>}, {pipeline_mode = #tpu.pipeline_mode<synchronous>, transform_indices = @transform_3, window_bounds = array<i64: 32, 1>}, {pipeline_mode = #tpu.pipeline_mode<synchronous>, transform_indices = @transform_4, window_bounds = array<i64: 32, 32>}]} {
    %c0 = arith.constant 0 : index
    %c0_0 = arith.constant 0 : index
    %0 = vector.load %arg1[%c0, %c0_0] : memref<32x144xf32, #tpu.memory_space<vmem>>, vector<32x144xf32>
    %c0_1 = arith.constant 0 : index
    %c0_2 = arith.constant 0 : index
    %1 = vector.load %arg2[%c0_1, %c0_2] : memref<144x32xf32, #tpu.memory_space<vmem>>, vector<144x32xf32>
    %cst = arith.constant dense<0.000000e+00> : vector<32x32xf32>
    %2 = tpu.matmul %0, %1, %cst {dimension_numbers = #tpu.dot_dimension_numbers<[1], [0], [0], [1], [0, 0, 1, 1], [], []>} : vector<32x144xf32>, vector<144x32xf32>, vector<32x32xf32> -> vector<32x32xf32>
    %cst_3 = arith.constant dense<0.000000e+00> : vector<32xf32>
    %3 = vector.multi_reduction <add>, %2, %cst_3 [1] : vector<32x32xf32> to vector<32xf32>
    %4 = vector.shape_cast %3 : vector<32xf32> to vector<32x1xf32>
    %cst_4 = arith.constant 3.125000e-02 : f32
    %5 = vector.broadcast %cst_4 : f32 to vector<32x1xf32>
    %6 = arith.mulf %4, %5 : vector<32x1xf32>
    %7 = vector.broadcast %6 : vector<32x1xf32> to vector<32x32xf32>
    %8 = arith.subf %2, %7 : vector<32x32xf32>
    %9 = arith.mulf %8, %8 : vector<32x32xf32>
    %cst_5 = arith.constant dense<0.000000e+00> : vector<32xf32>
    %10 = vector.multi_reduction <add>, %9, %cst_5 [1] : vector<32x32xf32> to vector<32xf32>
    %11 = vector.shape_cast %10 : vector<32xf32> to vector<32x1xf32>
    %cst_6 = arith.constant 3.125000e-02 : f32
    %12 = vector.broadcast %cst_6 : f32 to vector<32x1xf32>
    %13 = arith.mulf %11, %12 : vector<32x1xf32>
    %c0_7 = arith.constant 0 : index
    %c0_8 = arith.constant 0 : index
    %14 = vector.load %arg3[%c0_7, %c0_8] : memref<32x1xf32, #tpu.memory_space<vmem>>, vector<32x1xf32>
    %cst_9 = arith.constant 9.99999974E-6 : f32
    %15 = vector.broadcast %cst_9 : f32 to vector<32x1xf32>
    %16 = arith.addf %13, %15 : vector<32x1xf32>
    %17 = math.rsqrt %16 : vector<32x1xf32>
    %18 = arith.mulf %14, %17 : vector<32x1xf32>
    %19 = vector.broadcast %18 : vector<32x1xf32> to vector<32x32xf32>
    %20 = arith.mulf %8, %19 : vector<32x32xf32>
    %c0_10 = arith.constant 0 : index
    %c0_11 = arith.constant 0 : index
    %21 = vector.load %arg4[%c0_10, %c0_11] : memref<32x1xf32, #tpu.memory_space<vmem>>, vector<32x1xf32>
    %22 = vector.broadcast %21 : vector<32x1xf32> to vector<32x32xf32>
    %23 = arith.addf %20, %22 : vector<32x32xf32>
    %cst_12 = arith.constant 0.000000e+00 : f32
    %24 = vector.broadcast %cst_12 : f32 to vector<32x32xf32>
    %25 = arith.maximumf %23, %24 : vector<32x32xf32>
    %c0_13 = arith.constant 0 : index
    %c0_14 = arith.constant 0 : index
    %26 = vector.load %arg5[%c0_13, %c0_14] : memref<32x32xf32, #tpu.memory_space<vmem>>, vector<32x32xf32>
    tpu.vector_store %arg5[%c0_13, %c0_14], %25 {strides = array<i32>} : memref<32x32xf32, #tpu.memory_space<vmem>>, vector<32x32xf32>,
    return
  }
  func.func @transform_0(%arg0: i32) -> (i32, i32) {
    %c0_i32 = arith.constant 0 : i32
    %c0_i32_0 = arith.constant 0 : i32
    %c0_i32_1 = arith.constant 0 : i32
    return %c0_i32, %c0_i32_0 : i32, i32
  }
  func.func @transform_1(%arg0: i32) -> (i32, i32) {
    %c0_i32 = arith.constant 0 : i32
    %c0_i32_0 = arith.constant 0 : i32
    %c0_i32_1 = arith.constant 0 : i32
    return %c0_i32, %c0_i32_0 : i32, i32
  }
  func.func @transform_2(%arg0: i32) -> (i32, i32) {
    %c0_i32 = arith.constant 0 : i32
    %c0_i32_0 = arith.constant 0 : i32
    %c0_i32_1 = arith.constant 0 : i32
    return %c0_i32, %c0_i32_0 : i32, i32
  }
  func.func @transform_3(%arg0: i32) -> (i32, i32) {
    %c0_i32 = arith.constant 0 : i32
    %c0_i32_0 = arith.constant 0 : i32
    %c0_i32_1 = arith.constant 0 : i32
    return %c0_i32, %c0_i32_0 : i32, i32
  }
  func.func @transform_4(%arg0: i32) -> (i32, i32) {
    %c0_i32 = arith.constant 0 : i32
    %c0_i32_0 = arith.constant 0 : i32
    %c0_i32_1 = arith.constant 0 : i32
    return %c0_i32, %c0_i32_0 : i32, i32
  }
}

module attributes {stable_mosaic.version = 11 : i64} {
  func.func @conv_bn_relu_kernel(%arg0: i32, %arg1: memref<64x288xf32, #tpu.memory_space<vmem>>, %arg2: memref<288x8xf32, #tpu.memory_space<vmem>>, %arg3: memref<64x1xf32, #tpu.memory_space<vmem>>, %arg4: memref<64x1xf32, #tpu.memory_space<vmem>>, %arg5: memref<64x8xf32, #tpu.memory_space<vmem>>) attributes {dimension_semantics = [#tpu.dimension_semantics<arbitrary>], iteration_bounds = array<i64: 1>, scalar_prefetch = 0 : i64, scratch_operands = 0 : i64, tpu.core_type = #tpu.core_type<tc>, window_params = [{pipeline_mode = #tpu.pipeline_mode<synchronous>, transform_indices = @transform_0, window_bounds = array<i64: 64, 288>}, {pipeline_mode = #tpu.pipeline_mode<synchronous>, transform_indices = @transform_1, window_bounds = array<i64: 288, 8>}, {pipeline_mode = #tpu.pipeline_mode<synchronous>, transform_indices = @transform_2, window_bounds = array<i64: 64, 1>}, {pipeline_mode = #tpu.pipeline_mode<synchronous>, transform_indices = @transform_3, window_bounds = array<i64: 64, 1>}, {pipeline_mode = #tpu.pipeline_mode<synchronous>, transform_indices = @transform_4, window_bounds = array<i64: 64, 8>}]} {
    %c0 = arith.constant 0 : index
    %c0_0 = arith.constant 0 : index
    %0 = vector.load %arg1[%c0, %c0_0] : memref<64x288xf32, #tpu.memory_space<vmem>>, vector<64x288xf32>
    %c0_1 = arith.constant 0 : index
    %c0_2 = arith.constant 0 : index
    %1 = vector.load %arg2[%c0_1, %c0_2] : memref<288x8xf32, #tpu.memory_space<vmem>>, vector<288x8xf32>
    %cst = arith.constant dense<0.000000e+00> : vector<64x8xf32>
    %2 = tpu.matmul %0, %1, %cst {dimension_numbers = #tpu.dot_dimension_numbers<[1], [0], [0], [1], [0, 0, 1, 1], [], []>} : vector<64x288xf32>, vector<288x8xf32>, vector<64x8xf32> -> vector<64x8xf32>
    %cst_3 = arith.constant dense<0.000000e+00> : vector<64xf32>
    %3 = vector.multi_reduction <add>, %2, %cst_3 [1] : vector<64x8xf32> to vector<64xf32>
    %4 = vector.shape_cast %3 : vector<64xf32> to vector<64x1xf32>
    %cst_4 = arith.constant 1.250000e-01 : f32
    %5 = vector.broadcast %cst_4 : f32 to vector<64x1xf32>
    %6 = arith.mulf %4, %5 : vector<64x1xf32>
    %7 = vector.broadcast %6 : vector<64x1xf32> to vector<64x8xf32>
    %8 = arith.subf %2, %7 : vector<64x8xf32>
    %9 = arith.mulf %8, %8 : vector<64x8xf32>
    %cst_5 = arith.constant dense<0.000000e+00> : vector<64xf32>
    %10 = vector.multi_reduction <add>, %9, %cst_5 [1] : vector<64x8xf32> to vector<64xf32>
    %11 = vector.shape_cast %10 : vector<64xf32> to vector<64x1xf32>
    %cst_6 = arith.constant 1.250000e-01 : f32
    %12 = vector.broadcast %cst_6 : f32 to vector<64x1xf32>
    %13 = arith.mulf %11, %12 : vector<64x1xf32>
    %c0_7 = arith.constant 0 : index
    %c0_8 = arith.constant 0 : index
    %14 = vector.load %arg3[%c0_7, %c0_8] : memref<64x1xf32, #tpu.memory_space<vmem>>, vector<64x1xf32>
    %cst_9 = arith.constant 9.99999974E-6 : f32
    %15 = vector.broadcast %cst_9 : f32 to vector<64x1xf32>
    %16 = arith.addf %13, %15 : vector<64x1xf32>
    %17 = math.rsqrt %16 : vector<64x1xf32>
    %18 = arith.mulf %14, %17 : vector<64x1xf32>
    %19 = vector.broadcast %18 : vector<64x1xf32> to vector<64x8xf32>
    %20 = arith.mulf %8, %19 : vector<64x8xf32>
    %c0_10 = arith.constant 0 : index
    %c0_11 = arith.constant 0 : index
    %21 = vector.load %arg4[%c0_10, %c0_11] : memref<64x1xf32, #tpu.memory_space<vmem>>, vector<64x1xf32>
    %22 = vector.broadcast %21 : vector<64x1xf32> to vector<64x8xf32>
    %23 = arith.addf %20, %22 : vector<64x8xf32>
    %cst_12 = arith.constant 0.000000e+00 : f32
    %24 = vector.broadcast %cst_12 : f32 to vector<64x8xf32>
    %25 = arith.maximumf %23, %24 : vector<64x8xf32>
    %c0_13 = arith.constant 0 : index
    %c0_14 = arith.constant 0 : index
    %26 = vector.load %arg5[%c0_13, %c0_14] : memref<64x8xf32, #tpu.memory_space<vmem>>, vector<64x8xf32>
    tpu.vector_store %arg5[%c0_13, %c0_14], %25 {strides = array<i32>} : memref<64x8xf32, #tpu.memory_space<vmem>>, vector<64x8xf32>,
    return
  }
  func.func @transform_0(%arg0: i32) -> (i32, i32) {
    %c0_i32 = arith.constant 0 : i32
    %c0_i32_0 = arith.constant 0 : i32
    %c0_i32_1 = arith.constant 0 : i32
    return %c0_i32, %c0_i32_0 : i32, i32
  }
  func.func @transform_1(%arg0: i32) -> (i32, i32) {
    %c0_i32 = arith.constant 0 : i32
    %c0_i32_0 = arith.constant 0 : i32
    %c0_i32_1 = arith.constant 0 : i32
    return %c0_i32, %c0_i32_0 : i32, i32
  }
  func.func @transform_2(%arg0: i32) -> (i32, i32) {
    %c0_i32 = arith.constant 0 : i32
    %c0_i32_0 = arith.constant 0 : i32
    %c0_i32_1 = arith.constant 0 : i32
    return %c0_i32, %c0_i32_0 : i32, i32
  }
  func.func @transform_3(%arg0: i32) -> (i32, i32) {
    %c0_i32 = arith.constant 0 : i32
    %c0_i32_0 = arith.constant 0 : i32
    %c0_i32_1 = arith.constant 0 : i32
    return %c0_i32, %c0_i32_0 : i32, i32
  }
  func.func @transform_4(%arg0: i32) -> (i32, i32) {
    %c0_i32 = arith.constant 0 : i32
    %c0_i32_0 = arith.constant 0 : i32
    %c0_i32_1 = arith.constant 0 : i32
    return %c0_i32, %c0_i32_0 : i32, i32
  }
}

module attributes {stable_mosaic.version = 11 : i64} {
  func.func @conv_bn_add_kernel(%arg0: i32, %arg1: memref<64x576xf32, #tpu.memory_space<vmem>>, %arg2: memref<576x8xf32, #tpu.memory_space<vmem>>, %arg3: memref<64x1xf32, #tpu.memory_space<vmem>>, %arg4: memref<64x1xf32, #tpu.memory_space<vmem>>, %arg5: memref<64x8xf32, #tpu.memory_space<vmem>>, %arg6: memref<64x8xf32, #tpu.memory_space<vmem>>) attributes {dimension_semantics = [#tpu.dimension_semantics<arbitrary>], iteration_bounds = array<i64: 1>, scalar_prefetch = 0 : i64, scratch_operands = 0 : i64, tpu.core_type = #tpu.core_type<tc>, window_params = [{pipeline_mode = #tpu.pipeline_mode<synchronous>, transform_indices = @transform_0, window_bounds = array<i64: 64, 576>}, {pipeline_mode = #tpu.pipeline_mode<synchronous>, transform_indices = @transform_1, window_bounds = array<i64: 576, 8>}, {pipeline_mode = #tpu.pipeline_mode<synchronous>, transform_indices = @transform_2, window_bounds = array<i64: 64, 1>}, {pipeline_mode = #tpu.pipeline_mode<synchronous>, transform_indices = @transform_3, window_bounds = array<i64: 64, 1>}, {pipeline_mode = #tpu.pipeline_mode<synchronous>, transform_indices = @transform_4, window_bounds = array<i64: 64, 8>}, {pipeline_mode = #tpu.pipeline_mode<synchronous>, transform_indices = @transform_5, window_bounds = array<i64: 64, 8>}]} {
    %c0 = arith.constant 0 : index
    %c0_0 = arith.constant 0 : index
    %0 = vector.load %arg1[%c0, %c0_0] : memref<64x576xf32, #tpu.memory_space<vmem>>, vector<64x576xf32>
    %c0_1 = arith.constant 0 : index
    %c0_2 = arith.constant 0 : index
    %1 = vector.load %arg2[%c0_1, %c0_2] : memref<576x8xf32, #tpu.memory_space<vmem>>, vector<576x8xf32>
    %cst = arith.constant dense<0.000000e+00> : vector<64x8xf32>
    %2 = tpu.matmul %0, %1, %cst {dimension_numbers = #tpu.dot_dimension_numbers<[1], [0], [0], [1], [0, 0, 1, 1], [], []>} : vector<64x576xf32>, vector<576x8xf32>, vector<64x8xf32> -> vector<64x8xf32>
    %cst_3 = arith.constant dense<0.000000e+00> : vector<64xf32>
    %3 = vector.multi_reduction <add>, %2, %cst_3 [1] : vector<64x8xf32> to vector<64xf32>
    %4 = vector.shape_cast %3 : vector<64xf32> to vector<64x1xf32>
    %cst_4 = arith.constant 1.250000e-01 : f32
    %5 = vector.broadcast %cst_4 : f32 to vector<64x1xf32>
    %6 = arith.mulf %4, %5 : vector<64x1xf32>
    %7 = vector.broadcast %6 : vector<64x1xf32> to vector<64x8xf32>
    %8 = arith.subf %2, %7 : vector<64x8xf32>
    %9 = arith.mulf %8, %8 : vector<64x8xf32>
    %cst_5 = arith.constant dense<0.000000e+00> : vector<64xf32>
    %10 = vector.multi_reduction <add>, %9, %cst_5 [1] : vector<64x8xf32> to vector<64xf32>
    %11 = vector.shape_cast %10 : vector<64xf32> to vector<64x1xf32>
    %cst_6 = arith.constant 1.250000e-01 : f32
    %12 = vector.broadcast %cst_6 : f32 to vector<64x1xf32>
    %13 = arith.mulf %11, %12 : vector<64x1xf32>
    %c0_7 = arith.constant 0 : index
    %c0_8 = arith.constant 0 : index
    %14 = vector.load %arg3[%c0_7, %c0_8] : memref<64x1xf32, #tpu.memory_space<vmem>>, vector<64x1xf32>
    %cst_9 = arith.constant 9.99999974E-6 : f32
    %15 = vector.broadcast %cst_9 : f32 to vector<64x1xf32>
    %16 = arith.addf %13, %15 : vector<64x1xf32>
    %17 = math.rsqrt %16 : vector<64x1xf32>
    %18 = arith.mulf %14, %17 : vector<64x1xf32>
    %c0_10 = arith.constant 0 : index
    %c0_11 = arith.constant 0 : index
    %19 = vector.load %arg5[%c0_10, %c0_11] : memref<64x8xf32, #tpu.memory_space<vmem>>, vector<64x8xf32>
    %20 = vector.broadcast %18 : vector<64x1xf32> to vector<64x8xf32>
    %21 = arith.mulf %8, %20 : vector<64x8xf32>
    %22 = arith.addf %19, %21 : vector<64x8xf32>
    %c0_12 = arith.constant 0 : index
    %c0_13 = arith.constant 0 : index
    %23 = vector.load %arg4[%c0_12, %c0_13] : memref<64x1xf32, #tpu.memory_space<vmem>>, vector<64x1xf32>
    %24 = vector.broadcast %23 : vector<64x1xf32> to vector<64x8xf32>
    %25 = arith.addf %22, %24 : vector<64x8xf32>
    %c0_14 = arith.constant 0 : index
    %c0_15 = arith.constant 0 : index
    %26 = vector.load %arg6[%c0_14, %c0_15] : memref<64x8xf32, #tpu.memory_space<vmem>>, vector<64x8xf32>
    tpu.vector_store %arg6[%c0_14, %c0_15], %25 {strides = array<i32>} : memref<64x8xf32, #tpu.memory_space<vmem>>, vector<64x8xf32>,
    return
  }
  func.func @transform_0(%arg0: i32) -> (i32, i32) {
    %c0_i32 = arith.constant 0 : i32
    %c0_i32_0 = arith.constant 0 : i32
    %c0_i32_1 = arith.constant 0 : i32
    return %c0_i32, %c0_i32_0 : i32, i32
  }
  func.func @transform_1(%arg0: i32) -> (i32, i32) {
    %c0_i32 = arith.constant 0 : i32
    %c0_i32_0 = arith.constant 0 : i32
    %c0_i32_1 = arith.constant 0 : i32
    return %c0_i32, %c0_i32_0 : i32, i32
  }
  func.func @transform_2(%arg0: i32) -> (i32, i32) {
    %c0_i32 = arith.constant 0 : i32
    %c0_i32_0 = arith.constant 0 : i32
    %c0_i32_1 = arith.constant 0 : i32
    return %c0_i32, %c0_i32_0 : i32, i32
  }
  func.func @transform_3(%arg0: i32) -> (i32, i32) {
    %c0_i32 = arith.constant 0 : i32
    %c0_i32_0 = arith.constant 0 : i32
    %c0_i32_1 = arith.constant 0 : i32
    return %c0_i32, %c0_i32_0 : i32, i32
  }
  func.func @transform_4(%arg0: i32) -> (i32, i32) {
    %c0_i32 = arith.constant 0 : i32
    %c0_i32_0 = arith.constant 0 : i32
    %c0_i32_1 = arith.constant 0 : i32
    return %c0_i32, %c0_i32_0 : i32, i32
  }
  func.func @transform_5(%arg0: i32) -> (i32, i32) {
    %c0_i32 = arith.constant 0 : i32
    %c0_i32_0 = arith.constant 0 : i32
    %c0_i32_1 = arith.constant 0 : i32
    return %c0_i32, %c0_i32_0 : i32, i32
  }
}

module attributes {stable_mosaic.version = 11 : i64} {
  func.func @conv_bn_relu_kernel(%arg0: i32, %arg1: memref<64x576xf32, #tpu.memory_space<vmem>>, %arg2: memref<576x8xf32, #tpu.memory_space<vmem>>, %arg3: memref<64x1xf32, #tpu.memory_space<vmem>>, %arg4: memref<64x1xf32, #tpu.memory_space<vmem>>, %arg5: memref<64x8xf32, #tpu.memory_space<vmem>>) attributes {dimension_semantics = [#tpu.dimension_semantics<arbitrary>], iteration_bounds = array<i64: 1>, scalar_prefetch = 0 : i64, scratch_operands = 0 : i64, tpu.core_type = #tpu.core_type<tc>, window_params = [{pipeline_mode = #tpu.pipeline_mode<synchronous>, transform_indices = @transform_0, window_bounds = array<i64: 64, 576>}, {pipeline_mode = #tpu.pipeline_mode<synchronous>, transform_indices = @transform_1, window_bounds = array<i64: 576, 8>}, {pipeline_mode = #tpu.pipeline_mode<synchronous>, transform_indices = @transform_2, window_bounds = array<i64: 64, 1>}, {pipeline_mode = #tpu.pipeline_mode<synchronous>, transform_indices = @transform_3, window_bounds = array<i64: 64, 1>}, {pipeline_mode = #tpu.pipeline_mode<synchronous>, transform_indices = @transform_4, window_bounds = array<i64: 64, 8>}]} {
    %c0 = arith.constant 0 : index
    %c0_0 = arith.constant 0 : index
    %0 = vector.load %arg1[%c0, %c0_0] : memref<64x576xf32, #tpu.memory_space<vmem>>, vector<64x576xf32>
    %c0_1 = arith.constant 0 : index
    %c0_2 = arith.constant 0 : index
    %1 = vector.load %arg2[%c0_1, %c0_2] : memref<576x8xf32, #tpu.memory_space<vmem>>, vector<576x8xf32>
    %cst = arith.constant dense<0.000000e+00> : vector<64x8xf32>
    %2 = tpu.matmul %0, %1, %cst {dimension_numbers = #tpu.dot_dimension_numbers<[1], [0], [0], [1], [0, 0, 1, 1], [], []>} : vector<64x576xf32>, vector<576x8xf32>, vector<64x8xf32> -> vector<64x8xf32>
    %cst_3 = arith.constant dense<0.000000e+00> : vector<64xf32>
    %3 = vector.multi_reduction <add>, %2, %cst_3 [1] : vector<64x8xf32> to vector<64xf32>
    %4 = vector.shape_cast %3 : vector<64xf32> to vector<64x1xf32>
    %cst_4 = arith.constant 1.250000e-01 : f32
    %5 = vector.broadcast %cst_4 : f32 to vector<64x1xf32>
    %6 = arith.mulf %4, %5 : vector<64x1xf32>
    %7 = vector.broadcast %6 : vector<64x1xf32> to vector<64x8xf32>
    %8 = arith.subf %2, %7 : vector<64x8xf32>
    %9 = arith.mulf %8, %8 : vector<64x8xf32>
    %cst_5 = arith.constant dense<0.000000e+00> : vector<64xf32>
    %10 = vector.multi_reduction <add>, %9, %cst_5 [1] : vector<64x8xf32> to vector<64xf32>
    %11 = vector.shape_cast %10 : vector<64xf32> to vector<64x1xf32>
    %cst_6 = arith.constant 1.250000e-01 : f32
    %12 = vector.broadcast %cst_6 : f32 to vector<64x1xf32>
    %13 = arith.mulf %11, %12 : vector<64x1xf32>
    %c0_7 = arith.constant 0 : index
    %c0_8 = arith.constant 0 : index
    %14 = vector.load %arg3[%c0_7, %c0_8] : memref<64x1xf32, #tpu.memory_space<vmem>>, vector<64x1xf32>
    %cst_9 = arith.constant 9.99999974E-6 : f32
    %15 = vector.broadcast %cst_9 : f32 to vector<64x1xf32>
    %16 = arith.addf %13, %15 : vector<64x1xf32>
    %17 = math.rsqrt %16 : vector<64x1xf32>
    %18 = arith.mulf %14, %17 : vector<64x1xf32>
    %19 = vector.broadcast %18 : vector<64x1xf32> to vector<64x8xf32>
    %20 = arith.mulf %8, %19 : vector<64x8xf32>
    %c0_10 = arith.constant 0 : index
    %c0_11 = arith.constant 0 : index
    %21 = vector.load %arg4[%c0_10, %c0_11] : memref<64x1xf32, #tpu.memory_space<vmem>>, vector<64x1xf32>
    %22 = vector.broadcast %21 : vector<64x1xf32> to vector<64x8xf32>
    %23 = arith.addf %20, %22 : vector<64x8xf32>
    %cst_12 = arith.constant 0.000000e+00 : f32
    %24 = vector.broadcast %cst_12 : f32 to vector<64x8xf32>
    %25 = arith.maximumf %23, %24 : vector<64x8xf32>
    %c0_13 = arith.constant 0 : index
    %c0_14 = arith.constant 0 : index
    %26 = vector.load %arg5[%c0_13, %c0_14] : memref<64x8xf32, #tpu.memory_space<vmem>>, vector<64x8xf32>
    tpu.vector_store %arg5[%c0_13, %c0_14], %25 {strides = array<i32>} : memref<64x8xf32, #tpu.memory_space<vmem>>, vector<64x8xf32>,
    return
  }
  func.func @transform_0(%arg0: i32) -> (i32, i32) {
    %c0_i32 = arith.constant 0 : i32
    %c0_i32_0 = arith.constant 0 : i32
    %c0_i32_1 = arith.constant 0 : i32
    return %c0_i32, %c0_i32_0 : i32, i32
  }
  func.func @transform_1(%arg0: i32) -> (i32, i32) {
    %c0_i32 = arith.constant 0 : i32
    %c0_i32_0 = arith.constant 0 : i32
    %c0_i32_1 = arith.constant 0 : i32
    return %c0_i32, %c0_i32_0 : i32, i32
  }
  func.func @transform_2(%arg0: i32) -> (i32, i32) {
    %c0_i32 = arith.constant 0 : i32
    %c0_i32_0 = arith.constant 0 : i32
    %c0_i32_1 = arith.constant 0 : i32
    return %c0_i32, %c0_i32_0 : i32, i32
  }
  func.func @transform_3(%arg0: i32) -> (i32, i32) {
    %c0_i32 = arith.constant 0 : i32
    %c0_i32_0 = arith.constant 0 : i32
    %c0_i32_1 = arith.constant 0 : i32
    return %c0_i32, %c0_i32_0 : i32, i32
  }
  func.func @transform_4(%arg0: i32) -> (i32, i32) {
    %c0_i32 = arith.constant 0 : i32
    %c0_i32_0 = arith.constant 0 : i32
    %c0_i32_1 = arith.constant 0 : i32
    return %c0_i32, %c0_i32_0 : i32, i32
  }
}

module attributes {stable_mosaic.version = 11 : i64} {
  func.func @conv_bn_relu_kernel(%arg0: i32, %arg1: memref<32x576xf32, #tpu.memory_space<vmem>>, %arg2: memref<576x32xf32, #tpu.memory_space<vmem>>, %arg3: memref<32x1xf32, #tpu.memory_space<vmem>>, %arg4: memref<32x1xf32, #tpu.memory_space<vmem>>, %arg5: memref<32x32xf32, #tpu.memory_space<vmem>>) attributes {dimension_semantics = [#tpu.dimension_semantics<arbitrary>], iteration_bounds = array<i64: 1>, scalar_prefetch = 0 : i64, scratch_operands = 0 : i64, tpu.core_type = #tpu.core_type<tc>, window_params = [{pipeline_mode = #tpu.pipeline_mode<synchronous>, transform_indices = @transform_0, window_bounds = array<i64: 32, 576>}, {pipeline_mode = #tpu.pipeline_mode<synchronous>, transform_indices = @transform_1, window_bounds = array<i64: 576, 32>}, {pipeline_mode = #tpu.pipeline_mode<synchronous>, transform_indices = @transform_2, window_bounds = array<i64: 32, 1>}, {pipeline_mode = #tpu.pipeline_mode<synchronous>, transform_indices = @transform_3, window_bounds = array<i64: 32, 1>}, {pipeline_mode = #tpu.pipeline_mode<synchronous>, transform_indices = @transform_4, window_bounds = array<i64: 32, 32>}]} {
    %c0 = arith.constant 0 : index
    %c0_0 = arith.constant 0 : index
    %0 = vector.load %arg1[%c0, %c0_0] : memref<32x576xf32, #tpu.memory_space<vmem>>, vector<32x576xf32>
    %c0_1 = arith.constant 0 : index
    %c0_2 = arith.constant 0 : index
    %1 = vector.load %arg2[%c0_1, %c0_2] : memref<576x32xf32, #tpu.memory_space<vmem>>, vector<576x32xf32>
    %cst = arith.constant dense<0.000000e+00> : vector<32x32xf32>
    %2 = tpu.matmul %0, %1, %cst {dimension_numbers = #tpu.dot_dimension_numbers<[1], [0], [0], [1], [0, 0, 1, 1], [], []>} : vector<32x576xf32>, vector<576x32xf32>, vector<32x32xf32> -> vector<32x32xf32>
    %cst_3 = arith.constant dense<0.000000e+00> : vector<32xf32>
    %3 = vector.multi_reduction <add>, %2, %cst_3 [1] : vector<32x32xf32> to vector<32xf32>
    %4 = vector.shape_cast %3 : vector<32xf32> to vector<32x1xf32>
    %cst_4 = arith.constant 3.125000e-02 : f32
    %5 = vector.broadcast %cst_4 : f32 to vector<32x1xf32>
    %6 = arith.mulf %4, %5 : vector<32x1xf32>
    %7 = vector.broadcast %6 : vector<32x1xf32> to vector<32x32xf32>
    %8 = arith.subf %2, %7 : vector<32x32xf32>
    %9 = arith.mulf %8, %8 : vector<32x32xf32>
    %cst_5 = arith.constant dense<0.000000e+00> : vector<32xf32>
    %10 = vector.multi_reduction <add>, %9, %cst_5 [1] : vector<32x32xf32> to vector<32xf32>
    %11 = vector.shape_cast %10 : vector<32xf32> to vector<32x1xf32>
    %cst_6 = arith.constant 3.125000e-02 : f32
    %12 = vector.broadcast %cst_6 : f32 to vector<32x1xf32>
    %13 = arith.mulf %11, %12 : vector<32x1xf32>
    %c0_7 = arith.constant 0 : index
    %c0_8 = arith.constant 0 : index
    %14 = vector.load %arg3[%c0_7, %c0_8] : memref<32x1xf32, #tpu.memory_space<vmem>>, vector<32x1xf32>
    %cst_9 = arith.constant 9.99999974E-6 : f32
    %15 = vector.broadcast %cst_9 : f32 to vector<32x1xf32>
    %16 = arith.addf %13, %15 : vector<32x1xf32>
    %17 = math.rsqrt %16 : vector<32x1xf32>
    %18 = arith.mulf %14, %17 : vector<32x1xf32>
    %19 = vector.broadcast %18 : vector<32x1xf32> to vector<32x32xf32>
    %20 = arith.mulf %8, %19 : vector<32x32xf32>
    %c0_10 = arith.constant 0 : index
    %c0_11 = arith.constant 0 : index
    %21 = vector.load %arg4[%c0_10, %c0_11] : memref<32x1xf32, #tpu.memory_space<vmem>>, vector<32x1xf32>
    %22 = vector.broadcast %21 : vector<32x1xf32> to vector<32x32xf32>
    %23 = arith.addf %20, %22 : vector<32x32xf32>
    %cst_12 = arith.constant 0.000000e+00 : f32
    %24 = vector.broadcast %cst_12 : f32 to vector<32x32xf32>
    %25 = arith.maximumf %23, %24 : vector<32x32xf32>
    %c0_13 = arith.constant 0 : index
    %c0_14 = arith.constant 0 : index
    %26 = vector.load %arg5[%c0_13, %c0_14] : memref<32x32xf32, #tpu.memory_space<vmem>>, vector<32x32xf32>
    tpu.vector_store %arg5[%c0_13, %c0_14], %25 {strides = array<i32>} : memref<32x32xf32, #tpu.memory_space<vmem>>, vector<32x32xf32>,
    return
  }
  func.func @transform_0(%arg0: i32) -> (i32, i32) {
    %c0_i32 = arith.constant 0 : i32
    %c0_i32_0 = arith.constant 0 : i32
    %c0_i32_1 = arith.constant 0 : i32
    return %c0_i32, %c0_i32_0 : i32, i32
  }
  func.func @transform_1(%arg0: i32) -> (i32, i32) {
    %c0_i32 = arith.constant 0 : i32
    %c0_i32_0 = arith.constant 0 : i32
    %c0_i32_1 = arith.constant 0 : i32
    return %c0_i32, %c0_i32_0 : i32, i32
  }
  func.func @transform_2(%arg0: i32) -> (i32, i32) {
    %c0_i32 = arith.constant 0 : i32
    %c0_i32_0 = arith.constant 0 : i32
    %c0_i32_1 = arith.constant 0 : i32
    return %c0_i32, %c0_i32_0 : i32, i32
  }
  func.func @transform_3(%arg0: i32) -> (i32, i32) {
    %c0_i32 = arith.constant 0 : i32
    %c0_i32_0 = arith.constant 0 : i32
    %c0_i32_1 = arith.constant 0 : i32
    return %c0_i32, %c0_i32_0 : i32, i32
  }
  func.func @transform_4(%arg0: i32) -> (i32, i32) {
    %c0_i32 = arith.constant 0 : i32
    %c0_i32_0 = arith.constant 0 : i32
    %c0_i32_1 = arith.constant 0 : i32
    return %c0_i32, %c0_i32_0 : i32, i32
  }
}

module attributes {stable_mosaic.version = 11 : i64} {
  func.func @conv_bn_relu_kernel(%arg0: i32, %arg1: memref<16x288xf32, #tpu.memory_space<vmem>>, %arg2: memref<288x128xf32, #tpu.memory_space<vmem>>, %arg3: memref<16x1xf32, #tpu.memory_space<vmem>>, %arg4: memref<16x1xf32, #tpu.memory_space<vmem>>, %arg5: memref<16x128xf32, #tpu.memory_space<vmem>>) attributes {dimension_semantics = [#tpu.dimension_semantics<arbitrary>], iteration_bounds = array<i64: 1>, scalar_prefetch = 0 : i64, scratch_operands = 0 : i64, tpu.core_type = #tpu.core_type<tc>, window_params = [{pipeline_mode = #tpu.pipeline_mode<synchronous>, transform_indices = @transform_0, window_bounds = array<i64: 16, 288>}, {pipeline_mode = #tpu.pipeline_mode<synchronous>, transform_indices = @transform_1, window_bounds = array<i64: 288, 128>}, {pipeline_mode = #tpu.pipeline_mode<synchronous>, transform_indices = @transform_2, window_bounds = array<i64: 16, 1>}, {pipeline_mode = #tpu.pipeline_mode<synchronous>, transform_indices = @transform_3, window_bounds = array<i64: 16, 1>}, {pipeline_mode = #tpu.pipeline_mode<synchronous>, transform_indices = @transform_4, window_bounds = array<i64: 16, 128>}]} {
    %c0 = arith.constant 0 : index
    %c0_0 = arith.constant 0 : index
    %0 = vector.load %arg1[%c0, %c0_0] : memref<16x288xf32, #tpu.memory_space<vmem>>, vector<16x288xf32>
    %c0_1 = arith.constant 0 : index
    %c0_2 = arith.constant 0 : index
    %1 = vector.load %arg2[%c0_1, %c0_2] : memref<288x128xf32, #tpu.memory_space<vmem>>, vector<288x128xf32>
    %cst = arith.constant dense<0.000000e+00> : vector<16x128xf32>
    %2 = tpu.matmul %0, %1, %cst {dimension_numbers = #tpu.dot_dimension_numbers<[1], [0], [0], [1], [0, 0, 1, 1], [], []>} : vector<16x288xf32>, vector<288x128xf32>, vector<16x128xf32> -> vector<16x128xf32>
    %cst_3 = arith.constant dense<0.000000e+00> : vector<16xf32>
    %3 = vector.multi_reduction <add>, %2, %cst_3 [1] : vector<16x128xf32> to vector<16xf32>
    %4 = vector.shape_cast %3 : vector<16xf32> to vector<16x1xf32>
    %cst_4 = arith.constant 7.812500e-03 : f32
    %5 = vector.broadcast %cst_4 : f32 to vector<16x1xf32>
    %6 = arith.mulf %4, %5 : vector<16x1xf32>
    %7 = vector.broadcast %6 : vector<16x1xf32> to vector<16x128xf32>
    %8 = arith.subf %2, %7 : vector<16x128xf32>
    %9 = arith.mulf %8, %8 : vector<16x128xf32>
    %cst_5 = arith.constant dense<0.000000e+00> : vector<16xf32>
    %10 = vector.multi_reduction <add>, %9, %cst_5 [1] : vector<16x128xf32> to vector<16xf32>
    %11 = vector.shape_cast %10 : vector<16xf32> to vector<16x1xf32>
    %cst_6 = arith.constant 7.812500e-03 : f32
    %12 = vector.broadcast %cst_6 : f32 to vector<16x1xf32>
    %13 = arith.mulf %11, %12 : vector<16x1xf32>
    %c0_7 = arith.constant 0 : index
    %c0_8 = arith.constant 0 : index
    %14 = vector.load %arg3[%c0_7, %c0_8] : memref<16x1xf32, #tpu.memory_space<vmem>>, vector<16x1xf32>
    %cst_9 = arith.constant 9.99999974E-6 : f32
    %15 = vector.broadcast %cst_9 : f32 to vector<16x1xf32>
    %16 = arith.addf %13, %15 : vector<16x1xf32>
    %17 = math.rsqrt %16 : vector<16x1xf32>
    %18 = arith.mulf %14, %17 : vector<16x1xf32>
    %19 = vector.broadcast %18 : vector<16x1xf32> to vector<16x128xf32>
    %20 = arith.mulf %8, %19 : vector<16x128xf32>
    %c0_10 = arith.constant 0 : index
    %c0_11 = arith.constant 0 : index
    %21 = vector.load %arg4[%c0_10, %c0_11] : memref<16x1xf32, #tpu.memory_space<vmem>>, vector<16x1xf32>
    %22 = vector.broadcast %21 : vector<16x1xf32> to vector<16x128xf32>
    %23 = arith.addf %20, %22 : vector<16x128xf32>
    %cst_12 = arith.constant 0.000000e+00 : f32
    %24 = vector.broadcast %cst_12 : f32 to vector<16x128xf32>
    %25 = arith.maximumf %23, %24 : vector<16x128xf32>
    %c0_13 = arith.constant 0 : index
    %c0_14 = arith.constant 0 : index
    %26 = vector.load %arg5[%c0_13, %c0_14] : memref<16x128xf32, #tpu.memory_space<vmem>>, vector<16x128xf32>
    tpu.vector_store %arg5[%c0_13, %c0_14], %25 {strides = array<i32>} : memref<16x128xf32, #tpu.memory_space<vmem>>, vector<16x128xf32>,
    return
  }
  func.func @transform_0(%arg0: i32) -> (i32, i32) {
    %c0_i32 = arith.constant 0 : i32
    %c0_i32_0 = arith.constant 0 : i32
    %c0_i32_1 = arith.constant 0 : i32
    return %c0_i32, %c0_i32_0 : i32, i32
  }
  func.func @transform_1(%arg0: i32) -> (i32, i32) {
    %c0_i32 = arith.constant 0 : i32
    %c0_i32_0 = arith.constant 0 : i32
    %c0_i32_1 = arith.constant 0 : i32
    return %c0_i32, %c0_i32_0 : i32, i32
  }
  func.func @transform_2(%arg0: i32) -> (i32, i32) {
    %c0_i32 = arith.constant 0 : i32
    %c0_i32_0 = arith.constant 0 : i32
    %c0_i32_1 = arith.constant 0 : i32
    return %c0_i32, %c0_i32_0 : i32, i32
  }
  func.func @transform_3(%arg0: i32) -> (i32, i32) {
    %c0_i32 = arith.constant 0 : i32
    %c0_i32_0 = arith.constant 0 : i32
    %c0_i32_1 = arith.constant 0 : i32
    return %c0_i32, %c0_i32_0 : i32, i32
  }
  func.func @transform_4(%arg0: i32) -> (i32, i32) {
    %c0_i32 = arith.constant 0 : i32
    %c0_i32_0 = arith.constant 0 : i32
    %c0_i32_1 = arith.constant 0 : i32
    return %c0_i32, %c0_i32_0 : i32, i32
  }
}

module attributes {stable_mosaic.version = 11 : i64} {
  func.func @conv_bn_relu_kernel(%arg0: i32, %arg1: memref<8x144xf32, #tpu.memory_space<vmem>>, %arg2: memref<144x512xf32, #tpu.memory_space<vmem>>, %arg3: memref<8x1xf32, #tpu.memory_space<vmem>>, %arg4: memref<8x1xf32, #tpu.memory_space<vmem>>, %arg5: memref<8x512xf32, #tpu.memory_space<vmem>>) attributes {dimension_semantics = [#tpu.dimension_semantics<arbitrary>], iteration_bounds = array<i64: 1>, scalar_prefetch = 0 : i64, scratch_operands = 0 : i64, tpu.core_type = #tpu.core_type<tc>, window_params = [{pipeline_mode = #tpu.pipeline_mode<synchronous>, transform_indices = @transform_0, window_bounds = array<i64: 8, 144>}, {pipeline_mode = #tpu.pipeline_mode<synchronous>, transform_indices = @transform_1, window_bounds = array<i64: 144, 512>}, {pipeline_mode = #tpu.pipeline_mode<synchronous>, transform_indices = @transform_2, window_bounds = array<i64: 8, 1>}, {pipeline_mode = #tpu.pipeline_mode<synchronous>, transform_indices = @transform_3, window_bounds = array<i64: 8, 1>}, {pipeline_mode = #tpu.pipeline_mode<synchronous>, transform_indices = @transform_4, window_bounds = array<i64: 8, 512>}]} {
    %c0 = arith.constant 0 : index
    %c0_0 = arith.constant 0 : index
    %0 = vector.load %arg1[%c0, %c0_0] : memref<8x144xf32, #tpu.memory_space<vmem>>, vector<8x144xf32>
    %c0_1 = arith.constant 0 : index
    %c0_2 = arith.constant 0 : index
    %1 = vector.load %arg2[%c0_1, %c0_2] : memref<144x512xf32, #tpu.memory_space<vmem>>, vector<144x512xf32>
    %cst = arith.constant dense<0.000000e+00> : vector<8x512xf32>
    %2 = tpu.matmul %0, %1, %cst {dimension_numbers = #tpu.dot_dimension_numbers<[1], [0], [0], [1], [0, 0, 1, 1], [], []>} : vector<8x144xf32>, vector<144x512xf32>, vector<8x512xf32> -> vector<8x512xf32>
    %cst_3 = arith.constant dense<0.000000e+00> : vector<8xf32>
    %3 = vector.multi_reduction <add>, %2, %cst_3 [1] : vector<8x512xf32> to vector<8xf32>
    %4 = vector.shape_cast %3 : vector<8xf32> to vector<8x1xf32>
    %cst_4 = arith.constant 0.001953125 : f32
    %5 = vector.broadcast %cst_4 : f32 to vector<8x1xf32>
    %6 = arith.mulf %4, %5 : vector<8x1xf32>
    %7 = vector.broadcast %6 : vector<8x1xf32> to vector<8x512xf32>
    %8 = arith.subf %2, %7 : vector<8x512xf32>
    %9 = arith.mulf %8, %8 : vector<8x512xf32>
    %cst_5 = arith.constant dense<0.000000e+00> : vector<8xf32>
    %10 = vector.multi_reduction <add>, %9, %cst_5 [1] : vector<8x512xf32> to vector<8xf32>
    %11 = vector.shape_cast %10 : vector<8xf32> to vector<8x1xf32>
    %cst_6 = arith.constant 0.001953125 : f32
    %12 = vector.broadcast %cst_6 : f32 to vector<8x1xf32>
    %13 = arith.mulf %11, %12 : vector<8x1xf32>
    %c0_7 = arith.constant 0 : index
    %c0_8 = arith.constant 0 : index
    %14 = vector.load %arg3[%c0_7, %c0_8] : memref<8x1xf32, #tpu.memory_space<vmem>>, vector<8x1xf32>
    %cst_9 = arith.constant 9.99999974E-6 : f32
    %15 = vector.broadcast %cst_9 : f32 to vector<8x1xf32>
    %16 = arith.addf %13, %15 : vector<8x1xf32>
    %17 = math.rsqrt %16 : vector<8x1xf32>
    %18 = arith.mulf %14, %17 : vector<8x1xf32>
    %19 = vector.broadcast %18 : vector<8x1xf32> to vector<8x512xf32>
    %20 = arith.mulf %8, %19 : vector<8x512xf32>
    %c0_10 = arith.constant 0 : index
    %c0_11 = arith.constant 0 : index
    %21 = vector.load %arg4[%c0_10, %c0_11] : memref<8x1xf32, #tpu.memory_space<vmem>>, vector<8x1xf32>
    %22 = vector.broadcast %21 : vector<8x1xf32> to vector<8x512xf32>
    %23 = arith.addf %20, %22 : vector<8x512xf32>
    %cst_12 = arith.constant 0.000000e+00 : f32
    %24 = vector.broadcast %cst_12 : f32 to vector<8x512xf32>
    %25 = arith.maximumf %23, %24 : vector<8x512xf32>
    %c0_13 = arith.constant 0 : index
    %c0_14 = arith.constant 0 : index
    %26 = vector.load %arg5[%c0_13, %c0_14] : memref<8x512xf32, #tpu.memory_space<vmem>>, vector<8x512xf32>
    tpu.vector_store %arg5[%c0_13, %c0_14], %25 {strides = array<i32>} : memref<8x512xf32, #tpu.memory_space<vmem>>, vector<8x512xf32>,
    return
  }
  func.func @transform_0(%arg0: i32) -> (i32, i32) {
    %c0_i32 = arith.constant 0 : i32
    %c0_i32_0 = arith.constant 0 : i32
    %c0_i32_1 = arith.constant 0 : i32
    return %c0_i32, %c0_i32_0 : i32, i32
  }
  func.func @transform_1(%arg0: i32) -> (i32, i32) {
    %c0_i32 = arith.constant 0 : i32
    %c0_i32_0 = arith.constant 0 : i32
    %c0_i32_1 = arith.constant 0 : i32
    return %c0_i32, %c0_i32_0 : i32, i32
  }
  func.func @transform_2(%arg0: i32) -> (i32, i32) {
    %c0_i32 = arith.constant 0 : i32
    %c0_i32_0 = arith.constant 0 : i32
    %c0_i32_1 = arith.constant 0 : i32
    return %c0_i32, %c0_i32_0 : i32, i32
  }
  func.func @transform_3(%arg0: i32) -> (i32, i32) {
    %c0_i32 = arith.constant 0 : i32
    %c0_i32_0 = arith.constant 0 : i32
    %c0_i32_1 = arith.constant 0 : i32
    return %c0_i32, %c0_i32_0 : i32, i32
  }
  func.func @transform_4(%arg0: i32) -> (i32, i32) {
    %c0_i32 = arith.constant 0 : i32
    %c0_i32_0 = arith.constant 0 : i32
    %c0_i32_1 = arith.constant 0 : i32
    return %c0_i32, %c0_i32_0 : i32, i32
  }
}

module attributes {stable_mosaic.version = 11 : i64} {
  func.func @conv_bias_tanh_kernel(%arg0: i32, %arg1: memref<3x392xf32, #tpu.memory_space<vmem>>, %arg2: memref<392x256xf32, #tpu.memory_space<vmem>>, %arg3: memref<3x1xf32, #tpu.memory_space<vmem>>, %arg4: memref<3x256xf32, #tpu.memory_space<vmem>>) attributes {dimension_semantics = [#tpu.dimension_semantics<parallel>], iteration_bounds = array<i64: 2>, scalar_prefetch = 0 : i64, scratch_operands = 0 : i64, tpu.core_type = #tpu.core_type<tc>, window_params = [{pipeline_mode = #tpu.pipeline_mode<synchronous>, transform_indices = @transform_0, window_bounds = array<i64: 3, 392>}, {transform_indices = @transform_1, window_bounds = array<i64: 392, 256>}, {pipeline_mode = #tpu.pipeline_mode<synchronous>, transform_indices = @transform_2, window_bounds = array<i64: 3, 1>}, {transform_indices = @transform_3, window_bounds = array<i64: 3, 256>}]} {
    %c0 = arith.constant 0 : index
    %c0_0 = arith.constant 0 : index
    %0 = vector.load %arg1[%c0, %c0_0] : memref<3x392xf32, #tpu.memory_space<vmem>>, vector<3x392xf32>
    %c0_1 = arith.constant 0 : index
    %c0_2 = arith.constant 0 : index
    %1 = vector.load %arg2[%c0_1, %c0_2] : memref<392x256xf32, #tpu.memory_space<vmem>>, vector<392x256xf32>
    %cst = arith.constant dense<0.000000e+00> : vector<3x256xf32>
    %2 = tpu.matmul %0, %1, %cst {dimension_numbers = #tpu.dot_dimension_numbers<[1], [0], [0], [1], [0, 0, 1, 1], [], []>} : vector<3x392xf32>, vector<392x256xf32>, vector<3x256xf32> -> vector<3x256xf32>
    %c0_3 = arith.constant 0 : index
    %c0_4 = arith.constant 0 : index
    %3 = vector.load %arg3[%c0_3, %c0_4] : memref<3x1xf32, #tpu.memory_space<vmem>>, vector<3x1xf32>
    %4 = vector.broadcast %3 : vector<3x1xf32> to vector<3x256xf32>
    %5 = arith.addf %2, %4 : vector<3x256xf32>
    %6 = math.tanh %5 : vector<3x256xf32>
    %c0_5 = arith.constant 0 : index
    %c0_6 = arith.constant 0 : index
    %7 = vector.load %arg4[%c0_5, %c0_6] : memref<3x256xf32, #tpu.memory_space<vmem>>, vector<3x256xf32>
    tpu.vector_store %arg4[%c0_5, %c0_6], %6 {strides = array<i32>} : memref<3x256xf32, #tpu.memory_space<vmem>>, vector<3x256xf32>,
    return
  }
  func.func @transform_0(%arg0: i32) -> (i32, i32) {
    %c0_i32 = arith.constant 0 : i32
    %c0_i32_0 = arith.constant 0 : i32
    %c0_i32_1 = arith.constant 0 : i32
    return %c0_i32, %c0_i32_0 : i32, i32
  }
  func.func @transform_1(%arg0: i32) -> (i32, i32) {
    %c0_i32 = arith.constant 0 : i32
    %c0_i32_0 = arith.constant 0 : i32
    return %c0_i32, %arg0 : i32, i32
  }
  func.func @transform_2(%arg0: i32) -> (i32, i32) {
    %c0_i32 = arith.constant 0 : i32
    %c0_i32_0 = arith.constant 0 : i32
    %c0_i32_1 = arith.constant 0 : i32
    return %c0_i32, %c0_i32_0 : i32, i32
  }
  func.func @transform_3(%arg0: i32) -> (i32, i32) {
    %c0_i32 = arith.constant 0 : i32
    %c0_i32_0 = arith.constant 0 : i32
    return %c0_i32, %arg0 : i32, i32
  }
}

</mosaic_0001>

<llo_original>
// kernel: resnet_generator_forward.14
$region0: #{resnet_generator_forward.14}
  #allocation0 [shape = 'u32[]', space=smem, size = 0x4, offset = 0x4, fixed_abs, tag = 'smem constant byte address 0x4 - core index']
  #allocation1 [shape = 'u32[72,128]{1,0:T(1,128)}', space=vmem, size = 0x9000, scoped, tag = 'internal scratch']
  %s0 = inlined_call_operand.vmem [shape: f32[8,147], index: 0, kind: input, shape index: {}]
  %s1 = inlined_call_operand.vmem [shape: f32[147,512], index: 1, kind: input, shape index: {}]
  %s2 = inlined_call_operand.vmem [shape: f32[8,1], index: 2, kind: input, shape index: {}]
  %s3 = inlined_call_operand.vmem [shape: f32[8,1], index: 3, kind: input, shape index: {}]
  %s4 = inlined_call_operand.vmem [shape: f32[8,512], index: 4, kind: output, shape index: {}]
  %s5 = sld [smem:[#allocation0]]
  $region26: #{resnet_generator_forward.14} parent=0
    _
  %s7 = ssub.s32 1, %s5
  %s8 = scalar_select 0, %s7, %s5
  // Predicated region
  $region2: #{resnet_generator_forward.14} parent=0 // pred_check
    _
  $region3: #{resnet_generator_forward.14} parent=0 // pred_check_branch
    %10 = sbr.rel (0) target = $region5
  $region4: #{resnet_generator_forward.14} parent=0 // pred_region
    _
  $region5: #{resnet_generator_forward.14} parent=0 // pred_fallthru
    _
  // Predicated region
  $region6: #{resnet_generator_forward.14} parent=0 // pred_check
    _
  $region7: #{resnet_generator_forward.14} parent=0 // pred_check_branch
    %12 = sbr.rel (0) target = $region9
  $region8: #{resnet_generator_forward.14} parent=0 // pred_region
    _
  $region9: #{resnet_generator_forward.14} parent=0 // pred_fallthru
    _
  // Predicated region
  $region10: #{resnet_generator_forward.14} parent=0 // pred_check
    _
  $region11: #{resnet_generator_forward.14} parent=0 // pred_check_branch
    %14 = sbr.rel (0) target = $region13
  $region12: #{resnet_generator_forward.14} parent=0 // pred_region
    _
  $region13: #{resnet_generator_forward.14} parent=0 // pred_fallthru
    _
  // Predicated region
  $region14: #{resnet_generator_forward.14} parent=0 // pred_check
    _
  $region15: #{resnet_generator_forward.14} parent=0 // pred_check_branch
    %16 = sbr.rel (0) target = $region17
  $region16: #{resnet_generator_forward.14} parent=0 // pred_region
    _
  $region17: #{resnet_generator_forward.14} parent=0 // pred_fallthru
    _
  %v17 = vld [vmem:[%s0] sm:$0xff]
  %v18 = vld [vmem:[%s0 + $0x8] sm:$0xff]
  %v19 = vld [vmem:[%s1] sm:$0xff]
  %v20 = vld [vmem:[%s1 + $0x8] sm:$0xff]
  %v21 = vld [vmem:[%s1 + $0x10] sm:$0xff]
  %v22 = vld [vmem:[%s1 + $0x18] sm:$0xff]
  %v23 = vld [vmem:[%s1 + $0x20] sm:$0xff]
  %v24 = vld [vmem:[%s1 + $0x28] sm:$0xff]
  %v25 = vld [vmem:[%s1 + $0x30] sm:$0xff]
  %v26 = vld [vmem:[%s1 + $0x38] sm:$0xff]
  %v27 = vld [vmem:[%s1 + $0x40] sm:$0xff]
  %v28 = vld [vmem:[%s1 + $0x48] sm:$0xff]
  %v29 = vld [vmem:[%s1 + $0x50] sm:$0xff]
  %v30 = vld [vmem:[%s1 + $0x58] sm:$0xff]
  %v31 = vld [vmem:[%s1 + $0x60] sm:$0xff]
  %v32 = vld [vmem:[%s1 + $0x68] sm:$0xff]
  %v33 = vld [vmem:[%s1 + $0x70] sm:$0xff]
  %v34 = vld [vmem:[%s1 + $0x78] sm:$0xff]
  %v35 = vld [vmem:[%s1 + $0x80] sm:$0xff]
  %v36 = vld [vmem:[%s1 + $0x88] sm:$0xff]
  %v37 = vld [vmem:[%s1 + $0x90] sm:$0xff]
  %v38 = vld [vmem:[%s1 + $0x98] sm:$0xff]
  %v39 = vld [vmem:[%s1 + $0xa0] sm:$0xff]
  %v40 = vld [vmem:[%s1 + $0xa8] sm:$0xff]
  %v41 = vld [vmem:[%s1 + $0xb0] sm:$0xff]
  %v42 = vld [vmem:[%s1 + $0xb8] sm:$0xff]
  %v43 = vld [vmem:[%s1 + $0xc0] sm:$0xff]
  %v44 = vld [vmem:[%s1 + $0xc8] sm:$0xff]
  %v45 = vld [vmem:[%s1 + $0xd0] sm:$0xff]
  %v46 = vld [vmem:[%s1 + $0xd8] sm:$0xff]
  %v47 = vld [vmem:[%s1 + $0xe0] sm:$0xff]
  %v48 = vld [vmem:[%s1 + $0xe8] sm:$0xff]
  %v49 = vld [vmem:[%s1 + $0xf0] sm:$0xff]
  %v50 = vld [vmem:[%s1 + $0xf8] sm:$0xff]
  %v51 = vld [vmem:[%s1 + $0x100] sm:$0xff]
  %v52 = vld [vmem:[%s1 + $0x108] sm:$0xff]
  %v53 = vld [vmem:[%s1 + $0x110] sm:$0xff]
  %v54 = vld [vmem:[%s1 + $0x118] sm:$0xff]
  %v55 = vld [vmem:[%s1 + $0x120] sm:$0xff]
  %v56 = vld [vmem:[%s1 + $0x128] sm:$0xff]
  %v57 = vld [vmem:[%s1 + $0x130] sm:$0xff]
  %v58 = vld [vmem:[%s1 + $0x138] sm:$0xff]
  %v59 = vld [vmem:[%s1 + $0x140] sm:$0xff]
  %v60 = vld [vmem:[%s1 + $0x148] sm:$0xff]
  %v61 = vld [vmem:[%s1 + $0x150] sm:$0xff]
  %v62 = vld [vmem:[%s1 + $0x158] sm:$0xff]
  %v63 = vld [vmem:[%s1 + $0x160] sm:$0xff]
  %v64 = vld [vmem:[%s1 + $0x168] sm:$0xff]
  %v65 = vld [vmem:[%s1 + $0x170] sm:$0xff]
  %v66 = vld [vmem:[%s1 + $0x178] sm:$0xff]
  %v67 = vld [vmem:[%s1 + $0x180] sm:$0xff]
  %v68 = vld [vmem:[%s1 + $0x188] sm:$0xff]
  %v69 = vld [vmem:[%s1 + $0x190] sm:$0xff]
  %v70 = vld [vmem:[%s1 + $0x198] sm:$0xff]
  %v71 = vld [vmem:[%s1 + $0x1a0] sm:$0xff]
  %v72 = vld [vmem:[%s1 + $0x1a8] sm:$0xff]
  %v73 = vld [vmem:[%s1 + $0x1b0] sm:$0xff]
  %v74 = vld [vmem:[%s1 + $0x1b8] sm:$0xff]
  %v75 = vld [vmem:[%s1 + $0x1c0] sm:$0xff]
  %v76 = vld [vmem:[%s1 + $0x1c8] sm:$0xff]
  %v77 = vld [vmem:[%s1 + $0x1d0] sm:$0xff]
  %v78 = vld [vmem:[%s1 + $0x1d8] sm:$0xff]
  %v79 = vld [vmem:[%s1 + $0x1e0] sm:$0xff]
  %v80 = vld [vmem:[%s1 + $0x1e8] sm:$0xff]
  %v81 = vld [vmem:[%s1 + $0x1f0] sm:$0xff]
  %v82 = vld [vmem:[%s1 + $0x1f8] sm:$0xff]
  %v83 = vld [vmem:[%s1 + $0x200] sm:$0xff]
  %v84 = vld [vmem:[%s1 + $0x208] sm:$0xff]
  %v85 = vld [vmem:[%s1 + $0x210] sm:$0xff]
  %v86 = vld [vmem:[%s1 + $0x218] sm:$0xff]
  %v87 = vld [vmem:[%s1 + $0x220] sm:$0xff]
  %v88 = vld [vmem:[%s1 + $0x228] sm:$0xff]
  %v89 = vld [vmem:[%s1 + $0x230] sm:$0xff]
  %v90 = vld [vmem:[%s1 + $0x238] sm:$0xff]
  %v91 = vld [vmem:[%s1 + $0x240] sm:$0x7]
  %v92 = vld [vmem:[%s1 + $0x248] sm:$0x7]
  %v93 = vld [vmem:[%s1 + $0x250] sm:$0x7]
  %v94 = vld [vmem:[%s1 + $0x258] sm:$0x7]
  %vm95 = vcmask 154624
  %v97 = vsel %vm95, %v18, 0
  %vm99 = vcmask 1042432
  %v101 = vsel %vm99, %v91, 0
  %v104 = vsel %vm99, %v92, 0
  %v107 = vsel %vm99, %v93, 0
  %v110 = vsel %vm99, %v94, 0
  %112 = vmatpush.msra.mxu0 %v79
  %113 = vmatpush.msra.mxu0 %v75
  %114 = vmatpush.msra.mxu0 %v71
  %115 = vmatpush.msra.mxu0 %v67
  %116 = vmatpush.msra.mxu0 %v63
  %117 = vmatpush.msra.mxu0 %v59
  %118 = vmatpush.msra.mxu0 %v55
  %119 = vmatpush.msra.mxu0 %v51
  %120 = vmatpush.msra.mxu0 %v47
  %121 = vmatpush.msra.mxu0 %v43
  %122 = vmatpush.msra.mxu0 %v39
  %123 = vmatpush.msra.mxu0 %v35
  %124 = vmatpush.msra.mxu0 %v31
  %125 = vmatpush.msra.mxu0 %v27
  %126 = vmatpush.msra.mxu0 %v23
  %127 = vmatpush.msra.mxu0 %v19
  %128 = vmatmul.f32.gmra.mxu0 %v17
  %v129 = vpop.f32.mrf.mxu0
  %v130 = vadd.f32 0.0, %v129
  %131 = vdwg.mxu0
  %132 = vmatpush.msra.mxu0 0.0
  %133 = vmatpush.msra.mxu0 0.0
  %134 = vmatpush.msra.mxu0 0.0
  %135 = vmatpush.msra.mxu0 0.0
  %136 = vmatpush.msra.mxu0 0.0
  %137 = vmatpush.msra.mxu0 0.0
  %138 = vmatpush.msra.mxu0 0.0
  %139 = vmatpush.msra.mxu0 0.0
  %140 = vmatpush.msra.mxu0 0.0
  %141 = vmatpush.msra.mxu0 0.0
  %142 = vmatpush.msra.mxu0 0.0
  %143 = vmatpush.msra.mxu0 0.0
  %144 = vmatpush.msra.mxu0 0.0
  %145 = vmatpush.msra.mxu0 %v101
  %146 = vmatpush.msra.mxu0 %v87
  %147 = vmatpush.msra.mxu0 %v83
  %148 = vmatmul.f32.gmra.mxu0 %v97
  %v149 = vpop.f32.mrf.mxu0
  %v150 = vadd.f32 %v130, %v149
  %151 = vdwg.mxu0
  %152 = vmatpush.msra.mxu0 %v80
  %153 = vmatpush.msra.mxu0 %v76
  %154 = vmatpush.msra.mxu0 %v72
  %155 = vmatpush.msra.mxu0 %v68
  %156 = vmatpush.msra.mxu0 %v64
  %157 = vmatpush.msra.mxu0 %v60
  %158 = vmatpush.msra.mxu0 %v56
  %159 = vmatpush.msra.mxu0 %v52
  %160 = vmatpush.msra.mxu0 %v48
  %161 = vmatpush.msra.mxu0 %v44
  %162 = vmatpush.msra.mxu0 %v40
  %163 = vmatpush.msra.mxu0 %v36
  %164 = vmatpush.msra.mxu0 %v32
  %165 = vmatpush.msra.mxu0 %v28
  %166 = vmatpush.msra.mxu0 %v24
  %167 = vmatpush.msra.mxu0 %v20
  %168 = vmatmul.f32.gmra.mxu0 %v17
  %v169 = vpop.f32.mrf.mxu0
  %v170 = vadd.f32 0.0, %v169
  %171 = vdwg.mxu0
  %172 = vmatpush.msra.mxu0 0.0
  %173 = vmatpush.msra.mxu0 0.0
  %174 = vmatpush.msra.mxu0 0.0
  %175 = vmatpush.msra.mxu0 0.0
  %176 = vmatpush.msra.mxu0 0.0
  %177 = vmatpush.msra.mxu0 0.0
  %178 = vmatpush.msra.mxu0 0.0
  %179 = vmatpush.msra.mxu0 0.0
  %180 = vmatpush.msra.mxu0 0.0
  %181 = vmatpush.msra.mxu0 0.0
  %182 = vmatpush.msra.mxu0 0.0
  %183 = vmatpush.msra.mxu0 0.0
  %184 = vmatpush.msra.mxu0 0.0
  %185 = vmatpush.msra.mxu0 %v104
  %186 = vmatpush.msra.mxu0 %v88
  %187 = vmatpush.msra.mxu0 %v84
  %188 = vmatmul.f32.gmra.mxu0 %v97
  %v189 = vpop.f32.mrf.mxu0
  %v190 = vadd.f32 %v170, %v189
  %191 = vdwg.mxu0
  %192 = vmatpush.msra.mxu0 %v81
  %193 = vmatpush.msra.mxu0 %v77
  %194 = vmatpush.msra.mxu0 %v73
  %195 = vmatpush.msra.mxu0 %v69
  %196 = vmatpush.msra.mxu0 %v65
  %197 = vmatpush.msra.mxu0 %v61
  %198 = vmatpush.msra.mxu0 %v57
  %199 = vmatpush.msra.mxu0 %v53
  %200 = vmatpush.msra.mxu0 %v49
  %201 = vmatpush.msra.mxu0 %v45
  %202 = vmatpush.msra.mxu0 %v41
  %203 = vmatpush.msra.mxu0 %v37
  %204 = vmatpush.msra.mxu0 %v33
  %205 = vmatpush.msra.mxu0 %v29
  %206 = vmatpush.msra.mxu0 %v25
  %207 = vmatpush.msra.mxu0 %v21
  %208 = vmatmul.f32.gmra.mxu0 %v17
  %v209 = vpop.f32.mrf.mxu0
  %v210 = vadd.f32 0.0, %v209
  %211 = vdwg.mxu0
  %212 = vmatpush.msra.mxu0 0.0
  %213 = vmatpush.msra.mxu0 0.0
  %214 = vmatpush.msra.mxu0 0.0
  %215 = vmatpush.msra.mxu0 0.0
  %216 = vmatpush.msra.mxu0 0.0
  %217 = vmatpush.msra.mxu0 0.0
  %218 = vmatpush.msra.mxu0 0.0
  %219 = vmatpush.msra.mxu0 0.0
  %220 = vmatpush.msra.mxu0 0.0
  %221 = vmatpush.msra.mxu0 0.0
  %222 = vmatpush.msra.mxu0 0.0
  %223 = vmatpush.msra.mxu0 0.0
  %224 = vmatpush.msra.mxu0 0.0
  %225 = vmatpush.msra.mxu0 %v107
  %226 = vmatpush.msra.mxu0 %v89
  %227 = vmatpush.msra.mxu0 %v85
  %228 = vmatmul.f32.gmra.mxu0 %v97
  %v229 = vpop.f32.mrf.mxu0
  %v230 = vadd.f32 %v210, %v229
  %231 = vdwg.mxu0
  %232 = vmatpush.msra.mxu0 %v82
  %233 = vmatpush.msra.mxu0 %v78
  %234 = vmatpush.msra.mxu0 %v74
  %235 = vmatpush.msra.mxu0 %v70
  %236 = vmatpush.msra.mxu0 %v66
  %237 = vmatpush.msra.mxu0 %v62
  %238 = vmatpush.msra.mxu0 %v58
  %239 = vmatpush.msra.mxu0 %v54
  %240 = vmatpush.msra.mxu0 %v50
  %241 = vmatpush.msra.mxu0 %v46
  %242 = vmatpush.msra.mxu0 %v42
  %243 = vmatpush.msra.mxu0 %v38
  %244 = vmatpush.msra.mxu0 %v34
  %245 = vmatpush.msra.mxu0 %v30
  %246 = vmatpush.msra.mxu0 %v26
  %247 = vmatpush.msra.mxu0 %v22
  %248 = vmatmul.f32.gmra.mxu0 %v17
  %v249 = vpop.f32.mrf.mxu0
  %v250 = vadd.f32 0.0, %v249
  %251 = vdwg.mxu0
  %252 = vmatpush.msra.mxu0 0.0
  %253 = vmatpush.msra.mxu0 0.0
  %254 = vmatpush.msra.mxu0 0.0
  %255 = vmatpush.msra.mxu0 0.0
  %256 = vmatpush.msra.mxu0 0.0
  %257 = vmatpush.msra.mxu0 0.0
  %258 = vmatpush.msra.mxu0 0.0
  %259 = vmatpush.msra.mxu0 0.0
  %260 = vmatpush.msra.mxu0 0.0
  %261 = vmatpush.msra.mxu0 0.0
  %262 = vmatpush.msra.mxu0 0.0
  %263 = vmatpush.msra.mxu0 0.0
  %264 = vmatpush.msra.mxu0 0.0
  %265 = vmatpush.msra.mxu0 %v110
  %266 = vmatpush.msra.mxu0 %v90
  %267 = vmatpush.msra.mxu0 %v86
  %268 = vmatmul.f32.gmra.mxu0 %v97
  %v269 = vpop.f32.mrf.mxu0
  %v270 = vadd.f32 %v250, %v269
  %271 = vdwg.mxu0
  %v272 = vadd.f32 %v150, %v190
  %v273 = vadd.f32 %v272, %v230
  %v274 = vadd.f32 %v273, %v270
  %275 = vadd.xlane.f32.xlu0 %v274
  %v276 = vpop.xlane.xlu0 %275
  %v277 = vmul.f32 %v276, 0.001953125
  %v278 = vsub.f32 %v150, %v277
  %v279 = vsub.f32 %v190, %v277
  %v280 = vsub.f32 %v230, %v277
  %v281 = vsub.f32 %v270, %v277
  %v282 = vmul.f32 %v278, %v278
  %v283 = vmul.f32 %v279, %v279
  %v284 = vmul.f32 %v280, %v280
  %v285 = vmul.f32 %v281, %v281
  %v286 = vadd.f32 %v282, %v283
  %v287 = vadd.f32 %v286, %v284
  %v288 = vadd.f32 %v287, %v285
  %289 = vadd.xlane.f32.xlu0 %v288
  %v290 = vpop.xlane.xlu0 %289
  %v291 = vmul.f32 %v290, 0.001953125
  %v292 = vld [vmem:[%s2] sm:$0xff]
  %v293 = vadd.f32 %v291, 1e-05
  %v294 = vrsqrt.pop %v293
  %v295 = vmul.f32 %v294, %v293
  %v296 = vmul.f32 %v295, %v294
  %v297 = vmul.f32 0.5, %v296
  %v298 = vsub.f32 1.5, %v297
  %v299 = vmul.f32 %v294, %v298
  %vm300 = vweird.f32 %v293
  %vm301 = vweird.f32 %v294
  %vm302 = vmor %vm300, %vm301
  %v303 = vsel %vm302, %v294, %v299
  %v304 = vmul.f32 %v292, %v303
  %306 = vset.pattern.permute.xlu0 0
  %307 = vperm.xlu0 %306, %v304
  %v308 = vpop.permute.xlu0 %307
  %v310 = vmul.f32 %v278, %v308
  %v311 = vmul.f32 %v279, %v308
  %v312 = vmul.f32 %v280, %v308
  %v313 = vmul.f32 %v281, %v308
  %v314 = vld [vmem:[%s3] sm:$0xff]
  %316 = vset.pattern.permute.xlu0 0
  %317 = vperm.xlu0 %316, %v314
  %v318 = vpop.permute.xlu0 %317
  %v320 = vadd.f32 %v310, %v318
  %v321 = vadd.f32 %v311, %v318
  %v322 = vadd.f32 %v312, %v318
  %v323 = vadd.f32 %v313, %v318
  %v324 = vmax.f32 %v320, 0.0
  %v325 = vmax.f32 %v321, 0.0
  %v326 = vmax.f32 %v322, 0.0
  %v327 = vmax.f32 %v323, 0.0
  %328 = vst [vmem:[%s4] sm:$0xff] %v324
  %329 = vst [vmem:[%s4 + $0x8] sm:$0xff] %v325
  %330 = vst [vmem:[%s4 + $0x10] sm:$0xff] %v326
  %331 = vst [vmem:[%s4 + $0x18] sm:$0xff] %v327
  // Predicated region
  $region18: #{resnet_generator_forward.14} parent=0 // pred_check
    _
  $region19: #{resnet_generator_forward.14} parent=0 // pred_check_branch
    %333 = sbr.rel (0) target = $region21
  $region20: #{resnet_generator_forward.14} parent=0 // pred_region
    _
  $region21: #{resnet_generator_forward.14} parent=0 // pred_fallthru
    _
  // Predicated region
  $region22: #{resnet_generator_forward.14} parent=0 // pred_check
    _
  $region23: #{resnet_generator_forward.14} parent=0 // pred_check_branch
    %335 = sbr.rel (0) target = $region25
  $region24: #{resnet_generator_forward.14} parent=0 // pred_region
    _
  $region25: #{resnet_generator_forward.14} parent=0 // pred_fallthru
    _

// kernel: resnet_generator_forward.15
$region0: #{resnet_generator_forward.15}
  #allocation0 [shape = 'u32[]', space=smem, size = 0x4, offset = 0x4, fixed_abs, tag = 'smem constant byte address 0x4 - core index']
  #allocation1 [shape = 'u32[72,128]{1,0:T(1,128)}', space=vmem, size = 0x9000, scoped, tag = 'internal scratch']
  %s0 = inlined_call_operand.vmem [shape: f32[16,72], index: 0, kind: input, shape index: {}]
  %s1 = inlined_call_operand.vmem [shape: f32[72,128], index: 1, kind: input, shape index: {}]
  %s2 = inlined_call_operand.vmem [shape: f32[16,1], index: 2, kind: input, shape index: {}]
  %s3 = inlined_call_operand.vmem [shape: f32[16,1], index: 3, kind: input, shape index: {}]
  %s4 = inlined_call_operand.vmem [shape: f32[16,128], index: 4, kind: output, shape index: {}]
  %s5 = sld [smem:[#allocation0]]
  $region26: #{resnet_generator_forward.15} parent=0
    _
  %s7 = ssub.s32 1, %s5
  %s8 = scalar_select 0, %s7, %s5
  // Predicated region
  $region2: #{resnet_generator_forward.15} parent=0 // pred_check
    _
  $region3: #{resnet_generator_forward.15} parent=0 // pred_check_branch
    %10 = sbr.rel (0) target = $region5
  $region4: #{resnet_generator_forward.15} parent=0 // pred_region
    _
  $region5: #{resnet_generator_forward.15} parent=0 // pred_fallthru
    _
  // Predicated region
  $region6: #{resnet_generator_forward.15} parent=0 // pred_check
    _
  $region7: #{resnet_generator_forward.15} parent=0 // pred_check_branch
    %12 = sbr.rel (0) target = $region9
  $region8: #{resnet_generator_forward.15} parent=0 // pred_region
    _
  $region9: #{resnet_generator_forward.15} parent=0 // pred_fallthru
    _
  // Predicated region
  $region10: #{resnet_generator_forward.15} parent=0 // pred_check
    _
  $region11: #{resnet_generator_forward.15} parent=0 // pred_check_branch
    %14 = sbr.rel (0) target = $region13
  $region12: #{resnet_generator_forward.15} parent=0 // pred_region
    _
  $region13: #{resnet_generator_forward.15} parent=0 // pred_fallthru
    _
  // Predicated region
  $region14: #{resnet_generator_forward.15} parent=0 // pred_check
    _
  $region15: #{resnet_generator_forward.15} parent=0 // pred_check_branch
    %16 = sbr.rel (0) target = $region17
  $region16: #{resnet_generator_forward.15} parent=0 // pred_region
    _
  $region17: #{resnet_generator_forward.15} parent=0 // pred_fallthru
    _
  %v17 = vld [vmem:[%s0] sm:$0xff]
  %v18 = vld [vmem:[%s0 + $0x8] sm:$0xff]
  %v19 = vld [vmem:[%s1] sm:$0xff]
  %v20 = vld [vmem:[%s1 + $0x8] sm:$0xff]
  %v21 = vld [vmem:[%s1 + $0x10] sm:$0xff]
  %v22 = vld [vmem:[%s1 + $0x18] sm:$0xff]
  %v23 = vld [vmem:[%s1 + $0x20] sm:$0xff]
  %v24 = vld [vmem:[%s1 + $0x28] sm:$0xff]
  %v25 = vld [vmem:[%s1 + $0x30] sm:$0xff]
  %v26 = vld [vmem:[%s1 + $0x38] sm:$0xff]
  %v27 = vld [vmem:[%s1 + $0x40] sm:$0xff]
  %vm28 = vcmask 588800
  %v30 = vsel %vm28, %v17, 0
  %v33 = vsel %vm28, %v18, 0
  %35 = vmatpush.msra.mxu0 0.0
  %36 = vmatpush.msra.mxu0 0.0
  %37 = vmatpush.msra.mxu0 0.0
  %38 = vmatpush.msra.mxu0 0.0
  %39 = vmatpush.msra.mxu0 0.0
  %40 = vmatpush.msra.mxu0 0.0
  %41 = vmatpush.msra.mxu0 0.0
  %42 = vmatpush.msra.mxu0 %v27
  %43 = vmatpush.msra.mxu0 %v26
  %44 = vmatpush.msra.mxu0 %v25
  %45 = vmatpush.msra.mxu0 %v24
  %46 = vmatpush.msra.mxu0 %v23
  %47 = vmatpush.msra.mxu0 %v22
  %48 = vmatpush.msra.mxu0 %v21
  %49 = vmatpush.msra.mxu0 %v20
  %50 = vmatpush.msra.mxu0 %v19
  %51 = vmatmul.f32.gmra.mxu0 %v30
  %v52 = vpop.f32.mrf.mxu0
  %v53 = vadd.f32 0.0, %v52
  %54 = vmatmul.f32.gmra.mxu0 %v33
  %v55 = vpop.f32.mrf.mxu0
  %v56 = vadd.f32 0.0, %v55
  %57 = vdwg.mxu0
  %58 = vadd.xlane.f32.xlu0 %v53
  %v59 = vpop.xlane.xlu0 %58
  %60 = vadd.xlane.f32.xlu0 %v56
  %v61 = vpop.xlane.xlu0 %60
  %v62 = vmul.f32 %v59, 0.0078125
  %v63 = vmul.f32 %v61, 0.0078125
  %v64 = vsub.f32 %v53, %v62
  %v65 = vsub.f32 %v56, %v63
  %v66 = vmul.f32 %v64, %v64
  %v67 = vmul.f32 %v65, %v65
  %68 = vadd.xlane.f32.xlu0 %v66
  %v69 = vpop.xlane.xlu0 %68
  %70 = vadd.xlane.f32.xlu0 %v67
  %v71 = vpop.xlane.xlu0 %70
  %v72 = vmul.f32 %v69, 0.0078125
  %v73 = vmul.f32 %v71, 0.0078125
  %v74 = vld [vmem:[%s2] sm:$0xff]
  %v75 = vld [vmem:[%s2 + $0x8] sm:$0xff]
  %v76 = vadd.f32 %v72, 1e-05
  %v77 = vadd.f32 %v73, 1e-05
  %v78 = vrsqrt.pop %v76
  %v79 = vmul.f32 %v78, %v76
  %v80 = vmul.f32 %v79, %v78
  %v81 = vmul.f32 0.5, %v80
  %v82 = vsub.f32 1.5, %v81
  %v83 = vmul.f32 %v78, %v82
  %vm84 = vweird.f32 %v76
  %vm85 = vweird.f32 %v78
  %vm86 = vmor %vm84, %vm85
  %v87 = vsel %vm86, %v78, %v83
  %v88 = vrsqrt.pop %v77
  %v89 = vmul.f32 %v88, %v77
  %v90 = vmul.f32 %v89, %v88
  %v91 = vmul.f32 0.5, %v90
  %v92 = vsub.f32 1.5, %v91
  %v93 = vmul.f32 %v88, %v92
  %vm94 = vweird.f32 %v77
  %vm95 = vweird.f32 %v88
  %vm96 = vmor %vm94, %vm95
  %v97 = vsel %vm96, %v88, %v93
  %v98 = vmul.f32 %v74, %v87
  %v99 = vmul.f32 %v75, %v97
  %101 = vset.pattern.permute.xlu0 0
  %102 = vperm.xlu0 %101, %v98
  %v103 = vpop.permute.xlu0 %102
  %106 = vset.pattern.permute.xlu0 0
  %107 = vperm.xlu0 %106, %v99
  %v108 = vpop.permute.xlu0 %107
  %v110 = vmul.f32 %v64, %v103
  %v111 = vmul.f32 %v65, %v108
  %v112 = vld [vmem:[%s3] sm:$0xff]
  %v113 = vld [vmem:[%s3 + $0x8] sm:$0xff]
  %115 = vset.pattern.permute.xlu0 0
  %116 = vperm.xlu0 %115, %v112
  %v117 = vpop.permute.xlu0 %116
  %120 = vset.pattern.permute.xlu0 0
  %121 = vperm.xlu0 %120, %v113
  %v122 = vpop.permute.xlu0 %121
  %v124 = vadd.f32 %v110, %v117
  %v125 = vadd.f32 %v111, %v122
  %v126 = vmax.f32 %v124, 0.0
  %v127 = vmax.f32 %v125, 0.0
  %128 = vst [vmem:[%s4] sm:$0xff] %v126
  %129 = vst [vmem:[%s4 + $0x8] sm:$0xff] %v127
  // Predicated region
  $region18: #{resnet_generator_forward.15} parent=0 // pred_check
    _
  $region19: #{resnet_generator_forward.15} parent=0 // pred_check_branch
    %131 = sbr.rel (0) target = $region21
  $region20: #{resnet_generator_forward.15} parent=0 // pred_region
    _
  $region21: #{resnet_generator_forward.15} parent=0 // pred_fallthru
    _
  // Predicated region
  $region22: #{resnet_generator_forward.15} parent=0 // pred_check
    _
  $region23: #{resnet_generator_forward.15} parent=0 // pred_check_branch
    %133 = sbr.rel (0) target = $region25
  $region24: #{resnet_generator_forward.15} parent=0 // pred_region
    _
  $region25: #{resnet_generator_forward.15} parent=0 // pred_fallthru
    _

// kernel: resnet_generator_forward.16
$region0: #{resnet_generator_forward.16}
  #allocation0 [shape = 'u32[]', space=smem, size = 0x4, offset = 0x4, fixed_abs, tag = 'smem constant byte address 0x4 - core index']
  #allocation1 [shape = 'u32[72,128]{1,0:T(1,128)}', space=vmem, size = 0x9000, scoped, tag = 'internal scratch']
  %s0 = inlined_call_operand.vmem [shape: f32[32,144], index: 0, kind: input, shape index: {}]
  %s1 = inlined_call_operand.vmem [shape: f32[144,32], index: 1, kind: input, shape index: {}]
  %s2 = inlined_call_operand.vmem [shape: f32[32,1], index: 2, kind: input, shape index: {}]
  %s3 = inlined_call_operand.vmem [shape: f32[32,1], index: 3, kind: input, shape index: {}]
  %s4 = inlined_call_operand.vmem [shape: f32[32,32], index: 4, kind: output, shape index: {}]
  %s5 = sld [smem:[#allocation0]]
  $region26: #{resnet_generator_forward.16} parent=0
    _
  %s7 = ssub.s32 1, %s5
  %s8 = scalar_select 0, %s7, %s5
  // Predicated region
  $region2: #{resnet_generator_forward.16} parent=0 // pred_check
    _
  $region3: #{resnet_generator_forward.16} parent=0 // pred_check_branch
    %10 = sbr.rel (0) target = $region5
  $region4: #{resnet_generator_forward.16} parent=0 // pred_region
    _
  $region5: #{resnet_generator_forward.16} parent=0 // pred_fallthru
    _
  // Predicated region
  $region6: #{resnet_generator_forward.16} parent=0 // pred_check
    _
  $region7: #{resnet_generator_forward.16} parent=0 // pred_check_branch
    %12 = sbr.rel (0) target = $region9
  $region8: #{resnet_generator_forward.16} parent=0 // pred_region
    _
  $region9: #{resnet_generator_forward.16} parent=0 // pred_fallthru
    _
  // Predicated region
  $region10: #{resnet_generator_forward.16} parent=0 // pred_check
    _
  $region11: #{resnet_generator_forward.16} parent=0 // pred_check_branch
    %14 = sbr.rel (0) target = $region13
  $region12: #{resnet_generator_forward.16} parent=0 // pred_region
    _
  $region13: #{resnet_generator_forward.16} parent=0 // pred_fallthru
    _
  // Predicated region
  $region14: #{resnet_generator_forward.16} parent=0 // pred_check
    _
  $region15: #{resnet_generator_forward.16} parent=0 // pred_check_branch
    %16 = sbr.rel (0) target = $region17
  $region16: #{resnet_generator_forward.16} parent=0 // pred_region
    _
  $region17: #{resnet_generator_forward.16} parent=0 // pred_fallthru
    _
  %v17 = vld [vmem:[%s0] sm:$0xff]
  %v18 = vld [vmem:[%s0 + $0x8] sm:$0xff]
  %v19 = vld [vmem:[%s0 + $0x10] sm:$0xff]
  %v20 = vld [vmem:[%s0 + $0x18] sm:$0xff]
  %v21 = vld [vmem:[%s0 + $0x20] sm:$0xff]
  %v22 = vld [vmem:[%s0 + $0x28] sm:$0xff]
  %v23 = vld [vmem:[%s0 + $0x30] sm:$0xff]
  %v24 = vld [vmem:[%s0 + $0x38] sm:$0xff]
  %v25 = vld [vmem:[%s1] sm:$0xff]
  %v26 = vld [vmem:[%s1 + $0x8] sm:$0xff]
  %v27 = vld [vmem:[%s1 + $0x10] sm:$0xff]
  %v28 = vld [vmem:[%s1 + $0x18] sm:$0xff]
  %v29 = vld [vmem:[%s1 + $0x20] sm:$0xff]
  %v30 = vld [vmem:[%s1 + $0x28] sm:$0xff]
  %v31 = vld [vmem:[%s1 + $0x30] sm:$0xff]
  %v32 = vld [vmem:[%s1 + $0x38] sm:$0xff]
  %v33 = vld [vmem:[%s1 + $0x40] sm:$0xff]
  %v34 = vld [vmem:[%s1 + $0x48] sm:$0xff]
  %v35 = vld [vmem:[%s1 + $0x50] sm:$0xff]
  %v36 = vld [vmem:[%s1 + $0x58] sm:$0xff]
  %v37 = vld [vmem:[%s1 + $0x60] sm:$0xff]
  %v38 = vld [vmem:[%s1 + $0x68] sm:$0xff]
  %v39 = vld [vmem:[%s1 + $0x70] sm:$0xff]
  %v40 = vld [vmem:[%s1 + $0x78] sm:$0xff]
  %v41 = vld [vmem:[%s1 + $0x80] sm:$0xff]
  %v42 = vld [vmem:[%s1 + $0x88] sm:$0xff]
  %vm43 = vcmask 130048
  %v45 = vsel %vm43, %v18, 0
  %v48 = vsel %vm43, %v20, 0
  %v51 = vsel %vm43, %v22, 0
  %v54 = vsel %vm43, %v24, 0
  %56 = vmatpush.msra.mxu0 %v40
  %57 = vmatpush.msra.mxu0 %v39
  %58 = vmatpush.msra.mxu0 %v38
  %59 = vmatpush.msra.mxu0 %v37
  %60 = vmatpush.msra.mxu0 %v36
  %61 = vmatpush.msra.mxu0 %v35
  %62 = vmatpush.msra.mxu0 %v34
  %63 = vmatpush.msra.mxu0 %v33
  %64 = vmatpush.msra.mxu0 %v32
  %65 = vmatpush.msra.mxu0 %v31
  %66 = vmatpush.msra.mxu0 %v30
  %67 = vmatpush.msra.mxu0 %v29
  %68 = vmatpush.msra.mxu0 %v28
  %69 = vmatpush.msra.mxu0 %v27
  %70 = vmatpush.msra.mxu0 %v26
  %71 = vmatpush.msra.mxu0 %v25
  %72 = vmatmul.f32.gmra.mxu0 %v17
  %v73 = vpop.f32.mrf.mxu0
  %v74 = vadd.f32 0.0, %v73
  %75 = vmatmul.f32.gmra.mxu0 %v19
  %v76 = vpop.f32.mrf.mxu0
  %v77 = vadd.f32 0.0, %v76
  %78 = vmatmul.f32.gmra.mxu0 %v21
  %v79 = vpop.f32.mrf.mxu0
  %v80 = vadd.f32 0.0, %v79
  %81 = vmatmul.f32.gmra.mxu0 %v23
  %v82 = vpop.f32.mrf.mxu0
  %v83 = vadd.f32 0.0, %v82
  %84 = vdwg.mxu0
  %85 = vmatpush.msra.mxu0 0.0
  %86 = vmatpush.msra.mxu0 0.0
  %87 = vmatpush.msra.mxu0 0.0
  %88 = vmatpush.msra.mxu0 0.0
  %89 = vmatpush.msra.mxu0 0.0
  %90 = vmatpush.msra.mxu0 0.0
  %91 = vmatpush.msra.mxu0 0.0
  %92 = vmatpush.msra.mxu0 0.0
  %93 = vmatpush.msra.mxu0 0.0
  %94 = vmatpush.msra.mxu0 0.0
  %95 = vmatpush.msra.mxu0 0.0
  %96 = vmatpush.msra.mxu0 0.0
  %97 = vmatpush.msra.mxu0 0.0
  %98 = vmatpush.msra.mxu0 0.0
  %99 = vmatpush.msra.mxu0 %v42
  %100 = vmatpush.msra.mxu0 %v41
  %101 = vmatmul.f32.gmra.mxu0 %v45
  %v102 = vpop.f32.mrf.mxu0
  %v103 = vadd.f32 %v74, %v102
  %104 = vmatmul.f32.gmra.mxu0 %v48
  %v105 = vpop.f32.mrf.mxu0
  %v106 = vadd.f32 %v77, %v105
  %107 = vmatmul.f32.gmra.mxu0 %v51
  %v108 = vpop.f32.mrf.mxu0
  %v109 = vadd.f32 %v80, %v108
  %110 = vmatmul.f32.gmra.mxu0 %v54
  %v111 = vpop.f32.mrf.mxu0
  %v112 = vadd.f32 %v83, %v111
  %113 = vdwg.mxu0
  %vm114 = vcmask 261120
  %v115 = vsel %vm114, %v103, 0.0
  %116 = vadd.xlane.f32.xlu0 %v115
  %v117 = vpop.xlane.xlu0 %116
  %v118 = vsel %vm114, %v106, 0.0
  %119 = vadd.xlane.f32.xlu0 %v118
  %v120 = vpop.xlane.xlu0 %119
  %v121 = vsel %vm114, %v109, 0.0
  %122 = vadd.xlane.f32.xlu0 %v121
  %v123 = vpop.xlane.xlu0 %122
  %v124 = vsel %vm114, %v112, 0.0
  %125 = vadd.xlane.f32.xlu0 %v124
  %v126 = vpop.xlane.xlu0 %125
  %v127 = vmul.f32 %v117, 0.03125
  %v128 = vmul.f32 %v120, 0.03125
  %v129 = vmul.f32 %v123, 0.03125
  %v130 = vmul.f32 %v126, 0.03125
  %v131 = vsub.f32 %v103, %v127
  %v132 = vsub.f32 %v106, %v128
  %v133 = vsub.f32 %v109, %v129
  %v134 = vsub.f32 %v112, %v130
  %v135 = vmul.f32 %v131, %v131
  %v136 = vmul.f32 %v132, %v132
  %v137 = vmul.f32 %v133, %v133
  %v138 = vmul.f32 %v134, %v134
  %v139 = vsel %vm114, %v135, 0.0
  %140 = vadd.xlane.f32.xlu0 %v139
  %v141 = vpop.xlane.xlu0 %140
  %v142 = vsel %vm114, %v136, 0.0
  %143 = vadd.xlane.f32.xlu0 %v142
  %v144 = vpop.xlane.xlu0 %143
  %v145 = vsel %vm114, %v137, 0.0
  %146 = vadd.xlane.f32.xlu0 %v145
  %v147 = vpop.xlane.xlu0 %146
  %v148 = vsel %vm114, %v138, 0.0
  %149 = vadd.xlane.f32.xlu0 %v148
  %v150 = vpop.xlane.xlu0 %149
  %v151 = vmul.f32 %v141, 0.03125
  %v152 = vmul.f32 %v144, 0.03125
  %v153 = vmul.f32 %v147, 0.03125
  %v154 = vmul.f32 %v150, 0.03125
  %v155 = vld [vmem:[%s2] sm:$0xff]
  %v156 = vld [vmem:[%s2 + $0x8] sm:$0xff]
  %v157 = vld [vmem:[%s2 + $0x10] sm:$0xff]
  %v158 = vld [vmem:[%s2 + $0x18] sm:$0xff]
  %v159 = vadd.f32 %v151, 1e-05
  %v160 = vadd.f32 %v152, 1e-05
  %v161 = vadd.f32 %v153, 1e-05
  %v162 = vadd.f32 %v154, 1e-05
  %v163 = vrsqrt.pop %v159
  %v164 = vmul.f32 %v163, %v159
  %v165 = vmul.f32 %v164, %v163
  %v166 = vmul.f32 0.5, %v165
  %v167 = vsub.f32 1.5, %v166
  %v168 = vmul.f32 %v163, %v167
  %vm169 = vweird.f32 %v159
  %vm170 = vweird.f32 %v163
  %vm171 = vmor %vm169, %vm170
  %v172 = vsel %vm171, %v163, %v168
  %v173 = vrsqrt.pop %v160
  %v174 = vmul.f32 %v173, %v160
  %v175 = vmul.f32 %v174, %v173
  %v176 = vmul.f32 0.5, %v175
  %v177 = vsub.f32 1.5, %v176
  %v178 = vmul.f32 %v173, %v177
  %vm179 = vweird.f32 %v160
  %vm180 = vweird.f32 %v173
  %vm181 = vmor %vm179, %vm180
  %v182 = vsel %vm181, %v173, %v178
  %v183 = vrsqrt.pop %v161
  %v184 = vmul.f32 %v183, %v161
  %v185 = vmul.f32 %v184, %v183
  %v186 = vmul.f32 0.5, %v185
  %v187 = vsub.f32 1.5, %v186
  %v188 = vmul.f32 %v183, %v187
  %vm189 = vweird.f32 %v161
  %vm190 = vweird.f32 %v183
  %vm191 = vmor %vm189, %vm190
  %v192 = vsel %vm191, %v183, %v188
  %v193 = vrsqrt.pop %v162
  %v194 = vmul.f32 %v193, %v162
  %v195 = vmul.f32 %v194, %v193
  %v196 = vmul.f32 0.5, %v195
  %v197 = vsub.f32 1.5, %v196
  %v198 = vmul.f32 %v193, %v197
  %vm199 = vweird.f32 %v162
  %vm200 = vweird.f32 %v193
  %vm201 = vmor %vm199, %vm200
  %v202 = vsel %vm201, %v193, %v198
  %v203 = vmul.f32 %v155, %v172
  %v204 = vmul.f32 %v156, %v182
  %v205 = vmul.f32 %v157, %v192
  %v206 = vmul.f32 %v158, %v202
  %208 = vset.pattern.permute.xlu0 0
  %209 = vperm.xlu0 %208, %v203
  %v210 = vpop.permute.xlu0 %209
  %213 = vset.pattern.permute.xlu0 0
  %214 = vperm.xlu0 %213, %v204
  %v215 = vpop.permute.xlu0 %214
  %218 = vset.pattern.permute.xlu0 0
  %219 = vperm.xlu0 %218, %v205
  %v220 = vpop.permute.xlu0 %219
  %223 = vset.pattern.permute.xlu0 0
  %224 = vperm.xlu0 %223, %v206
  %v225 = vpop.permute.xlu0 %224
  %v227 = vmul.f32 %v131, %v210
  %v228 = vmul.f32 %v132, %v215
  %v229 = vmul.f32 %v133, %v220
  %v230 = vmul.f32 %v134, %v225
  %v231 = vld [vmem:[%s3] sm:$0xff]
  %v232 = vld [vmem:[%s3 + $0x8] sm:$0xff]
  %v233 = vld [vmem:[%s3 + $0x10] sm:$0xff]
  %v234 = vld [vmem:[%s3 + $0x18] sm:$0xff]
  %236 = vset.pattern.permute.xlu0 0
  %237 = vperm.xlu0 %236, %v231
  %v238 = vpop.permute.xlu0 %237
  %241 = vset.pattern.permute.xlu0 0
  %242 = vperm.xlu0 %241, %v232
  %v243 = vpop.permute.xlu0 %242
  %246 = vset.pattern.permute.xlu0 0
  %247 = vperm.xlu0 %246, %v233
  %v248 = vpop.permute.xlu0 %247
  %251 = vset.pattern.permute.xlu0 0
  %252 = vperm.xlu0 %251, %v234
  %v253 = vpop.permute.xlu0 %252
  %v255 = vadd.f32 %v227, %v238
  %v256 = vadd.f32 %v228, %v243
  %v257 = vadd.f32 %v229, %v248
  %v258 = vadd.f32 %v230, %v253
  %v259 = vmax.f32 %v255, 0.0
  %v260 = vmax.f32 %v256, 0.0
  %v261 = vmax.f32 %v257, 0.0
  %v262 = vmax.f32 %v258, 0.0
  %263 = vst.msk [vmem:[%s4] sm:$0xff] %vm114, %v259
  %264 = vst.msk [vmem:[%s4 + $0x8] sm:$0xff] %vm114, %v260
  %265 = vst.msk [vmem:[%s4 + $0x10] sm:$0xff] %vm114, %v261
  %266 = vst.msk [vmem:[%s4 + $0x18] sm:$0xff] %vm114, %v262
  // Predicated region
  $region18: #{resnet_generator_forward.16} parent=0 // pred_check
    _
  $region19: #{resnet_generator_forward.16} parent=0 // pred_check_branch
    %268 = sbr.rel (0) target = $region21
  $region20: #{resnet_generator_forward.16} parent=0 // pred_region
    _
  $region21: #{resnet_generator_forward.16} parent=0 // pred_fallthru
    _
  // Predicated region
  $region22: #{resnet_generator_forward.16} parent=0 // pred_check
    _
  $region23: #{resnet_generator_forward.16} parent=0 // pred_check_branch
    %270 = sbr.rel (0) target = $region25
  $region24: #{resnet_generator_forward.16} parent=0 // pred_region
    _
  $region25: #{resnet_generator_forward.16} parent=0 // pred_fallthru
    _

// kernel: resnet_generator_forward.17
$region0: #{resnet_generator_forward.17}
  #allocation0 [shape = 'u32[]', space=smem, size = 0x4, offset = 0x4, fixed_abs, tag = 'smem constant byte address 0x4 - core index']
  #allocation1 [shape = 'u32[72,128]{1,0:T(1,128)}', space=vmem, size = 0x9000, scoped, tag = 'internal scratch']
  %s0 = inlined_call_operand.vmem [shape: f32[64,288], index: 0, kind: input, shape index: {}]
  %s1 = inlined_call_operand.vmem [shape: f32[288,8], index: 1, kind: input, shape index: {}]
  %s2 = inlined_call_operand.vmem [shape: f32[64,1], index: 2, kind: input, shape index: {}]
  %s3 = inlined_call_operand.vmem [shape: f32[64,1], index: 3, kind: input, shape index: {}]
  %s4 = inlined_call_operand.vmem [shape: f32[64,8], index: 4, kind: output, shape index: {}]
  %s5 = sld [smem:[#allocation0]]
  $region26: #{resnet_generator_forward.17} parent=0
    _
  %s7 = ssub.s32 1, %s5
  %s8 = scalar_select 0, %s7, %s5
  // Predicated region
  $region2: #{resnet_generator_forward.17} parent=0 // pred_check
    _
  $region3: #{resnet_generator_forward.17} parent=0 // pred_check_branch
    %10 = sbr.rel (0) target = $region5
  $region4: #{resnet_generator_forward.17} parent=0 // pred_region
    _
  $region5: #{resnet_generator_forward.17} parent=0 // pred_fallthru
    _
  // Predicated region
  $region6: #{resnet_generator_forward.17} parent=0 // pred_check
    _
  $region7: #{resnet_generator_forward.17} parent=0 // pred_check_branch
    %12 = sbr.rel (0) target = $region9
  $region8: #{resnet_generator_forward.17} parent=0 // pred_region
    _
  $region9: #{resnet_generator_forward.17} parent=0 // pred_fallthru
    _
  // Predicated region
  $region10: #{resnet_generator_forward.17} parent=0 // pred_check
    _
  $region11: #{resnet_generator_forward.17} parent=0 // pred_check_branch
    %14 = sbr.rel (0) target = $region13
  $region12: #{resnet_generator_forward.17} parent=0 // pred_region
    _
  $region13: #{resnet_generator_forward.17} parent=0 // pred_fallthru
    _
  // Predicated region
  $region14: #{resnet_generator_forward.17} parent=0 // pred_check
    _
  $region15: #{resnet_generator_forward.17} parent=0 // pred_check_branch
    %16 = sbr.rel (0) target = $region17
  $region16: #{resnet_generator_forward.17} parent=0 // pred_region
    _
  $region17: #{resnet_generator_forward.17} parent=0 // pred_fallthru
    _
  %v17 = vld [vmem:[%s0] sm:$0xff]
  %v18 = vld [vmem:[%s0 + $0x8] sm:$0xff]
  %v19 = vld [vmem:[%s0 + $0x10] sm:$0xff]
  %v20 = vld [vmem:[%s0 + $0x18] sm:$0xff]
  %v21 = vld [vmem:[%s0 + $0x20] sm:$0xff]
  %v22 = vld [vmem:[%s0 + $0x28] sm:$0xff]
  %v23 = vld [vmem:[%s0 + $0x30] sm:$0xff]
  %v24 = vld [vmem:[%s0 + $0x38] sm:$0xff]
  %v25 = vld [vmem:[%s0 + $0x40] sm:$0xff]
  %v26 = vld [vmem:[%s0 + $0x48] sm:$0xff]
  %v27 = vld [vmem:[%s0 + $0x50] sm:$0xff]
  %v28 = vld [vmem:[%s0 + $0x58] sm:$0xff]
  %v29 = vld [vmem:[%s0 + $0x60] sm:$0xff]
  %v30 = vld [vmem:[%s0 + $0x68] sm:$0xff]
  %v31 = vld [vmem:[%s0 + $0x70] sm:$0xff]
  %v32 = vld [vmem:[%s0 + $0x78] sm:$0xff]
  %v33 = vld [vmem:[%s0 + $0x80] sm:$0xff]
  %v34 = vld [vmem:[%s0 + $0x88] sm:$0xff]
  %v35 = vld [vmem:[%s0 + $0x90] sm:$0xff]
  %v36 = vld [vmem:[%s0 + $0x98] sm:$0xff]
  %v37 = vld [vmem:[%s0 + $0xa0] sm:$0xff]
  %v38 = vld [vmem:[%s0 + $0xa8] sm:$0xff]
  %v39 = vld [vmem:[%s0 + $0xb0] sm:$0xff]
  %v40 = vld [vmem:[%s0 + $0xb8] sm:$0xff]
  %v41 = vld [vmem:[%s1] sm:$0xff]
  %v42 = vld [vmem:[%s1 + $0x8] sm:$0xff]
  %v43 = vld [vmem:[%s1 + $0x10] sm:$0xff]
  %v44 = vld [vmem:[%s1 + $0x18] sm:$0xff]
  %v45 = vld [vmem:[%s1 + $0x20] sm:$0xff]
  %v46 = vld [vmem:[%s1 + $0x28] sm:$0xff]
  %v47 = vld [vmem:[%s1 + $0x30] sm:$0xff]
  %v48 = vld [vmem:[%s1 + $0x38] sm:$0xff]
  %v49 = vld [vmem:[%s1 + $0x40] sm:$0xff]
  %v50 = vld [vmem:[%s1 + $0x48] sm:$0xff]
  %v51 = vld [vmem:[%s1 + $0x50] sm:$0xff]
  %v52 = vld [vmem:[%s1 + $0x58] sm:$0xff]
  %v53 = vld [vmem:[%s1 + $0x60] sm:$0xff]
  %v54 = vld [vmem:[%s1 + $0x68] sm:$0xff]
  %v55 = vld [vmem:[%s1 + $0x70] sm:$0xff]
  %v56 = vld [vmem:[%s1 + $0x78] sm:$0xff]
  %v57 = vld [vmem:[%s1 + $0x80] sm:$0xff]
  %v58 = vld [vmem:[%s1 + $0x88] sm:$0xff]
  %v59 = vld [vmem:[%s1 + $0x90] sm:$0xff]
  %v60 = vld [vmem:[%s1 + $0x98] sm:$0xff]
  %v61 = vld [vmem:[%s1 + $0xa0] sm:$0xff]
  %v62 = vld [vmem:[%s1 + $0xa8] sm:$0xff]
  %v63 = vld [vmem:[%s1 + $0xb0] sm:$0xff]
  %v64 = vld [vmem:[%s1 + $0xb8] sm:$0xff]
  %v65 = vld [vmem:[%s1 + $0xc0] sm:$0xff]
  %v66 = vld [vmem:[%s1 + $0xc8] sm:$0xff]
  %v67 = vld [vmem:[%s1 + $0xd0] sm:$0xff]
  %v68 = vld [vmem:[%s1 + $0xd8] sm:$0xff]
  %v69 = vld [vmem:[%s1 + $0xe0] sm:$0xff]
  %v70 = vld [vmem:[%s1 + $0xe8] sm:$0xff]
  %v71 = vld [vmem:[%s1 + $0xf0] sm:$0xff]
  %v72 = vld [vmem:[%s1 + $0xf8] sm:$0xff]
  %v73 = vld [vmem:[%s1 + $0x100] sm:$0xff]
  %v74 = vld [vmem:[%s1 + $0x108] sm:$0xff]
  %v75 = vld [vmem:[%s1 + $0x110] sm:$0xff]
  %v76 = vld [vmem:[%s1 + $0x118] sm:$0xff]
  %vm77 = vcmask 261120
  %v79 = vsel %vm77, %v19, 0
  %v82 = vsel %vm77, %v22, 0
  %v85 = vsel %vm77, %v25, 0
  %v88 = vsel %vm77, %v28, 0
  %v91 = vsel %vm77, %v31, 0
  %v94 = vsel %vm77, %v34, 0
  %v97 = vsel %vm77, %v37, 0
  %v100 = vsel %vm77, %v40, 0
  %102 = vmatpush.msra.mxu0 %v56
  %103 = vmatpush.msra.mxu0 %v55
  %104 = vmatpush.msra.mxu0 %v54
  %105 = vmatpush.msra.mxu0 %v53
  %106 = vmatpush.msra.mxu0 %v52
  %107 = vmatpush.msra.mxu0 %v51
  %108 = vmatpush.msra.mxu0 %v50
  %109 = vmatpush.msra.mxu0 %v49
  %110 = vmatpush.msra.mxu0 %v48
  %111 = vmatpush.msra.mxu0 %v47
  %112 = vmatpush.msra.mxu0 %v46
  %113 = vmatpush.msra.mxu0 %v45
  %114 = vmatpush.msra.mxu0 %v44
  %115 = vmatpush.msra.mxu0 %v43
  %116 = vmatpush.msra.mxu0 %v42
  %117 = vmatpush.msra.mxu0 %v41
  %118 = vmatmul.f32.gmra.mxu0 %v17
  %v119 = vpop.f32.mrf.mxu0
  %v120 = vadd.f32 0.0, %v119
  %121 = vmatmul.f32.gmra.mxu0 %v20
  %v122 = vpop.f32.mrf.mxu0
  %v123 = vadd.f32 0.0, %v122
  %124 = vmatmul.f32.gmra.mxu0 %v23
  %v125 = vpop.f32.mrf.mxu0
  %v126 = vadd.f32 0.0, %v125
  %127 = vmatmul.f32.gmra.mxu0 %v26
  %v128 = vpop.f32.mrf.mxu0
  %v129 = vadd.f32 0.0, %v128
  %130 = vmatmul.f32.gmra.mxu0 %v29
  %v131 = vpop.f32.mrf.mxu0
  %v132 = vadd.f32 0.0, %v131
  %133 = vmatmul.f32.gmra.mxu0 %v32
  %v134 = vpop.f32.mrf.mxu0
  %v135 = vadd.f32 0.0, %v134
  %136 = vmatmul.f32.gmra.mxu0 %v35
  %v137 = vpop.f32.mrf.mxu0
  %v138 = vadd.f32 0.0, %v137
  %139 = vmatmul.f32.gmra.mxu0 %v38
  %v140 = vpop.f32.mrf.mxu0
  %v141 = vadd.f32 0.0, %v140
  %142 = vdwg.mxu0
  %143 = vmatpush.msra.mxu0 %v72
  %144 = vmatpush.msra.mxu0 %v71
  %145 = vmatpush.msra.mxu0 %v70
  %146 = vmatpush.msra.mxu0 %v69
  %147 = vmatpush.msra.mxu0 %v68
  %148 = vmatpush.msra.mxu0 %v67
  %149 = vmatpush.msra.mxu0 %v66
  %150 = vmatpush.msra.mxu0 %v65
  %151 = vmatpush.msra.mxu0 %v64
  %152 = vmatpush.msra.mxu0 %v63
  %153 = vmatpush.msra.mxu0 %v62
  %154 = vmatpush.msra.mxu0 %v61
  %155 = vmatpush.msra.mxu0 %v60
  %156 = vmatpush.msra.mxu0 %v59
  %157 = vmatpush.msra.mxu0 %v58
  %158 = vmatpush.msra.mxu0 %v57
  %159 = vmatmul.f32.gmra.mxu0 %v18
  %v160 = vpop.f32.mrf.mxu0
  %v161 = vadd.f32 %v120, %v160
  %162 = vmatmul.f32.gmra.mxu0 %v21
  %v163 = vpop.f32.mrf.mxu0
  %v164 = vadd.f32 %v123, %v163
  %165 = vmatmul.f32.gmra.mxu0 %v24
  %v166 = vpop.f32.mrf.mxu0
  %v167 = vadd.f32 %v126, %v166
  %168 = vmatmul.f32.gmra.mxu0 %v27
  %v169 = vpop.f32.mrf.mxu0
  %v170 = vadd.f32 %v129, %v169
  %171 = vmatmul.f32.gmra.mxu0 %v30
  %v172 = vpop.f32.mrf.mxu0
  %v173 = vadd.f32 %v132, %v172
  %174 = vmatmul.f32.gmra.mxu0 %v33
  %v175 = vpop.f32.mrf.mxu0
  %v176 = vadd.f32 %v135, %v175
  %177 = vmatmul.f32.gmra.mxu0 %v36
  %v178 = vpop.f32.mrf.mxu0
  %v179 = vadd.f32 %v138, %v178
  %180 = vmatmul.f32.gmra.mxu0 %v39
  %v181 = vpop.f32.mrf.mxu0
  %v182 = vadd.f32 %v141, %v181
  %183 = vdwg.mxu0
  %184 = vmatpush.msra.mxu0 0.0
  %185 = vmatpush.msra.mxu0 0.0
  %186 = vmatpush.msra.mxu0 0.0
  %187 = vmatpush.msra.mxu0 0.0
  %188 = vmatpush.msra.mxu0 0.0
  %189 = vmatpush.msra.mxu0 0.0
  %190 = vmatpush.msra.mxu0 0.0
  %191 = vmatpush.msra.mxu0 0.0
  %192 = vmatpush.msra.mxu0 0.0
  %193 = vmatpush.msra.mxu0 0.0
  %194 = vmatpush.msra.mxu0 0.0
  %195 = vmatpush.msra.mxu0 0.0
  %196 = vmatpush.msra.mxu0 %v76
  %197 = vmatpush.msra.mxu0 %v75
  %198 = vmatpush.msra.mxu0 %v74
  %199 = vmatpush.msra.mxu0 %v73
  %200 = vmatmul.f32.gmra.mxu0 %v79
  %v201 = vpop.f32.mrf.mxu0
  %v202 = vadd.f32 %v161, %v201
  %203 = vmatmul.f32.gmra.mxu0 %v82
  %v204 = vpop.f32.mrf.mxu0
  %v205 = vadd.f32 %v164, %v204
  %206 = vmatmul.f32.gmra.mxu0 %v85
  %v207 = vpop.f32.mrf.mxu0
  %v208 = vadd.f32 %v167, %v207
  %209 = vmatmul.f32.gmra.mxu0 %v88
  %v210 = vpop.f32.mrf.mxu0
  %v211 = vadd.f32 %v170, %v210
  %212 = vmatmul.f32.gmra.mxu0 %v91
  %v213 = vpop.f32.mrf.mxu0
  %v214 = vadd.f32 %v173, %v213
  %215 = vmatmul.f32.gmra.mxu0 %v94
  %v216 = vpop.f32.mrf.mxu0
  %v217 = vadd.f32 %v176, %v216
  %218 = vmatmul.f32.gmra.mxu0 %v97
  %v219 = vpop.f32.mrf.mxu0
  %v220 = vadd.f32 %v179, %v219
  %221 = vmatmul.f32.gmra.mxu0 %v100
  %v222 = vpop.f32.mrf.mxu0
  %v223 = vadd.f32 %v182, %v222
  %224 = vdwg.mxu0
  %vm225 = vcmask 64512
  %v226 = vsel %vm225, %v202, 0.0
  %227 = vadd.xlane.f32.xlu0 %v226
  %v228 = vpop.xlane.xlu0 %227
  %v229 = vsel %vm225, %v205, 0.0
  %230 = vadd.xlane.f32.xlu0 %v229
  %v231 = vpop.xlane.xlu0 %230
  %v232 = vsel %vm225, %v208, 0.0
  %233 = vadd.xlane.f32.xlu0 %v232
  %v234 = vpop.xlane.xlu0 %233
  %v235 = vsel %vm225, %v211, 0.0
  %236 = vadd.xlane.f32.xlu0 %v235
  %v237 = vpop.xlane.xlu0 %236
  %v238 = vsel %vm225, %v214, 0.0
  %239 = vadd.xlane.f32.xlu0 %v238
  %v240 = vpop.xlane.xlu0 %239
  %v241 = vsel %vm225, %v217, 0.0
  %242 = vadd.xlane.f32.xlu0 %v241
  %v243 = vpop.xlane.xlu0 %242
  %v244 = vsel %vm225, %v220, 0.0
  %245 = vadd.xlane.f32.xlu0 %v244
  %v246 = vpop.xlane.xlu0 %245
  %v247 = vsel %vm225, %v223, 0.0
  %248 = vadd.xlane.f32.xlu0 %v247
  %v249 = vpop.xlane.xlu0 %248
  %v250 = vmul.f32 %v228, 0.125
  %v251 = vmul.f32 %v231, 0.125
  %v252 = vmul.f32 %v234, 0.125
  %v253 = vmul.f32 %v237, 0.125
  %v254 = vmul.f32 %v240, 0.125
  %v255 = vmul.f32 %v243, 0.125
  %v256 = vmul.f32 %v246, 0.125
  %v257 = vmul.f32 %v249, 0.125
  %v258 = vsub.f32 %v202, %v250
  %v259 = vsub.f32 %v205, %v251
  %v260 = vsub.f32 %v208, %v252
  %v261 = vsub.f32 %v211, %v253
  %v262 = vsub.f32 %v214, %v254
  %v263 = vsub.f32 %v217, %v255
  %v264 = vsub.f32 %v220, %v256
  %v265 = vsub.f32 %v223, %v257
  %v266 = vmul.f32 %v258, %v258
  %v267 = vmul.f32 %v259, %v259
  %v268 = vmul.f32 %v260, %v260
  %v269 = vmul.f32 %v261, %v261
  %v270 = vmul.f32 %v262, %v262
  %v271 = vmul.f32 %v263, %v263
  %v272 = vmul.f32 %v264, %v264
  %v273 = vmul.f32 %v265, %v265
  %v274 = vsel %vm225, %v266, 0.0
  %275 = vadd.xlane.f32.xlu0 %v274
  %v276 = vpop.xlane.xlu0 %275
  %v277 = vsel %vm225, %v267, 0.0
  %278 = vadd.xlane.f32.xlu0 %v277
  %v279 = vpop.xlane.xlu0 %278
  %v280 = vsel %vm225, %v268, 0.0
  %281 = vadd.xlane.f32.xlu0 %v280
  %v282 = vpop.xlane.xlu0 %281
  %v283 = vsel %vm225, %v269, 0.0
  %284 = vadd.xlane.f32.xlu0 %v283
  %v285 = vpop.xlane.xlu0 %284
  %v286 = vsel %vm225, %v270, 0.0
  %287 = vadd.xlane.f32.xlu0 %v286
  %v288 = vpop.xlane.xlu0 %287
  %v289 = vsel %vm225, %v271, 0.0
  %290 = vadd.xlane.f32.xlu0 %v289
  %v291 = vpop.xlane.xlu0 %290
  %v292 = vsel %vm225, %v272, 0.0
  %293 = vadd.xlane.f32.xlu0 %v292
  %v294 = vpop.xlane.xlu0 %293
  %v295 = vsel %vm225, %v273, 0.0
  %296 = vadd.xlane.f32.xlu0 %v295
  %v297 = vpop.xlane.xlu0 %296
  %v298 = vmul.f32 %v276, 0.125
  %v299 = vmul.f32 %v279, 0.125
  %v300 = vmul.f32 %v282, 0.125
  %v301 = vmul.f32 %v285, 0.125
  %v302 = vmul.f32 %v288, 0.125
  %v303 = vmul.f32 %v291, 0.125
  %v304 = vmul.f32 %v294, 0.125
  %v305 = vmul.f32 %v297, 0.125
  %v306 = vld [vmem:[%s2] sm:$0xff]
  %v307 = vld [vmem:[%s2 + $0x8] sm:$0xff]
  %v308 = vld [vmem:[%s2 + $0x10] sm:$0xff]
  %v309 = vld [vmem:[%s2 + $0x18] sm:$0xff]
  %v310 = vld [vmem:[%s2 + $0x20] sm:$0xff]
  %v311 = vld [vmem:[%s2 + $0x28] sm:$0xff]
  %v312 = vld [vmem:[%s2 + $0x30] sm:$0xff]
  %v313 = vld [vmem:[%s2 + $0x38] sm:$0xff]
  %v314 = vadd.f32 %v298, 1e-05
  %v315 = vadd.f32 %v299, 1e-05
  %v316 = vadd.f32 %v300, 1e-05
  %v317 = vadd.f32 %v301, 1e-05
  %v318 = vadd.f32 %v302, 1e-05
  %v319 = vadd.f32 %v303, 1e-05
  %v320 = vadd.f32 %v304, 1e-05
  %v321 = vadd.f32 %v305, 1e-05
  %v322 = vrsqrt.pop %v314
  %v323 = vmul.f32 %v322, %v314
  %v324 = vmul.f32 %v323, %v322
  %v325 = vmul.f32 0.5, %v324
  %v326 = vsub.f32 1.5, %v325
  %v327 = vmul.f32 %v322, %v326
  %vm328 = vweird.f32 %v314
  %vm329 = vweird.f32 %v322
  %vm330 = vmor %vm328, %vm329
  %v331 = vsel %vm330, %v322, %v327
  %v332 = vrsqrt.pop %v315
  %v333 = vmul.f32 %v332, %v315
  %v334 = vmul.f32 %v333, %v332
  %v335 = vmul.f32 0.5, %v334
  %v336 = vsub.f32 1.5, %v335
  %v337 = vmul.f32 %v332, %v336
  %vm338 = vweird.f32 %v315
  %vm339 = vweird.f32 %v332
  %vm340 = vmor %vm338, %vm339
  %v341 = vsel %vm340, %v332, %v337
  %v342 = vrsqrt.pop %v316
  %v343 = vmul.f32 %v342, %v316
  %v344 = vmul.f32 %v343, %v342
  %v345 = vmul.f32 0.5, %v344
  %v346 = vsub.f32 1.5, %v345
  %v347 = vmul.f32 %v342, %v346
  %vm348 = vweird.f32 %v316
  %vm349 = vweird.f32 %v342
  %vm350 = vmor %vm348, %vm349
  %v351 = vsel %vm350, %v342, %v347
  %v352 = vrsqrt.pop %v317
  %v353 = vmul.f32 %v352, %v317
  %v354 = vmul.f32 %v353, %v352
  %v355 = vmul.f32 0.5, %v354
  %v356 = vsub.f32 1.5, %v355
  %v357 = vmul.f32 %v352, %v356
  %vm358 = vweird.f32 %v317
  %vm359 = vweird.f32 %v352
  %vm360 = vmor %vm358, %vm359
  %v361 = vsel %vm360, %v352, %v357
  %v362 = vrsqrt.pop %v318
  %v363 = vmul.f32 %v362, %v318
  %v364 = vmul.f32 %v363, %v362
  %v365 = vmul.f32 0.5, %v364
  %v366 = vsub.f32 1.5, %v365
  %v367 = vmul.f32 %v362, %v366
  %vm368 = vweird.f32 %v318
  %vm369 = vweird.f32 %v362
  %vm370 = vmor %vm368, %vm369
  %v371 = vsel %vm370, %v362, %v367
  %v372 = vrsqrt.pop %v319
  %v373 = vmul.f32 %v372, %v319
  %v374 = vmul.f32 %v373, %v372
  %v375 = vmul.f32 0.5, %v374
  %v376 = vsub.f32 1.5, %v375
  %v377 = vmul.f32 %v372, %v376
  %vm378 = vweird.f32 %v319
  %vm379 = vweird.f32 %v372
  %vm380 = vmor %vm378, %vm379
  %v381 = vsel %vm380, %v372, %v377
  %v382 = vrsqrt.pop %v320
  %v383 = vmul.f32 %v382, %v320
  %v384 = vmul.f32 %v383, %v382
  %v385 = vmul.f32 0.5, %v384
  %v386 = vsub.f32 1.5, %v385
  %v387 = vmul.f32 %v382, %v386
  %vm388 = vweird.f32 %v320
  %vm389 = vweird.f32 %v382
  %vm390 = vmor %vm388, %vm389
  %v391 = vsel %vm390, %v382, %v387
  %v392 = vrsqrt.pop %v321
  %v393 = vmul.f32 %v392, %v321
  %v394 = vmul.f32 %v393, %v392
  %v395 = vmul.f32 0.5, %v394
  %v396 = vsub.f32 1.5, %v395
  %v397 = vmul.f32 %v392, %v396
  %vm398 = vweird.f32 %v321
  %vm399 = vweird.f32 %v392
  %vm400 = vmor %vm398, %vm399
  %v401 = vsel %vm400, %v392, %v397
  %v402 = vmul.f32 %v306, %v331
  %v403 = vmul.f32 %v307, %v341
  %v404 = vmul.f32 %v308, %v351
  %v405 = vmul.f32 %v309, %v361
  %v406 = vmul.f32 %v310, %v371
  %v407 = vmul.f32 %v311, %v381
  %v408 = vmul.f32 %v312, %v391
  %v409 = vmul.f32 %v313, %v401
  %411 = vset.pattern.permute.xlu0 0
  %412 = vperm.xlu0 %411, %v402
  %v413 = vpop.permute.xlu0 %412
  %416 = vset.pattern.permute.xlu0 0
  %417 = vperm.xlu0 %416, %v403
  %v418 = vpop.permute.xlu0 %417
  %421 = vset.pattern.permute.xlu0 0
  %422 = vperm.xlu0 %421, %v404
  %v423 = vpop.permute.xlu0 %422
  %426 = vset.pattern.permute.xlu0 0
  %427 = vperm.xlu0 %426, %v405
  %v428 = vpop.permute.xlu0 %427
  %431 = vset.pattern.permute.xlu0 0
  %432 = vperm.xlu0 %431, %v406
  %v433 = vpop.permute.xlu0 %432
  %436 = vset.pattern.permute.xlu0 0
  %437 = vperm.xlu0 %436, %v407
  %v438 = vpop.permute.xlu0 %437
  %441 = vset.pattern.permute.xlu0 0
  %442 = vperm.xlu0 %441, %v408
  %v443 = vpop.permute.xlu0 %442
  %446 = vset.pattern.permute.xlu0 0
  %447 = vperm.xlu0 %446, %v409
  %v448 = vpop.permute.xlu0 %447
  %v450 = vmul.f32 %v258, %v413
  %v451 = vmul.f32 %v259, %v418
  %v452 = vmul.f32 %v260, %v423
  %v453 = vmul.f32 %v261, %v428
  %v454 = vmul.f32 %v262, %v433
  %v455 = vmul.f32 %v263, %v438
  %v456 = vmul.f32 %v264, %v443
  %v457 = vmul.f32 %v265, %v448
  %v458 = vld [vmem:[%s3] sm:$0xff]
  %v459 = vld [vmem:[%s3 + $0x8] sm:$0xff]
  %v460 = vld [vmem:[%s3 + $0x10] sm:$0xff]
  %v461 = vld [vmem:[%s3 + $0x18] sm:$0xff]
  %v462 = vld [vmem:[%s3 + $0x20] sm:$0xff]
  %v463 = vld [vmem:[%s3 + $0x28] sm:$0xff]
  %v464 = vld [vmem:[%s3 + $0x30] sm:$0xff]
  %v465 = vld [vmem:[%s3 + $0x38] sm:$0xff]
  %467 = vset.pattern.permute.xlu0 0
  %468 = vperm.xlu0 %467, %v458
  %v469 = vpop.permute.xlu0 %468
  %472 = vset.pattern.permute.xlu0 0
  %473 = vperm.xlu0 %472, %v459
  %v474 = vpop.permute.xlu0 %473
  %477 = vset.pattern.permute.xlu0 0
  %478 = vperm.xlu0 %477, %v460
  %v479 = vpop.permute.xlu0 %478
  %482 = vset.pattern.permute.xlu0 0
  %483 = vperm.xlu0 %482, %v461
  %v484 = vpop.permute.xlu0 %483
  %487 = vset.pattern.permute.xlu0 0
  %488 = vperm.xlu0 %487, %v462
  %v489 = vpop.permute.xlu0 %488
  %492 = vset.pattern.permute.xlu0 0
  %493 = vperm.xlu0 %492, %v463
  %v494 = vpop.permute.xlu0 %493
  %497 = vset.pattern.permute.xlu0 0
  %498 = vperm.xlu0 %497, %v464
  %v499 = vpop.permute.xlu0 %498
  %502 = vset.pattern.permute.xlu0 0
  %503 = vperm.xlu0 %502, %v465
  %v504 = vpop.permute.xlu0 %503
  %v506 = vadd.f32 %v450, %v469
  %v507 = vadd.f32 %v451, %v474
  %v508 = vadd.f32 %v452, %v479
  %v509 = vadd.f32 %v453, %v484
  %v510 = vadd.f32 %v454, %v489
  %v511 = vadd.f32 %v455, %v494
  %v512 = vadd.f32 %v456, %v499
  %v513 = vadd.f32 %v457, %v504
  %v514 = vmax.f32 %v506, 0.0
  %v515 = vmax.f32 %v507, 0.0
  %v516 = vmax.f32 %v508, 0.0
  %v517 = vmax.f32 %v509, 0.0
  %v518 = vmax.f32 %v510, 0.0
  %v519 = vmax.f32 %v511, 0.0
  %v520 = vmax.f32 %v512, 0.0
  %v521 = vmax.f32 %v513, 0.0
  %522 = vst.msk [vmem:[%s4] sm:$0xff] %vm225, %v514
  %523 = vst.msk [vmem:[%s4 + $0x8] sm:$0xff] %vm225, %v515
  %524 = vst.msk [vmem:[%s4 + $0x10] sm:$0xff] %vm225, %v516
  %525 = vst.msk [vmem:[%s4 + $0x18] sm:$0xff] %vm225, %v517
  %526 = vst.msk [vmem:[%s4 + $0x20] sm:$0xff] %vm225, %v518
  %527 = vst.msk [vmem:[%s4 + $0x28] sm:$0xff] %vm225, %v519
  %528 = vst.msk [vmem:[%s4 + $0x30] sm:$0xff] %vm225, %v520
  %529 = vst.msk [vmem:[%s4 + $0x38] sm:$0xff] %vm225, %v521
  // Predicated region
  $region18: #{resnet_generator_forward.17} parent=0 // pred_check
    _
  $region19: #{resnet_generator_forward.17} parent=0 // pred_check_branch
    %531 = sbr.rel (0) target = $region21
  $region20: #{resnet_generator_forward.17} parent=0 // pred_region
    _
  $region21: #{resnet_generator_forward.17} parent=0 // pred_fallthru
    _
  // Predicated region
  $region22: #{resnet_generator_forward.17} parent=0 // pred_check
    _
  $region23: #{resnet_generator_forward.17} parent=0 // pred_check_branch
    %533 = sbr.rel (0) target = $region25
  $region24: #{resnet_generator_forward.17} parent=0 // pred_region
    _
  $region25: #{resnet_generator_forward.17} parent=0 // pred_fallthru
    _

// kernel: resnet_generator_forward.19
$region0: #{resnet_generator_forward.19}
  #allocation0 [shape = 'u32[]', space=smem, size = 0x4, offset = 0x4, fixed_abs, tag = 'smem constant byte address 0x4 - core index']
  #allocation1 [shape = 'u32[72,128]{1,0:T(1,128)}', space=vmem, size = 0x9000, scoped, tag = 'internal scratch']
  %s0 = inlined_call_operand.vmem [shape: f32[64,576], index: 0, kind: input, shape index: {}]
  %s1 = inlined_call_operand.vmem [shape: f32[576,8], index: 1, kind: input, shape index: {}]
  %s2 = inlined_call_operand.vmem [shape: f32[64,1], index: 2, kind: input, shape index: {}]
  %s3 = inlined_call_operand.vmem [shape: f32[64,1], index: 3, kind: input, shape index: {}]
  %s4 = inlined_call_operand.vmem [shape: f32[64,8], index: 4, kind: input, shape index: {}]
  %s5 = inlined_call_operand.vmem [shape: f32[64,8], index: 5, kind: output, shape index: {}]
  %s6 = sld [smem:[#allocation0]]
  $region30: #{resnet_generator_forward.19} parent=0
    _
  %s8 = ssub.s32 1, %s6
  %s9 = scalar_select 0, %s8, %s6
  // Predicated region
  $region2: #{resnet_generator_forward.19} parent=0 // pred_check
    _
  $region3: #{resnet_generator_forward.19} parent=0 // pred_check_branch
    %11 = sbr.rel (0) target = $region5
  $region4: #{resnet_generator_forward.19} parent=0 // pred_region
    _
  $region5: #{resnet_generator_forward.19} parent=0 // pred_fallthru
    _
  // Predicated region
  $region6: #{resnet_generator_forward.19} parent=0 // pred_check
    _
  $region7: #{resnet_generator_forward.19} parent=0 // pred_check_branch
    %13 = sbr.rel (0) target = $region9
  $region8: #{resnet_generator_forward.19} parent=0 // pred_region
    _
  $region9: #{resnet_generator_forward.19} parent=0 // pred_fallthru
    _
  // Predicated region
  $region10: #{resnet_generator_forward.19} parent=0 // pred_check
    _
  $region11: #{resnet_generator_forward.19} parent=0 // pred_check_branch
    %15 = sbr.rel (0) target = $region13
  $region12: #{resnet_generator_forward.19} parent=0 // pred_region
    _
  $region13: #{resnet_generator_forward.19} parent=0 // pred_fallthru
    _
  // Predicated region
  $region14: #{resnet_generator_forward.19} parent=0 // pred_check
    _
  $region15: #{resnet_generator_forward.19} parent=0 // pred_check_branch
    %17 = sbr.rel (0) target = $region17
  $region16: #{resnet_generator_forward.19} parent=0 // pred_region
    _
  $region17: #{resnet_generator_forward.19} parent=0 // pred_fallthru
    _
  // Predicated region
  $region18: #{resnet_generator_forward.19} parent=0 // pred_check
    _
  $region19: #{resnet_generator_forward.19} parent=0 // pred_check_branch
    %19 = sbr.rel (0) target = $region21
  $region20: #{resnet_generator_forward.19} parent=0 // pred_region
    _
  $region21: #{resnet_generator_forward.19} parent=0 // pred_fallthru
    _
  %v20 = vld [vmem:[%s0] sm:$0xff]
  %v21 = vld [vmem:[%s0 + $0x8] sm:$0xff]
  %v22 = vld [vmem:[%s0 + $0x10] sm:$0xff]
  %v23 = vld [vmem:[%s0 + $0x18] sm:$0xff]
  %v24 = vld [vmem:[%s0 + $0x20] sm:$0xff]
  %v25 = vld [vmem:[%s0 + $0x28] sm:$0xff]
  %v26 = vld [vmem:[%s0 + $0x30] sm:$0xff]
  %v27 = vld [vmem:[%s0 + $0x38] sm:$0xff]
  %v28 = vld [vmem:[%s0 + $0x40] sm:$0xff]
  %v29 = vld [vmem:[%s0 + $0x48] sm:$0xff]
  %v30 = vld [vmem:[%s0 + $0x50] sm:$0xff]
  %v31 = vld [vmem:[%s0 + $0x58] sm:$0xff]
  %v32 = vld [vmem:[%s0 + $0x60] sm:$0xff]
  %v33 = vld [vmem:[%s0 + $0x68] sm:$0xff]
  %v34 = vld [vmem:[%s0 + $0x70] sm:$0xff]
  %v35 = vld [vmem:[%s0 + $0x78] sm:$0xff]
  %v36 = vld [vmem:[%s0 + $0x80] sm:$0xff]
  %v37 = vld [vmem:[%s0 + $0x88] sm:$0xff]
  %v38 = vld [vmem:[%s0 + $0x90] sm:$0xff]
  %v39 = vld [vmem:[%s0 + $0x98] sm:$0xff]
  %v40 = vld [vmem:[%s0 + $0xa0] sm:$0xff]
  %v41 = vld [vmem:[%s0 + $0xa8] sm:$0xff]
  %v42 = vld [vmem:[%s0 + $0xb0] sm:$0xff]
  %v43 = vld [vmem:[%s0 + $0xb8] sm:$0xff]
  %v44 = vld [vmem:[%s0 + $0xc0] sm:$0xff]
  %v45 = vld [vmem:[%s0 + $0xc8] sm:$0xff]
  %v46 = vld [vmem:[%s0 + $0xd0] sm:$0xff]
  %v47 = vld [vmem:[%s0 + $0xd8] sm:$0xff]
  %v48 = vld [vmem:[%s0 + $0xe0] sm:$0xff]
  %v49 = vld [vmem:[%s0 + $0xe8] sm:$0xff]
  %v50 = vld [vmem:[%s0 + $0xf0] sm:$0xff]
  %v51 = vld [vmem:[%s0 + $0xf8] sm:$0xff]
  %v52 = vld [vmem:[%s0 + $0x100] sm:$0xff]
  %v53 = vld [vmem:[%s0 + $0x108] sm:$0xff]
  %v54 = vld [vmem:[%s0 + $0x110] sm:$0xff]
  %v55 = vld [vmem:[%s0 + $0x118] sm:$0xff]
  %v56 = vld [vmem:[%s0 + $0x120] sm:$0xff]
  %v57 = vld [vmem:[%s0 + $0x128] sm:$0xff]
  %v58 = vld [vmem:[%s0 + $0x130] sm:$0xff]
  %v59 = vld [vmem:[%s0 + $0x138] sm:$0xff]
  %v60 = vld [vmem:[%s1] sm:$0xff]
  %v61 = vld [vmem:[%s1 + $0x8] sm:$0xff]
  %v62 = vld [vmem:[%s1 + $0x10] sm:$0xff]
  %v63 = vld [vmem:[%s1 + $0x18] sm:$0xff]
  %v64 = vld [vmem:[%s1 + $0x20] sm:$0xff]
  %v65 = vld [vmem:[%s1 + $0x28] sm:$0xff]
  %v66 = vld [vmem:[%s1 + $0x30] sm:$0xff]
  %v67 = vld [vmem:[%s1 + $0x38] sm:$0xff]
  %v68 = vld [vmem:[%s1 + $0x40] sm:$0xff]
  %v69 = vld [vmem:[%s1 + $0x48] sm:$0xff]
  %v70 = vld [vmem:[%s1 + $0x50] sm:$0xff]
  %v71 = vld [vmem:[%s1 + $0x58] sm:$0xff]
  %v72 = vld [vmem:[%s1 + $0x60] sm:$0xff]
  %v73 = vld [vmem:[%s1 + $0x68] sm:$0xff]
  %v74 = vld [vmem:[%s1 + $0x70] sm:$0xff]
  %v75 = vld [vmem:[%s1 + $0x78] sm:$0xff]
  %v76 = vld [vmem:[%s1 + $0x80] sm:$0xff]
  %v77 = vld [vmem:[%s1 + $0x88] sm:$0xff]
  %v78 = vld [vmem:[%s1 + $0x90] sm:$0xff]
  %v79 = vld [vmem:[%s1 + $0x98] sm:$0xff]
  %v80 = vld [vmem:[%s1 + $0xa0] sm:$0xff]
  %v81 = vld [vmem:[%s1 + $0xa8] sm:$0xff]
  %v82 = vld [vmem:[%s1 + $0xb0] sm:$0xff]
  %v83 = vld [vmem:[%s1 + $0xb8] sm:$0xff]
  %v84 = vld [vmem:[%s1 + $0xc0] sm:$0xff]
  %v85 = vld [vmem:[%s1 + $0xc8] sm:$0xff]
  %v86 = vld [vmem:[%s1 + $0xd0] sm:$0xff]
  %v87 = vld [vmem:[%s1 + $0xd8] sm:$0xff]
  %v88 = vld [vmem:[%s1 + $0xe0] sm:$0xff]
  %v89 = vld [vmem:[%s1 + $0xe8] sm:$0xff]
  %v90 = vld [vmem:[%s1 + $0xf0] sm:$0xff]
  %v91 = vld [vmem:[%s1 + $0xf8] sm:$0xff]
  %v92 = vld [vmem:[%s1 + $0x100] sm:$0xff]
  %v93 = vld [vmem:[%s1 + $0x108] sm:$0xff]
  %v94 = vld [vmem:[%s1 + $0x110] sm:$0xff]
  %v95 = vld [vmem:[%s1 + $0x118] sm:$0xff]
  %v96 = vld [vmem:[%s1 + $0x120] sm:$0xff]
  %v97 = vld [vmem:[%s1 + $0x128] sm:$0xff]
  %v98 = vld [vmem:[%s1 + $0x130] sm:$0xff]
  %v99 = vld [vmem:[%s1 + $0x138] sm:$0xff]
  %v100 = vld [vmem:[%s1 + $0x140] sm:$0xff]
  %v101 = vld [vmem:[%s1 + $0x148] sm:$0xff]
  %v102 = vld [vmem:[%s1 + $0x150] sm:$0xff]
  %v103 = vld [vmem:[%s1 + $0x158] sm:$0xff]
  %v104 = vld [vmem:[%s1 + $0x160] sm:$0xff]
  %v105 = vld [vmem:[%s1 + $0x168] sm:$0xff]
  %v106 = vld [vmem:[%s1 + $0x170] sm:$0xff]
  %v107 = vld [vmem:[%s1 + $0x178] sm:$0xff]
  %v108 = vld [vmem:[%s1 + $0x180] sm:$0xff]
  %v109 = vld [vmem:[%s1 + $0x188] sm:$0xff]
  %v110 = vld [vmem:[%s1 + $0x190] sm:$0xff]
  %v111 = vld [vmem:[%s1 + $0x198] sm:$0xff]
  %v112 = vld [vmem:[%s1 + $0x1a0] sm:$0xff]
  %v113 = vld [vmem:[%s1 + $0x1a8] sm:$0xff]
  %v114 = vld [vmem:[%s1 + $0x1b0] sm:$0xff]
  %v115 = vld [vmem:[%s1 + $0x1b8] sm:$0xff]
  %v116 = vld [vmem:[%s1 + $0x1c0] sm:$0xff]
  %v117 = vld [vmem:[%s1 + $0x1c8] sm:$0xff]
  %v118 = vld [vmem:[%s1 + $0x1d0] sm:$0xff]
  %v119 = vld [vmem:[%s1 + $0x1d8] sm:$0xff]
  %v120 = vld [vmem:[%s1 + $0x1e0] sm:$0xff]
  %v121 = vld [vmem:[%s1 + $0x1e8] sm:$0xff]
  %v122 = vld [vmem:[%s1 + $0x1f0] sm:$0xff]
  %v123 = vld [vmem:[%s1 + $0x1f8] sm:$0xff]
  %v124 = vld [vmem:[%s1 + $0x200] sm:$0xff]
  %v125 = vld [vmem:[%s1 + $0x208] sm:$0xff]
  %v126 = vld [vmem:[%s1 + $0x210] sm:$0xff]
  %v127 = vld [vmem:[%s1 + $0x218] sm:$0xff]
  %v128 = vld [vmem:[%s1 + $0x220] sm:$0xff]
  %v129 = vld [vmem:[%s1 + $0x228] sm:$0xff]
  %v130 = vld [vmem:[%s1 + $0x230] sm:$0xff]
  %v131 = vld [vmem:[%s1 + $0x238] sm:$0xff]
  %vm132 = vcmask 523264
  %v134 = vsel %vm132, %v24, 0
  %v137 = vsel %vm132, %v29, 0
  %v140 = vsel %vm132, %v34, 0
  %v143 = vsel %vm132, %v39, 0
  %v146 = vsel %vm132, %v44, 0
  %v149 = vsel %vm132, %v49, 0
  %v152 = vsel %vm132, %v54, 0
  %v155 = vsel %vm132, %v59, 0
  %157 = vmatpush.msra.mxu0 %v75
  %158 = vmatpush.msra.mxu0 %v74
  %159 = vmatpush.msra.mxu0 %v73
  %160 = vmatpush.msra.mxu0 %v72
  %161 = vmatpush.msra.mxu0 %v71
  %162 = vmatpush.msra.mxu0 %v70
  %163 = vmatpush.msra.mxu0 %v69
  %164 = vmatpush.msra.mxu0 %v68
  %165 = vmatpush.msra.mxu0 %v67
  %166 = vmatpush.msra.mxu0 %v66
  %167 = vmatpush.msra.mxu0 %v65
  %168 = vmatpush.msra.mxu0 %v64
  %169 = vmatpush.msra.mxu0 %v63
  %170 = vmatpush.msra.mxu0 %v62
  %171 = vmatpush.msra.mxu0 %v61
  %172 = vmatpush.msra.mxu0 %v60
  %173 = vmatmul.f32.gmra.mxu0 %v20
  %v174 = vpop.f32.mrf.mxu0
  %v175 = vadd.f32 0.0, %v174
  %176 = vmatmul.f32.gmra.mxu0 %v25
  %v177 = vpop.f32.mrf.mxu0
  %v178 = vadd.f32 0.0, %v177
  %179 = vmatmul.f32.gmra.mxu0 %v30
  %v180 = vpop.f32.mrf.mxu0
  %v181 = vadd.f32 0.0, %v180
  %182 = vmatmul.f32.gmra.mxu0 %v35
  %v183 = vpop.f32.mrf.mxu0
  %v184 = vadd.f32 0.0, %v183
  %185 = vmatmul.f32.gmra.mxu0 %v40
  %v186 = vpop.f32.mrf.mxu0
  %v187 = vadd.f32 0.0, %v186
  %188 = vmatmul.f32.gmra.mxu0 %v45
  %v189 = vpop.f32.mrf.mxu0
  %v190 = vadd.f32 0.0, %v189
  %191 = vmatmul.f32.gmra.mxu0 %v50
  %v192 = vpop.f32.mrf.mxu0
  %v193 = vadd.f32 0.0, %v192
  %194 = vmatmul.f32.gmra.mxu0 %v55
  %v195 = vpop.f32.mrf.mxu0
  %v196 = vadd.f32 0.0, %v195
  %197 = vdwg.mxu0
  %198 = vmatpush.msra.mxu0 %v91
  %199 = vmatpush.msra.mxu0 %v90
  %200 = vmatpush.msra.mxu0 %v89
  %201 = vmatpush.msra.mxu0 %v88
  %202 = vmatpush.msra.mxu0 %v87
  %203 = vmatpush.msra.mxu0 %v86
  %204 = vmatpush.msra.mxu0 %v85
  %205 = vmatpush.msra.mxu0 %v84
  %206 = vmatpush.msra.mxu0 %v83
  %207 = vmatpush.msra.mxu0 %v82
  %208 = vmatpush.msra.mxu0 %v81
  %209 = vmatpush.msra.mxu0 %v80
  %210 = vmatpush.msra.mxu0 %v79
  %211 = vmatpush.msra.mxu0 %v78
  %212 = vmatpush.msra.mxu0 %v77
  %213 = vmatpush.msra.mxu0 %v76
  %214 = vmatmul.f32.gmra.mxu0 %v21
  %v215 = vpop.f32.mrf.mxu0
  %v216 = vadd.f32 %v175, %v215
  %217 = vmatmul.f32.gmra.mxu0 %v26
  %v218 = vpop.f32.mrf.mxu0
  %v219 = vadd.f32 %v178, %v218
  %220 = vmatmul.f32.gmra.mxu0 %v31
  %v221 = vpop.f32.mrf.mxu0
  %v222 = vadd.f32 %v181, %v221
  %223 = vmatmul.f32.gmra.mxu0 %v36
  %v224 = vpop.f32.mrf.mxu0
  %v225 = vadd.f32 %v184, %v224
  %226 = vmatmul.f32.gmra.mxu0 %v41
  %v227 = vpop.f32.mrf.mxu0
  %v228 = vadd.f32 %v187, %v227
  %229 = vmatmul.f32.gmra.mxu0 %v46
  %v230 = vpop.f32.mrf.mxu0
  %v231 = vadd.f32 %v190, %v230
  %232 = vmatmul.f32.gmra.mxu0 %v51
  %v233 = vpop.f32.mrf.mxu0
  %v234 = vadd.f32 %v193, %v233
  %235 = vmatmul.f32.gmra.mxu0 %v56
  %v236 = vpop.f32.mrf.mxu0
  %v237 = vadd.f32 %v196, %v236
  %238 = vdwg.mxu0
  %239 = vmatpush.msra.mxu0 %v107
  %240 = vmatpush.msra.mxu0 %v106
  %241 = vmatpush.msra.mxu0 %v105
  %242 = vmatpush.msra.mxu0 %v104
  %243 = vmatpush.msra.mxu0 %v103
  %244 = vmatpush.msra.mxu0 %v102
  %245 = vmatpush.msra.mxu0 %v101
  %246 = vmatpush.msra.mxu0 %v100
  %247 = vmatpush.msra.mxu0 %v99
  %248 = vmatpush.msra.mxu0 %v98
  %249 = vmatpush.msra.mxu0 %v97
  %250 = vmatpush.msra.mxu0 %v96
  %251 = vmatpush.msra.mxu0 %v95
  %252 = vmatpush.msra.mxu0 %v94
  %253 = vmatpush.msra.mxu0 %v93
  %254 = vmatpush.msra.mxu0 %v92
  %255 = vmatmul.f32.gmra.mxu0 %v22
  %v256 = vpop.f32.mrf.mxu0
  %v257 = vadd.f32 %v216, %v256
  %258 = vmatmul.f32.gmra.mxu0 %v27
  %v259 = vpop.f32.mrf.mxu0
  %v260 = vadd.f32 %v219, %v259
  %261 = vmatmul.f32.gmra.mxu0 %v32
  %v262 = vpop.f32.mrf.mxu0
  %v263 = vadd.f32 %v222, %v262
  %264 = vmatmul.f32.gmra.mxu0 %v37
  %v265 = vpop.f32.mrf.mxu0
  %v266 = vadd.f32 %v225, %v265
  %267 = vmatmul.f32.gmra.mxu0 %v42
  %v268 = vpop.f32.mrf.mxu0
  %v269 = vadd.f32 %v228, %v268
  %270 = vmatmul.f32.gmra.mxu0 %v47
  %v271 = vpop.f32.mrf.mxu0
  %v272 = vadd.f32 %v231, %v271
  %273 = vmatmul.f32.gmra.mxu0 %v52
  %v274 = vpop.f32.mrf.mxu0
  %v275 = vadd.f32 %v234, %v274
  %276 = vmatmul.f32.gmra.mxu0 %v57
  %v277 = vpop.f32.mrf.mxu0
  %v278 = vadd.f32 %v237, %v277
  %279 = vdwg.mxu0
  %280 = vmatpush.msra.mxu0 %v123
  %281 = vmatpush.msra.mxu0 %v122
  %282 = vmatpush.msra.mxu0 %v121
  %283 = vmatpush.msra.mxu0 %v120
  %284 = vmatpush.msra.mxu0 %v119
  %285 = vmatpush.msra.mxu0 %v118
  %286 = vmatpush.msra.mxu0 %v117
  %287 = vmatpush.msra.mxu0 %v116
  %288 = vmatpush.msra.mxu0 %v115
  %289 = vmatpush.msra.mxu0 %v114
  %290 = vmatpush.msra.mxu0 %v113
  %291 = vmatpush.msra.mxu0 %v112
  %292 = vmatpush.msra.mxu0 %v111
  %293 = vmatpush.msra.mxu0 %v110
  %294 = vmatpush.msra.mxu0 %v109
  %295 = vmatpush.msra.mxu0 %v108
  %296 = vmatmul.f32.gmra.mxu0 %v23
  %v297 = vpop.f32.mrf.mxu0
  %v298 = vadd.f32 %v257, %v297
  %299 = vmatmul.f32.gmra.mxu0 %v28
  %v300 = vpop.f32.mrf.mxu0
  %v301 = vadd.f32 %v260, %v300
  %302 = vmatmul.f32.gmra.mxu0 %v33
  %v303 = vpop.f32.mrf.mxu0
  %v304 = vadd.f32 %v263, %v303
  %305 = vmatmul.f32.gmra.mxu0 %v38
  %v306 = vpop.f32.mrf.mxu0
  %v307 = vadd.f32 %v266, %v306
  %308 = vmatmul.f32.gmra.mxu0 %v43
  %v309 = vpop.f32.mrf.mxu0
  %v310 = vadd.f32 %v269, %v309
  %311 = vmatmul.f32.gmra.mxu0 %v48
  %v312 = vpop.f32.mrf.mxu0
  %v313 = vadd.f32 %v272, %v312
  %314 = vmatmul.f32.gmra.mxu0 %v53
  %v315 = vpop.f32.mrf.mxu0
  %v316 = vadd.f32 %v275, %v315
  %317 = vmatmul.f32.gmra.mxu0 %v58
  %v318 = vpop.f32.mrf.mxu0
  %v319 = vadd.f32 %v278, %v318
  %320 = vdwg.mxu0
  %321 = vmatpush.msra.mxu0 0.0
  %322 = vmatpush.msra.mxu0 0.0
  %323 = vmatpush.msra.mxu0 0.0
  %324 = vmatpush.msra.mxu0 0.0
  %325 = vmatpush.msra.mxu0 0.0
  %326 = vmatpush.msra.mxu0 0.0
  %327 = vmatpush.msra.mxu0 0.0
  %328 = vmatpush.msra.mxu0 0.0
  %329 = vmatpush.msra.mxu0 %v131
  %330 = vmatpush.msra.mxu0 %v130
  %331 = vmatpush.msra.mxu0 %v129
  %332 = vmatpush.msra.mxu0 %v128
  %333 = vmatpush.msra.mxu0 %v127
  %334 = vmatpush.msra.mxu0 %v126
  %335 = vmatpush.msra.mxu0 %v125
  %336 = vmatpush.msra.mxu0 %v124
  %337 = vmatmul.f32.gmra.mxu0 %v134
  %v338 = vpop.f32.mrf.mxu0
  %v339 = vadd.f32 %v298, %v338
  %340 = vmatmul.f32.gmra.mxu0 %v137
  %v341 = vpop.f32.mrf.mxu0
  %v342 = vadd.f32 %v301, %v341
  %343 = vmatmul.f32.gmra.mxu0 %v140
  %v344 = vpop.f32.mrf.mxu0
  %v345 = vadd.f32 %v304, %v344
  %346 = vmatmul.f32.gmra.mxu0 %v143
  %v347 = vpop.f32.mrf.mxu0
  %v348 = vadd.f32 %v307, %v347
  %349 = vmatmul.f32.gmra.mxu0 %v146
  %v350 = vpop.f32.mrf.mxu0
  %v351 = vadd.f32 %v310, %v350
  %352 = vmatmul.f32.gmra.mxu0 %v149
  %v353 = vpop.f32.mrf.mxu0
  %v354 = vadd.f32 %v313, %v353
  %355 = vmatmul.f32.gmra.mxu0 %v152
  %v356 = vpop.f32.mrf.mxu0
  %v357 = vadd.f32 %v316, %v356
  %358 = vmatmul.f32.gmra.mxu0 %v155
  %v359 = vpop.f32.mrf.mxu0
  %v360 = vadd.f32 %v319, %v359
  %361 = vdwg.mxu0
  %vm362 = vcmask 64512
  %v363 = vsel %vm362, %v339, 0.0
  %364 = vadd.xlane.f32.xlu0 %v363
  %v365 = vpop.xlane.xlu0 %364
  %v366 = vsel %vm362, %v342, 0.0
  %367 = vadd.xlane.f32.xlu0 %v366
  %v368 = vpop.xlane.xlu0 %367
  %v369 = vsel %vm362, %v345, 0.0
  %370 = vadd.xlane.f32.xlu0 %v369
  %v371 = vpop.xlane.xlu0 %370
  %v372 = vsel %vm362, %v348, 0.0
  %373 = vadd.xlane.f32.xlu0 %v372
  %v374 = vpop.xlane.xlu0 %373
  %v375 = vsel %vm362, %v351, 0.0
  %376 = vadd.xlane.f32.xlu0 %v375
  %v377 = vpop.xlane.xlu0 %376
  %v378 = vsel %vm362, %v354, 0.0
  %379 = vadd.xlane.f32.xlu0 %v378
  %v380 = vpop.xlane.xlu0 %379
  %v381 = vsel %vm362, %v357, 0.0
  %382 = vadd.xlane.f32.xlu0 %v381
  %v383 = vpop.xlane.xlu0 %382
  %v384 = vsel %vm362, %v360, 0.0
  %385 = vadd.xlane.f32.xlu0 %v384
  %v386 = vpop.xlane.xlu0 %385
  %v387 = vmul.f32 %v365, 0.125
  %v388 = vmul.f32 %v368, 0.125
  %v389 = vmul.f32 %v371, 0.125
  %v390 = vmul.f32 %v374, 0.125
  %v391 = vmul.f32 %v377, 0.125
  %v392 = vmul.f32 %v380, 0.125
  %v393 = vmul.f32 %v383, 0.125
  %v394 = vmul.f32 %v386, 0.125
  %v395 = vsub.f32 %v339, %v387
  %v396 = vsub.f32 %v342, %v388
  %v397 = vsub.f32 %v345, %v389
  %v398 = vsub.f32 %v348, %v390
  %v399 = vsub.f32 %v351, %v391
  %v400 = vsub.f32 %v354, %v392
  %v401 = vsub.f32 %v357, %v393
  %v402 = vsub.f32 %v360, %v394
  %v403 = vmul.f32 %v395, %v395
  %v404 = vmul.f32 %v396, %v396
  %v405 = vmul.f32 %v397, %v397
  %v406 = vmul.f32 %v398, %v398
  %v407 = vmul.f32 %v399, %v399
  %v408 = vmul.f32 %v400, %v400
  %v409 = vmul.f32 %v401, %v401
  %v410 = vmul.f32 %v402, %v402
  %v411 = vsel %vm362, %v403, 0.0
  %412 = vadd.xlane.f32.xlu0 %v411
  %v413 = vpop.xlane.xlu0 %412
  %v414 = vsel %vm362, %v404, 0.0
  %415 = vadd.xlane.f32.xlu0 %v414
  %v416 = vpop.xlane.xlu0 %415
  %v417 = vsel %vm362, %v405, 0.0
  %418 = vadd.xlane.f32.xlu0 %v417
  %v419 = vpop.xlane.xlu0 %418
  %v420 = vsel %vm362, %v406, 0.0
  %421 = vadd.xlane.f32.xlu0 %v420
  %v422 = vpop.xlane.xlu0 %421
  %v423 = vsel %vm362, %v407, 0.0
  %424 = vadd.xlane.f32.xlu0 %v423
  %v425 = vpop.xlane.xlu0 %424
  %v426 = vsel %vm362, %v408, 0.0
  %427 = vadd.xlane.f32.xlu0 %v426
  %v428 = vpop.xlane.xlu0 %427
  %v429 = vsel %vm362, %v409, 0.0
  %430 = vadd.xlane.f32.xlu0 %v429
  %v431 = vpop.xlane.xlu0 %430
  %v432 = vsel %vm362, %v410, 0.0
  %433 = vadd.xlane.f32.xlu0 %v432
  %v434 = vpop.xlane.xlu0 %433
  %v435 = vmul.f32 %v413, 0.125
  %v436 = vmul.f32 %v416, 0.125
  %v437 = vmul.f32 %v419, 0.125
  %v438 = vmul.f32 %v422, 0.125
  %v439 = vmul.f32 %v425, 0.125
  %v440 = vmul.f32 %v428, 0.125
  %v441 = vmul.f32 %v431, 0.125
  %v442 = vmul.f32 %v434, 0.125
  %v443 = vld [vmem:[%s2] sm:$0xff]
  %v444 = vld [vmem:[%s2 + $0x8] sm:$0xff]
  %v445 = vld [vmem:[%s2 + $0x10] sm:$0xff]
  %v446 = vld [vmem:[%s2 + $0x18] sm:$0xff]
  %v447 = vld [vmem:[%s2 + $0x20] sm:$0xff]
  %v448 = vld [vmem:[%s2 + $0x28] sm:$0xff]
  %v449 = vld [vmem:[%s2 + $0x30] sm:$0xff]
  %v450 = vld [vmem:[%s2 + $0x38] sm:$0xff]
  %v451 = vadd.f32 %v435, 1e-05
  %v452 = vadd.f32 %v436, 1e-05
  %v453 = vadd.f32 %v437, 1e-05
  %v454 = vadd.f32 %v438, 1e-05
  %v455 = vadd.f32 %v439, 1e-05
  %v456 = vadd.f32 %v440, 1e-05
  %v457 = vadd.f32 %v441, 1e-05
  %v458 = vadd.f32 %v442, 1e-05
  %v459 = vrsqrt.pop %v451
  %v460 = vmul.f32 %v459, %v451
  %v461 = vmul.f32 %v460, %v459
  %v462 = vmul.f32 0.5, %v461
  %v463 = vsub.f32 1.5, %v462
  %v464 = vmul.f32 %v459, %v463
  %vm465 = vweird.f32 %v451
  %vm466 = vweird.f32 %v459
  %vm467 = vmor %vm465, %vm466
  %v468 = vsel %vm467, %v459, %v464
  %v469 = vrsqrt.pop %v452
  %v470 = vmul.f32 %v469, %v452
  %v471 = vmul.f32 %v470, %v469
  %v472 = vmul.f32 0.5, %v471
  %v473 = vsub.f32 1.5, %v472
  %v474 = vmul.f32 %v469, %v473
  %vm475 = vweird.f32 %v452
  %vm476 = vweird.f32 %v469
  %vm477 = vmor %vm475, %vm476
  %v478 = vsel %vm477, %v469, %v474
  %v479 = vrsqrt.pop %v453
  %v480 = vmul.f32 %v479, %v453
  %v481 = vmul.f32 %v480, %v479
  %v482 = vmul.f32 0.5, %v481
  %v483 = vsub.f32 1.5, %v482
  %v484 = vmul.f32 %v479, %v483
  %vm485 = vweird.f32 %v453
  %vm486 = vweird.f32 %v479
  %vm487 = vmor %vm485, %vm486
  %v488 = vsel %vm487, %v479, %v484
  %v489 = vrsqrt.pop %v454
  %v490 = vmul.f32 %v489, %v454
  %v491 = vmul.f32 %v490, %v489
  %v492 = vmul.f32 0.5, %v491
  %v493 = vsub.f32 1.5, %v492
  %v494 = vmul.f32 %v489, %v493
  %vm495 = vweird.f32 %v454
  %vm496 = vweird.f32 %v489
  %vm497 = vmor %vm495, %vm496
  %v498 = vsel %vm497, %v489, %v494
  %v499 = vrsqrt.pop %v455
  %v500 = vmul.f32 %v499, %v455
  %v501 = vmul.f32 %v500, %v499
  %v502 = vmul.f32 0.5, %v501
  %v503 = vsub.f32 1.5, %v502
  %v504 = vmul.f32 %v499, %v503
  %vm505 = vweird.f32 %v455
  %vm506 = vweird.f32 %v499
  %vm507 = vmor %vm505, %vm506
  %v508 = vsel %vm507, %v499, %v504
  %v509 = vrsqrt.pop %v456
  %v510 = vmul.f32 %v509, %v456
  %v511 = vmul.f32 %v510, %v509
  %v512 = vmul.f32 0.5, %v511
  %v513 = vsub.f32 1.5, %v512
  %v514 = vmul.f32 %v509, %v513
  %vm515 = vweird.f32 %v456
  %vm516 = vweird.f32 %v509
  %vm517 = vmor %vm515, %vm516
  %v518 = vsel %vm517, %v509, %v514
  %v519 = vrsqrt.pop %v457
  %v520 = vmul.f32 %v519, %v457
  %v521 = vmul.f32 %v520, %v519
  %v522 = vmul.f32 0.5, %v521
  %v523 = vsub.f32 1.5, %v522
  %v524 = vmul.f32 %v519, %v523
  %vm525 = vweird.f32 %v457
  %vm526 = vweird.f32 %v519
  %vm527 = vmor %vm525, %vm526
  %v528 = vsel %vm527, %v519, %v524
  %v529 = vrsqrt.pop %v458
  %v530 = vmul.f32 %v529, %v458
  %v531 = vmul.f32 %v530, %v529
  %v532 = vmul.f32 0.5, %v531
  %v533 = vsub.f32 1.5, %v532
  %v534 = vmul.f32 %v529, %v533
  %vm535 = vweird.f32 %v458
  %vm536 = vweird.f32 %v529
  %vm537 = vmor %vm535, %vm536
  %v538 = vsel %vm537, %v529, %v534
  %v539 = vmul.f32 %v443, %v468
  %v540 = vmul.f32 %v444, %v478
  %v541 = vmul.f32 %v445, %v488
  %v542 = vmul.f32 %v446, %v498
  %v543 = vmul.f32 %v447, %v508
  %v544 = vmul.f32 %v448, %v518
  %v545 = vmul.f32 %v449, %v528
  %v546 = vmul.f32 %v450, %v538
  %v547 = vld [vmem:[%s4] sm:$0xff]
  %v548 = vld [vmem:[%s4 + $0x8] sm:$0xff]
  %v549 = vld [vmem:[%s4 + $0x10] sm:$0xff]
  %v550 = vld [vmem:[%s4 + $0x18] sm:$0xff]
  %v551 = vld [vmem:[%s4 + $0x20] sm:$0xff]
  %v552 = vld [vmem:[%s4 + $0x28] sm:$0xff]
  %v553 = vld [vmem:[%s4 + $0x30] sm:$0xff]
  %v554 = vld [vmem:[%s4 + $0x38] sm:$0xff]
  %556 = vset.pattern.permute.xlu0 0
  %557 = vperm.xlu0 %556, %v539
  %v558 = vpop.permute.xlu0 %557
  %561 = vset.pattern.permute.xlu0 0
  %562 = vperm.xlu0 %561, %v540
  %v563 = vpop.permute.xlu0 %562
  %566 = vset.pattern.permute.xlu0 0
  %567 = vperm.xlu0 %566, %v541
  %v568 = vpop.permute.xlu0 %567
  %571 = vset.pattern.permute.xlu0 0
  %572 = vperm.xlu0 %571, %v542
  %v573 = vpop.permute.xlu0 %572
  %576 = vset.pattern.permute.xlu0 0
  %577 = vperm.xlu0 %576, %v543
  %v578 = vpop.permute.xlu0 %577
  %581 = vset.pattern.permute.xlu0 0
  %582 = vperm.xlu0 %581, %v544
  %v583 = vpop.permute.xlu0 %582
  %586 = vset.pattern.permute.xlu0 0
  %587 = vperm.xlu0 %586, %v545
  %v588 = vpop.permute.xlu0 %587
  %591 = vset.pattern.permute.xlu0 0
  %592 = vperm.xlu0 %591, %v546
  %v593 = vpop.permute.xlu0 %592
  %v595 = vmul.f32 %v395, %v558
  %v596 = vmul.f32 %v396, %v563
  %v597 = vmul.f32 %v397, %v568
  %v598 = vmul.f32 %v398, %v573
  %v599 = vmul.f32 %v399, %v578
  %v600 = vmul.f32 %v400, %v583
  %v601 = vmul.f32 %v401, %v588
  %v602 = vmul.f32 %v402, %v593
  %v603 = vadd.f32 %v547, %v595
  %v604 = vadd.f32 %v548, %v596
  %v605 = vadd.f32 %v549, %v597
  %v606 = vadd.f32 %v550, %v598
  %v607 = vadd.f32 %v551, %v599
  %v608 = vadd.f32 %v552, %v600
  %v609 = vadd.f32 %v553, %v601
  %v610 = vadd.f32 %v554, %v602
  %v611 = vld [vmem:[%s3] sm:$0xff]
  %v612 = vld [vmem:[%s3 + $0x8] sm:$0xff]
  %v613 = vld [vmem:[%s3 + $0x10] sm:$0xff]
  %v614 = vld [vmem:[%s3 + $0x18] sm:$0xff]
  %v615 = vld [vmem:[%s3 + $0x20] sm:$0xff]
  %v616 = vld [vmem:[%s3 + $0x28] sm:$0xff]
  %v617 = vld [vmem:[%s3 + $0x30] sm:$0xff]
  %v618 = vld [vmem:[%s3 + $0x38] sm:$0xff]
  %620 = vset.pattern.permute.xlu0 0
  %621 = vperm.xlu0 %620, %v611
  %v622 = vpop.permute.xlu0 %621
  %625 = vset.pattern.permute.xlu0 0
  %626 = vperm.xlu0 %625, %v612
  %v627 = vpop.permute.xlu0 %626
  %630 = vset.pattern.permute.xlu0 0
  %631 = vperm.xlu0 %630, %v613
  %v632 = vpop.permute.xlu0 %631
  %635 = vset.pattern.permute.xlu0 0
  %636 = vperm.xlu0 %635, %v614
  %v637 = vpop.permute.xlu0 %636
  %640 = vset.pattern.permute.xlu0 0
  %641 = vperm.xlu0 %640, %v615
  %v642 = vpop.permute.xlu0 %641
  %645 = vset.pattern.permute.xlu0 0
  %646 = vperm.xlu0 %645, %v616
  %v647 = vpop.permute.xlu0 %646
  %650 = vset.pattern.permute.xlu0 0
  %651 = vperm.xlu0 %650, %v617
  %v652 = vpop.permute.xlu0 %651
  %655 = vset.pattern.permute.xlu0 0
  %656 = vperm.xlu0 %655, %v618
  %v657 = vpop.permute.xlu0 %656
  %v659 = vadd.f32 %v603, %v622
  %v660 = vadd.f32 %v604, %v627
  %v661 = vadd.f32 %v605, %v632
  %v662 = vadd.f32 %v606, %v637
  %v663 = vadd.f32 %v607, %v642
  %v664 = vadd.f32 %v608, %v647
  %v665 = vadd.f32 %v609, %v652
  %v666 = vadd.f32 %v610, %v657
  %667 = vst.msk [vmem:[%s5] sm:$0xff] %vm362, %v659
  %668 = vst.msk [vmem:[%s5 + $0x8] sm:$0xff] %vm362, %v660
  %669 = vst.msk [vmem:[%s5 + $0x10] sm:$0xff] %vm362, %v661
  %670 = vst.msk [vmem:[%s5 + $0x18] sm:$0xff] %vm362, %v662
  %671 = vst.msk [vmem:[%s5 + $0x20] sm:$0xff] %vm362, %v663
  %672 = vst.msk [vmem:[%s5 + $0x28] sm:$0xff] %vm362, %v664
  %673 = vst.msk [vmem:[%s5 + $0x30] sm:$0xff] %vm362, %v665
  %674 = vst.msk [vmem:[%s5 + $0x38] sm:$0xff] %vm362, %v666
  // Predicated region
  $region22: #{resnet_generator_forward.19} parent=0 // pred_check
    _
  $region23: #{resnet_generator_forward.19} parent=0 // pred_check_branch
    %676 = sbr.rel (0) target = $region25
  $region24: #{resnet_generator_forward.19} parent=0 // pred_region
    _
  $region25: #{resnet_generator_forward.19} parent=0 // pred_fallthru
    _
  // Predicated region
  $region26: #{resnet_generator_forward.19} parent=0 // pred_check
    _
  $region27: #{resnet_generator_forward.19} parent=0 // pred_check_branch
    %678 = sbr.rel (0) target = $region29
  $region28: #{resnet_generator_forward.19} parent=0 // pred_region
    _
  $region29: #{resnet_generator_forward.19} parent=0 // pred_fallthru
    _

// kernel: resnet_generator_forward.18
$region0: #{resnet_generator_forward.18}
  #allocation0 [shape = 'u32[]', space=smem, size = 0x4, offset = 0x4, fixed_abs, tag = 'smem constant byte address 0x4 - core index']
  #allocation1 [shape = 'u32[72,128]{1,0:T(1,128)}', space=vmem, size = 0x9000, scoped, tag = 'internal scratch']
  %s0 = inlined_call_operand.vmem [shape: f32[64,576], index: 0, kind: input, shape index: {}]
  %s1 = inlined_call_operand.vmem [shape: f32[576,8], index: 1, kind: input, shape index: {}]
  %s2 = inlined_call_operand.vmem [shape: f32[64,1], index: 2, kind: input, shape index: {}]
  %s3 = inlined_call_operand.vmem [shape: f32[64,1], index: 3, kind: input, shape index: {}]
  %s4 = inlined_call_operand.vmem [shape: f32[64,8], index: 4, kind: output, shape index: {}]
  %s5 = sld [smem:[#allocation0]]
  $region26: #{resnet_generator_forward.18} parent=0
    _
  %s7 = ssub.s32 1, %s5
  %s8 = scalar_select 0, %s7, %s5
  // Predicated region
  $region2: #{resnet_generator_forward.18} parent=0 // pred_check
    _
  $region3: #{resnet_generator_forward.18} parent=0 // pred_check_branch
    %10 = sbr.rel (0) target = $region5
  $region4: #{resnet_generator_forward.18} parent=0 // pred_region
    _
  $region5: #{resnet_generator_forward.18} parent=0 // pred_fallthru
    _
  // Predicated region
  $region6: #{resnet_generator_forward.18} parent=0 // pred_check
    _
  $region7: #{resnet_generator_forward.18} parent=0 // pred_check_branch
    %12 = sbr.rel (0) target = $region9
  $region8: #{resnet_generator_forward.18} parent=0 // pred_region
    _
  $region9: #{resnet_generator_forward.18} parent=0 // pred_fallthru
    _
  // Predicated region
  $region10: #{resnet_generator_forward.18} parent=0 // pred_check
    _
  $region11: #{resnet_generator_forward.18} parent=0 // pred_check_branch
    %14 = sbr.rel (0) target = $region13
  $region12: #{resnet_generator_forward.18} parent=0 // pred_region
    _
  $region13: #{resnet_generator_forward.18} parent=0 // pred_fallthru
    _
  // Predicated region
  $region14: #{resnet_generator_forward.18} parent=0 // pred_check
    _
  $region15: #{resnet_generator_forward.18} parent=0 // pred_check_branch
    %16 = sbr.rel (0) target = $region17
  $region16: #{resnet_generator_forward.18} parent=0 // pred_region
    _
  $region17: #{resnet_generator_forward.18} parent=0 // pred_fallthru
    _
  %v17 = vld [vmem:[%s0] sm:$0xff]
  %v18 = vld [vmem:[%s0 + $0x8] sm:$0xff]
  %v19 = vld [vmem:[%s0 + $0x10] sm:$0xff]
  %v20 = vld [vmem:[%s0 + $0x18] sm:$0xff]
  %v21 = vld [vmem:[%s0 + $0x20] sm:$0xff]
  %v22 = vld [vmem:[%s0 + $0x28] sm:$0xff]
  %v23 = vld [vmem:[%s0 + $0x30] sm:$0xff]
  %v24 = vld [vmem:[%s0 + $0x38] sm:$0xff]
  %v25 = vld [vmem:[%s0 + $0x40] sm:$0xff]
  %v26 = vld [vmem:[%s0 + $0x48] sm:$0xff]
  %v27 = vld [vmem:[%s0 + $0x50] sm:$0xff]
  %v28 = vld [vmem:[%s0 + $0x58] sm:$0xff]
  %v29 = vld [vmem:[%s0 + $0x60] sm:$0xff]
  %v30 = vld [vmem:[%s0 + $0x68] sm:$0xff]
  %v31 = vld [vmem:[%s0 + $0x70] sm:$0xff]
  %v32 = vld [vmem:[%s0 + $0x78] sm:$0xff]
  %v33 = vld [vmem:[%s0 + $0x80] sm:$0xff]
  %v34 = vld [vmem:[%s0 + $0x88] sm:$0xff]
  %v35 = vld [vmem:[%s0 + $0x90] sm:$0xff]
  %v36 = vld [vmem:[%s0 + $0x98] sm:$0xff]
  %v37 = vld [vmem:[%s0 + $0xa0] sm:$0xff]
  %v38 = vld [vmem:[%s0 + $0xa8] sm:$0xff]
  %v39 = vld [vmem:[%s0 + $0xb0] sm:$0xff]
  %v40 = vld [vmem:[%s0 + $0xb8] sm:$0xff]
  %v41 = vld [vmem:[%s0 + $0xc0] sm:$0xff]
  %v42 = vld [vmem:[%s0 + $0xc8] sm:$0xff]
  %v43 = vld [vmem:[%s0 + $0xd0] sm:$0xff]
  %v44 = vld [vmem:[%s0 + $0xd8] sm:$0xff]
  %v45 = vld [vmem:[%s0 + $0xe0] sm:$0xff]
  %v46 = vld [vmem:[%s0 + $0xe8] sm:$0xff]
  %v47 = vld [vmem:[%s0 + $0xf0] sm:$0xff]
  %v48 = vld [vmem:[%s0 + $0xf8] sm:$0xff]
  %v49 = vld [vmem:[%s0 + $0x100] sm:$0xff]
  %v50 = vld [vmem:[%s0 + $0x108] sm:$0xff]
  %v51 = vld [vmem:[%s0 + $0x110] sm:$0xff]
  %v52 = vld [vmem:[%s0 + $0x118] sm:$0xff]
  %v53 = vld [vmem:[%s0 + $0x120] sm:$0xff]
  %v54 = vld [vmem:[%s0 + $0x128] sm:$0xff]
  %v55 = vld [vmem:[%s0 + $0x130] sm:$0xff]
  %v56 = vld [vmem:[%s0 + $0x138] sm:$0xff]
  %v57 = vld [vmem:[%s1] sm:$0xff]
  %v58 = vld [vmem:[%s1 + $0x8] sm:$0xff]
  %v59 = vld [vmem:[%s1 + $0x10] sm:$0xff]
  %v60 = vld [vmem:[%s1 + $0x18] sm:$0xff]
  %v61 = vld [vmem:[%s1 + $0x20] sm:$0xff]
  %v62 = vld [vmem:[%s1 + $0x28] sm:$0xff]
  %v63 = vld [vmem:[%s1 + $0x30] sm:$0xff]
  %v64 = vld [vmem:[%s1 + $0x38] sm:$0xff]
  %v65 = vld [vmem:[%s1 + $0x40] sm:$0xff]
  %v66 = vld [vmem:[%s1 + $0x48] sm:$0xff]
  %v67 = vld [vmem:[%s1 + $0x50] sm:$0xff]
  %v68 = vld [vmem:[%s1 + $0x58] sm:$0xff]
  %v69 = vld [vmem:[%s1 + $0x60] sm:$0xff]
  %v70 = vld [vmem:[%s1 + $0x68] sm:$0xff]
  %v71 = vld [vmem:[%s1 + $0x70] sm:$0xff]
  %v72 = vld [vmem:[%s1 + $0x78] sm:$0xff]
  %v73 = vld [vmem:[%s1 + $0x80] sm:$0xff]
  %v74 = vld [vmem:[%s1 + $0x88] sm:$0xff]
  %v75 = vld [vmem:[%s1 + $0x90] sm:$0xff]
  %v76 = vld [vmem:[%s1 + $0x98] sm:$0xff]
  %v77 = vld [vmem:[%s1 + $0xa0] sm:$0xff]
  %v78 = vld [vmem:[%s1 + $0xa8] sm:$0xff]
  %v79 = vld [vmem:[%s1 + $0xb0] sm:$0xff]
  %v80 = vld [vmem:[%s1 + $0xb8] sm:$0xff]
  %v81 = vld [vmem:[%s1 + $0xc0] sm:$0xff]
  %v82 = vld [vmem:[%s1 + $0xc8] sm:$0xff]
  %v83 = vld [vmem:[%s1 + $0xd0] sm:$0xff]
  %v84 = vld [vmem:[%s1 + $0xd8] sm:$0xff]
  %v85 = vld [vmem:[%s1 + $0xe0] sm:$0xff]
  %v86 = vld [vmem:[%s1 + $0xe8] sm:$0xff]
  %v87 = vld [vmem:[%s1 + $0xf0] sm:$0xff]
  %v88 = vld [vmem:[%s1 + $0xf8] sm:$0xff]
  %v89 = vld [vmem:[%s1 + $0x100] sm:$0xff]
  %v90 = vld [vmem:[%s1 + $0x108] sm:$0xff]
  %v91 = vld [vmem:[%s1 + $0x110] sm:$0xff]
  %v92 = vld [vmem:[%s1 + $0x118] sm:$0xff]
  %v93 = vld [vmem:[%s1 + $0x120] sm:$0xff]
  %v94 = vld [vmem:[%s1 + $0x128] sm:$0xff]
  %v95 = vld [vmem:[%s1 + $0x130] sm:$0xff]
  %v96 = vld [vmem:[%s1 + $0x138] sm:$0xff]
  %v97 = vld [vmem:[%s1 + $0x140] sm:$0xff]
  %v98 = vld [vmem:[%s1 + $0x148] sm:$0xff]
  %v99 = vld [vmem:[%s1 + $0x150] sm:$0xff]
  %v100 = vld [vmem:[%s1 + $0x158] sm:$0xff]
  %v101 = vld [vmem:[%s1 + $0x160] sm:$0xff]
  %v102 = vld [vmem:[%s1 + $0x168] sm:$0xff]
  %v103 = vld [vmem:[%s1 + $0x170] sm:$0xff]
  %v104 = vld [vmem:[%s1 + $0x178] sm:$0xff]
  %v105 = vld [vmem:[%s1 + $0x180] sm:$0xff]
  %v106 = vld [vmem:[%s1 + $0x188] sm:$0xff]
  %v107 = vld [vmem:[%s1 + $0x190] sm:$0xff]
  %v108 = vld [vmem:[%s1 + $0x198] sm:$0xff]
  %v109 = vld [vmem:[%s1 + $0x1a0] sm:$0xff]
  %v110 = vld [vmem:[%s1 + $0x1a8] sm:$0xff]
  %v111 = vld [vmem:[%s1 + $0x1b0] sm:$0xff]
  %v112 = vld [vmem:[%s1 + $0x1b8] sm:$0xff]
  %v113 = vld [vmem:[%s1 + $0x1c0] sm:$0xff]
  %v114 = vld [vmem:[%s1 + $0x1c8] sm:$0xff]
  %v115 = vld [vmem:[%s1 + $0x1d0] sm:$0xff]
  %v116 = vld [vmem:[%s1 + $0x1d8] sm:$0xff]
  %v117 = vld [vmem:[%s1 + $0x1e0] sm:$0xff]
  %v118 = vld [vmem:[%s1 + $0x1e8] sm:$0xff]
  %v119 = vld [vmem:[%s1 + $0x1f0] sm:$0xff]
  %v120 = vld [vmem:[%s1 + $0x1f8] sm:$0xff]
  %v121 = vld [vmem:[%s1 + $0x200] sm:$0xff]
  %v122 = vld [vmem:[%s1 + $0x208] sm:$0xff]
  %v123 = vld [vmem:[%s1 + $0x210] sm:$0xff]
  %v124 = vld [vmem:[%s1 + $0x218] sm:$0xff]
  %v125 = vld [vmem:[%s1 + $0x220] sm:$0xff]
  %v126 = vld [vmem:[%s1 + $0x228] sm:$0xff]
  %v127 = vld [vmem:[%s1 + $0x230] sm:$0xff]
  %v128 = vld [vmem:[%s1 + $0x238] sm:$0xff]
  %vm129 = vcmask 523264
  %v131 = vsel %vm129, %v21, 0
  %v134 = vsel %vm129, %v26, 0
  %v137 = vsel %vm129, %v31, 0
  %v140 = vsel %vm129, %v36, 0
  %v143 = vsel %vm129, %v41, 0
  %v146 = vsel %vm129, %v46, 0
  %v149 = vsel %vm129, %v51, 0
  %v152 = vsel %vm129, %v56, 0
  %154 = vmatpush.msra.mxu0 %v72
  %155 = vmatpush.msra.mxu0 %v71
  %156 = vmatpush.msra.mxu0 %v70
  %157 = vmatpush.msra.mxu0 %v69
  %158 = vmatpush.msra.mxu0 %v68
  %159 = vmatpush.msra.mxu0 %v67
  %160 = vmatpush.msra.mxu0 %v66
  %161 = vmatpush.msra.mxu0 %v65
  %162 = vmatpush.msra.mxu0 %v64
  %163 = vmatpush.msra.mxu0 %v63
  %164 = vmatpush.msra.mxu0 %v62
  %165 = vmatpush.msra.mxu0 %v61
  %166 = vmatpush.msra.mxu0 %v60
  %167 = vmatpush.msra.mxu0 %v59
  %168 = vmatpush.msra.mxu0 %v58
  %169 = vmatpush.msra.mxu0 %v57
  %170 = vmatmul.f32.gmra.mxu0 %v17
  %v171 = vpop.f32.mrf.mxu0
  %v172 = vadd.f32 0.0, %v171
  %173 = vmatmul.f32.gmra.mxu0 %v22
  %v174 = vpop.f32.mrf.mxu0
  %v175 = vadd.f32 0.0, %v174
  %176 = vmatmul.f32.gmra.mxu0 %v27
  %v177 = vpop.f32.mrf.mxu0
  %v178 = vadd.f32 0.0, %v177
  %179 = vmatmul.f32.gmra.mxu0 %v32
  %v180 = vpop.f32.mrf.mxu0
  %v181 = vadd.f32 0.0, %v180
  %182 = vmatmul.f32.gmra.mxu0 %v37
  %v183 = vpop.f32.mrf.mxu0
  %v184 = vadd.f32 0.0, %v183
  %185 = vmatmul.f32.gmra.mxu0 %v42
  %v186 = vpop.f32.mrf.mxu0
  %v187 = vadd.f32 0.0, %v186
  %188 = vmatmul.f32.gmra.mxu0 %v47
  %v189 = vpop.f32.mrf.mxu0
  %v190 = vadd.f32 0.0, %v189
  %191 = vmatmul.f32.gmra.mxu0 %v52
  %v192 = vpop.f32.mrf.mxu0
  %v193 = vadd.f32 0.0, %v192
  %194 = vdwg.mxu0
  %195 = vmatpush.msra.mxu0 %v88
  %196 = vmatpush.msra.mxu0 %v87
  %197 = vmatpush.msra.mxu0 %v86
  %198 = vmatpush.msra.mxu0 %v85
  %199 = vmatpush.msra.mxu0 %v84
  %200 = vmatpush.msra.mxu0 %v83
  %201 = vmatpush.msra.mxu0 %v82
  %202 = vmatpush.msra.mxu0 %v81
  %203 = vmatpush.msra.mxu0 %v80
  %204 = vmatpush.msra.mxu0 %v79
  %205 = vmatpush.msra.mxu0 %v78
  %206 = vmatpush.msra.mxu0 %v77
  %207 = vmatpush.msra.mxu0 %v76
  %208 = vmatpush.msra.mxu0 %v75
  %209 = vmatpush.msra.mxu0 %v74
  %210 = vmatpush.msra.mxu0 %v73
  %211 = vmatmul.f32.gmra.mxu0 %v18
  %v212 = vpop.f32.mrf.mxu0
  %v213 = vadd.f32 %v172, %v212
  %214 = vmatmul.f32.gmra.mxu0 %v23
  %v215 = vpop.f32.mrf.mxu0
  %v216 = vadd.f32 %v175, %v215
  %217 = vmatmul.f32.gmra.mxu0 %v28
  %v218 = vpop.f32.mrf.mxu0
  %v219 = vadd.f32 %v178, %v218
  %220 = vmatmul.f32.gmra.mxu0 %v33
  %v221 = vpop.f32.mrf.mxu0
  %v222 = vadd.f32 %v181, %v221
  %223 = vmatmul.f32.gmra.mxu0 %v38
  %v224 = vpop.f32.mrf.mxu0
  %v225 = vadd.f32 %v184, %v224
  %226 = vmatmul.f32.gmra.mxu0 %v43
  %v227 = vpop.f32.mrf.mxu0
  %v228 = vadd.f32 %v187, %v227
  %229 = vmatmul.f32.gmra.mxu0 %v48
  %v230 = vpop.f32.mrf.mxu0
  %v231 = vadd.f32 %v190, %v230
  %232 = vmatmul.f32.gmra.mxu0 %v53
  %v233 = vpop.f32.mrf.mxu0
  %v234 = vadd.f32 %v193, %v233
  %235 = vdwg.mxu0
  %236 = vmatpush.msra.mxu0 %v104
  %237 = vmatpush.msra.mxu0 %v103
  %238 = vmatpush.msra.mxu0 %v102
  %239 = vmatpush.msra.mxu0 %v101
  %240 = vmatpush.msra.mxu0 %v100
  %241 = vmatpush.msra.mxu0 %v99
  %242 = vmatpush.msra.mxu0 %v98
  %243 = vmatpush.msra.mxu0 %v97
  %244 = vmatpush.msra.mxu0 %v96
  %245 = vmatpush.msra.mxu0 %v95
  %246 = vmatpush.msra.mxu0 %v94
  %247 = vmatpush.msra.mxu0 %v93
  %248 = vmatpush.msra.mxu0 %v92
  %249 = vmatpush.msra.mxu0 %v91
  %250 = vmatpush.msra.mxu0 %v90
  %251 = vmatpush.msra.mxu0 %v89
  %252 = vmatmul.f32.gmra.mxu0 %v19
  %v253 = vpop.f32.mrf.mxu0
  %v254 = vadd.f32 %v213, %v253
  %255 = vmatmul.f32.gmra.mxu0 %v24
  %v256 = vpop.f32.mrf.mxu0
  %v257 = vadd.f32 %v216, %v256
  %258 = vmatmul.f32.gmra.mxu0 %v29
  %v259 = vpop.f32.mrf.mxu0
  %v260 = vadd.f32 %v219, %v259
  %261 = vmatmul.f32.gmra.mxu0 %v34
  %v262 = vpop.f32.mrf.mxu0
  %v263 = vadd.f32 %v222, %v262
  %264 = vmatmul.f32.gmra.mxu0 %v39
  %v265 = vpop.f32.mrf.mxu0
  %v266 = vadd.f32 %v225, %v265
  %267 = vmatmul.f32.gmra.mxu0 %v44
  %v268 = vpop.f32.mrf.mxu0
  %v269 = vadd.f32 %v228, %v268
  %270 = vmatmul.f32.gmra.mxu0 %v49
  %v271 = vpop.f32.mrf.mxu0
  %v272 = vadd.f32 %v231, %v271
  %273 = vmatmul.f32.gmra.mxu0 %v54
  %v274 = vpop.f32.mrf.mxu0
  %v275 = vadd.f32 %v234, %v274
  %276 = vdwg.mxu0
  %277 = vmatpush.msra.mxu0 %v120
  %278 = vmatpush.msra.mxu0 %v119
  %279 = vmatpush.msra.mxu0 %v118
  %280 = vmatpush.msra.mxu0 %v117
  %281 = vmatpush.msra.mxu0 %v116
  %282 = vmatpush.msra.mxu0 %v115
  %283 = vmatpush.msra.mxu0 %v114
  %284 = vmatpush.msra.mxu0 %v113
  %285 = vmatpush.msra.mxu0 %v112
  %286 = vmatpush.msra.mxu0 %v111
  %287 = vmatpush.msra.mxu0 %v110
  %288 = vmatpush.msra.mxu0 %v109
  %289 = vmatpush.msra.mxu0 %v108
  %290 = vmatpush.msra.mxu0 %v107
  %291 = vmatpush.msra.mxu0 %v106
  %292 = vmatpush.msra.mxu0 %v105
  %293 = vmatmul.f32.gmra.mxu0 %v20
  %v294 = vpop.f32.mrf.mxu0
  %v295 = vadd.f32 %v254, %v294
  %296 = vmatmul.f32.gmra.mxu0 %v25
  %v297 = vpop.f32.mrf.mxu0
  %v298 = vadd.f32 %v257, %v297
  %299 = vmatmul.f32.gmra.mxu0 %v30
  %v300 = vpop.f32.mrf.mxu0
  %v301 = vadd.f32 %v260, %v300
  %302 = vmatmul.f32.gmra.mxu0 %v35
  %v303 = vpop.f32.mrf.mxu0
  %v304 = vadd.f32 %v263, %v303
  %305 = vmatmul.f32.gmra.mxu0 %v40
  %v306 = vpop.f32.mrf.mxu0
  %v307 = vadd.f32 %v266, %v306
  %308 = vmatmul.f32.gmra.mxu0 %v45
  %v309 = vpop.f32.mrf.mxu0
  %v310 = vadd.f32 %v269, %v309
  %311 = vmatmul.f32.gmra.mxu0 %v50
  %v312 = vpop.f32.mrf.mxu0
  %v313 = vadd.f32 %v272, %v312
  %314 = vmatmul.f32.gmra.mxu0 %v55
  %v315 = vpop.f32.mrf.mxu0
  %v316 = vadd.f32 %v275, %v315
  %317 = vdwg.mxu0
  %318 = vmatpush.msra.mxu0 0.0
  %319 = vmatpush.msra.mxu0 0.0
  %320 = vmatpush.msra.mxu0 0.0
  %321 = vmatpush.msra.mxu0 0.0
  %322 = vmatpush.msra.mxu0 0.0
  %323 = vmatpush.msra.mxu0 0.0
  %324 = vmatpush.msra.mxu0 0.0
  %325 = vmatpush.msra.mxu0 0.0
  %326 = vmatpush.msra.mxu0 %v128
  %327 = vmatpush.msra.mxu0 %v127
  %328 = vmatpush.msra.mxu0 %v126
  %329 = vmatpush.msra.mxu0 %v125
  %330 = vmatpush.msra.mxu0 %v124
  %331 = vmatpush.msra.mxu0 %v123
  %332 = vmatpush.msra.mxu0 %v122
  %333 = vmatpush.msra.mxu0 %v121
  %334 = vmatmul.f32.gmra.mxu0 %v131
  %v335 = vpop.f32.mrf.mxu0
  %v336 = vadd.f32 %v295, %v335
  %337 = vmatmul.f32.gmra.mxu0 %v134
  %v338 = vpop.f32.mrf.mxu0
  %v339 = vadd.f32 %v298, %v338
  %340 = vmatmul.f32.gmra.mxu0 %v137
  %v341 = vpop.f32.mrf.mxu0
  %v342 = vadd.f32 %v301, %v341
  %343 = vmatmul.f32.gmra.mxu0 %v140
  %v344 = vpop.f32.mrf.mxu0
  %v345 = vadd.f32 %v304, %v344
  %346 = vmatmul.f32.gmra.mxu0 %v143
  %v347 = vpop.f32.mrf.mxu0
  %v348 = vadd.f32 %v307, %v347
  %349 = vmatmul.f32.gmra.mxu0 %v146
  %v350 = vpop.f32.mrf.mxu0
  %v351 = vadd.f32 %v310, %v350
  %352 = vmatmul.f32.gmra.mxu0 %v149
  %v353 = vpop.f32.mrf.mxu0
  %v354 = vadd.f32 %v313, %v353
  %355 = vmatmul.f32.gmra.mxu0 %v152
  %v356 = vpop.f32.mrf.mxu0
  %v357 = vadd.f32 %v316, %v356
  %358 = vdwg.mxu0
  %vm359 = vcmask 64512
  %v360 = vsel %vm359, %v336, 0.0
  %361 = vadd.xlane.f32.xlu0 %v360
  %v362 = vpop.xlane.xlu0 %361
  %v363 = vsel %vm359, %v339, 0.0
  %364 = vadd.xlane.f32.xlu0 %v363
  %v365 = vpop.xlane.xlu0 %364
  %v366 = vsel %vm359, %v342, 0.0
  %367 = vadd.xlane.f32.xlu0 %v366
  %v368 = vpop.xlane.xlu0 %367
  %v369 = vsel %vm359, %v345, 0.0
  %370 = vadd.xlane.f32.xlu0 %v369
  %v371 = vpop.xlane.xlu0 %370
  %v372 = vsel %vm359, %v348, 0.0
  %373 = vadd.xlane.f32.xlu0 %v372
  %v374 = vpop.xlane.xlu0 %373
  %v375 = vsel %vm359, %v351, 0.0
  %376 = vadd.xlane.f32.xlu0 %v375
  %v377 = vpop.xlane.xlu0 %376
  %v378 = vsel %vm359, %v354, 0.0
  %379 = vadd.xlane.f32.xlu0 %v378
  %v380 = vpop.xlane.xlu0 %379
  %v381 = vsel %vm359, %v357, 0.0
  %382 = vadd.xlane.f32.xlu0 %v381
  %v383 = vpop.xlane.xlu0 %382
  %v384 = vmul.f32 %v362, 0.125
  %v385 = vmul.f32 %v365, 0.125
  %v386 = vmul.f32 %v368, 0.125
  %v387 = vmul.f32 %v371, 0.125
  %v388 = vmul.f32 %v374, 0.125
  %v389 = vmul.f32 %v377, 0.125
  %v390 = vmul.f32 %v380, 0.125
  %v391 = vmul.f32 %v383, 0.125
  %v392 = vsub.f32 %v336, %v384
  %v393 = vsub.f32 %v339, %v385
  %v394 = vsub.f32 %v342, %v386
  %v395 = vsub.f32 %v345, %v387
  %v396 = vsub.f32 %v348, %v388
  %v397 = vsub.f32 %v351, %v389
  %v398 = vsub.f32 %v354, %v390
  %v399 = vsub.f32 %v357, %v391
  %v400 = vmul.f32 %v392, %v392
  %v401 = vmul.f32 %v393, %v393
  %v402 = vmul.f32 %v394, %v394
  %v403 = vmul.f32 %v395, %v395
  %v404 = vmul.f32 %v396, %v396
  %v405 = vmul.f32 %v397, %v397
  %v406 = vmul.f32 %v398, %v398
  %v407 = vmul.f32 %v399, %v399
  %v408 = vsel %vm359, %v400, 0.0
  %409 = vadd.xlane.f32.xlu0 %v408
  %v410 = vpop.xlane.xlu0 %409
  %v411 = vsel %vm359, %v401, 0.0
  %412 = vadd.xlane.f32.xlu0 %v411
  %v413 = vpop.xlane.xlu0 %412
  %v414 = vsel %vm359, %v402, 0.0
  %415 = vadd.xlane.f32.xlu0 %v414
  %v416 = vpop.xlane.xlu0 %415
  %v417 = vsel %vm359, %v403, 0.0
  %418 = vadd.xlane.f32.xlu0 %v417
  %v419 = vpop.xlane.xlu0 %418
  %v420 = vsel %vm359, %v404, 0.0
  %421 = vadd.xlane.f32.xlu0 %v420
  %v422 = vpop.xlane.xlu0 %421
  %v423 = vsel %vm359, %v405, 0.0
  %424 = vadd.xlane.f32.xlu0 %v423
  %v425 = vpop.xlane.xlu0 %424
  %v426 = vsel %vm359, %v406, 0.0
  %427 = vadd.xlane.f32.xlu0 %v426
  %v428 = vpop.xlane.xlu0 %427
  %v429 = vsel %vm359, %v407, 0.0
  %430 = vadd.xlane.f32.xlu0 %v429
  %v431 = vpop.xlane.xlu0 %430
  %v432 = vmul.f32 %v410, 0.125
  %v433 = vmul.f32 %v413, 0.125
  %v434 = vmul.f32 %v416, 0.125
  %v435 = vmul.f32 %v419, 0.125
  %v436 = vmul.f32 %v422, 0.125
  %v437 = vmul.f32 %v425, 0.125
  %v438 = vmul.f32 %v428, 0.125
  %v439 = vmul.f32 %v431, 0.125
  %v440 = vld [vmem:[%s2] sm:$0xff]
  %v441 = vld [vmem:[%s2 + $0x8] sm:$0xff]
  %v442 = vld [vmem:[%s2 + $0x10] sm:$0xff]
  %v443 = vld [vmem:[%s2 + $0x18] sm:$0xff]
  %v444 = vld [vmem:[%s2 + $0x20] sm:$0xff]
  %v445 = vld [vmem:[%s2 + $0x28] sm:$0xff]
  %v446 = vld [vmem:[%s2 + $0x30] sm:$0xff]
  %v447 = vld [vmem:[%s2 + $0x38] sm:$0xff]
  %v448 = vadd.f32 %v432, 1e-05
  %v449 = vadd.f32 %v433, 1e-05
  %v450 = vadd.f32 %v434, 1e-05
  %v451 = vadd.f32 %v435, 1e-05
  %v452 = vadd.f32 %v436, 1e-05
  %v453 = vadd.f32 %v437, 1e-05
  %v454 = vadd.f32 %v438, 1e-05
  %v455 = vadd.f32 %v439, 1e-05
  %v456 = vrsqrt.pop %v448
  %v457 = vmul.f32 %v456, %v448
  %v458 = vmul.f32 %v457, %v456
  %v459 = vmul.f32 0.5, %v458
  %v460 = vsub.f32 1.5, %v459
  %v461 = vmul.f32 %v456, %v460
  %vm462 = vweird.f32 %v448
  %vm463 = vweird.f32 %v456
  %vm464 = vmor %vm462, %vm463
  %v465 = vsel %vm464, %v456, %v461
  %v466 = vrsqrt.pop %v449
  %v467 = vmul.f32 %v466, %v449
  %v468 = vmul.f32 %v467, %v466
  %v469 = vmul.f32 0.5, %v468
  %v470 = vsub.f32 1.5, %v469
  %v471 = vmul.f32 %v466, %v470
  %vm472 = vweird.f32 %v449
  %vm473 = vweird.f32 %v466
  %vm474 = vmor %vm472, %vm473
  %v475 = vsel %vm474, %v466, %v471
  %v476 = vrsqrt.pop %v450
  %v477 = vmul.f32 %v476, %v450
  %v478 = vmul.f32 %v477, %v476
  %v479 = vmul.f32 0.5, %v478
  %v480 = vsub.f32 1.5, %v479
  %v481 = vmul.f32 %v476, %v480
  %vm482 = vweird.f32 %v450
  %vm483 = vweird.f32 %v476
  %vm484 = vmor %vm482, %vm483
  %v485 = vsel %vm484, %v476, %v481
  %v486 = vrsqrt.pop %v451
  %v487 = vmul.f32 %v486, %v451
  %v488 = vmul.f32 %v487, %v486
  %v489 = vmul.f32 0.5, %v488
  %v490 = vsub.f32 1.5, %v489
  %v491 = vmul.f32 %v486, %v490
  %vm492 = vweird.f32 %v451
  %vm493 = vweird.f32 %v486
  %vm494 = vmor %vm492, %vm493
  %v495 = vsel %vm494, %v486, %v491
  %v496 = vrsqrt.pop %v452
  %v497 = vmul.f32 %v496, %v452
  %v498 = vmul.f32 %v497, %v496
  %v499 = vmul.f32 0.5, %v498
  %v500 = vsub.f32 1.5, %v499
  %v501 = vmul.f32 %v496, %v500
  %vm502 = vweird.f32 %v452
  %vm503 = vweird.f32 %v496
  %vm504 = vmor %vm502, %vm503
  %v505 = vsel %vm504, %v496, %v501
  %v506 = vrsqrt.pop %v453
  %v507 = vmul.f32 %v506, %v453
  %v508 = vmul.f32 %v507, %v506
  %v509 = vmul.f32 0.5, %v508
  %v510 = vsub.f32 1.5, %v509
  %v511 = vmul.f32 %v506, %v510
  %vm512 = vweird.f32 %v453
  %vm513 = vweird.f32 %v506
  %vm514 = vmor %vm512, %vm513
  %v515 = vsel %vm514, %v506, %v511
  %v516 = vrsqrt.pop %v454
  %v517 = vmul.f32 %v516, %v454
  %v518 = vmul.f32 %v517, %v516
  %v519 = vmul.f32 0.5, %v518
  %v520 = vsub.f32 1.5, %v519
  %v521 = vmul.f32 %v516, %v520
  %vm522 = vweird.f32 %v454
  %vm523 = vweird.f32 %v516
  %vm524 = vmor %vm522, %vm523
  %v525 = vsel %vm524, %v516, %v521
  %v526 = vrsqrt.pop %v455
  %v527 = vmul.f32 %v526, %v455
  %v528 = vmul.f32 %v527, %v526
  %v529 = vmul.f32 0.5, %v528
  %v530 = vsub.f32 1.5, %v529
  %v531 = vmul.f32 %v526, %v530
  %vm532 = vweird.f32 %v455
  %vm533 = vweird.f32 %v526
  %vm534 = vmor %vm532, %vm533
  %v535 = vsel %vm534, %v526, %v531
  %v536 = vmul.f32 %v440, %v465
  %v537 = vmul.f32 %v441, %v475
  %v538 = vmul.f32 %v442, %v485
  %v539 = vmul.f32 %v443, %v495
  %v540 = vmul.f32 %v444, %v505
  %v541 = vmul.f32 %v445, %v515
  %v542 = vmul.f32 %v446, %v525
  %v543 = vmul.f32 %v447, %v535
  %545 = vset.pattern.permute.xlu0 0
  %546 = vperm.xlu0 %545, %v536
  %v547 = vpop.permute.xlu0 %546
  %550 = vset.pattern.permute.xlu0 0
  %551 = vperm.xlu0 %550, %v537
  %v552 = vpop.permute.xlu0 %551
  %555 = vset.pattern.permute.xlu0 0
  %556 = vperm.xlu0 %555, %v538
  %v557 = vpop.permute.xlu0 %556
  %560 = vset.pattern.permute.xlu0 0
  %561 = vperm.xlu0 %560, %v539
  %v562 = vpop.permute.xlu0 %561
  %565 = vset.pattern.permute.xlu0 0
  %566 = vperm.xlu0 %565, %v540
  %v567 = vpop.permute.xlu0 %566
  %570 = vset.pattern.permute.xlu0 0
  %571 = vperm.xlu0 %570, %v541
  %v572 = vpop.permute.xlu0 %571
  %575 = vset.pattern.permute.xlu0 0
  %576 = vperm.xlu0 %575, %v542
  %v577 = vpop.permute.xlu0 %576
  %580 = vset.pattern.permute.xlu0 0
  %581 = vperm.xlu0 %580, %v543
  %v582 = vpop.permute.xlu0 %581
  %v584 = vmul.f32 %v392, %v547
  %v585 = vmul.f32 %v393, %v552
  %v586 = vmul.f32 %v394, %v557
  %v587 = vmul.f32 %v395, %v562
  %v588 = vmul.f32 %v396, %v567
  %v589 = vmul.f32 %v397, %v572
  %v590 = vmul.f32 %v398, %v577
  %v591 = vmul.f32 %v399, %v582
  %v592 = vld [vmem:[%s3] sm:$0xff]
  %v593 = vld [vmem:[%s3 + $0x8] sm:$0xff]
  %v594 = vld [vmem:[%s3 + $0x10] sm:$0xff]
  %v595 = vld [vmem:[%s3 + $0x18] sm:$0xff]
  %v596 = vld [vmem:[%s3 + $0x20] sm:$0xff]
  %v597 = vld [vmem:[%s3 + $0x28] sm:$0xff]
  %v598 = vld [vmem:[%s3 + $0x30] sm:$0xff]
  %v599 = vld [vmem:[%s3 + $0x38] sm:$0xff]
  %601 = vset.pattern.permute.xlu0 0
  %602 = vperm.xlu0 %601, %v592
  %v603 = vpop.permute.xlu0 %602
  %606 = vset.pattern.permute.xlu0 0
  %607 = vperm.xlu0 %606, %v593
  %v608 = vpop.permute.xlu0 %607
  %611 = vset.pattern.permute.xlu0 0
  %612 = vperm.xlu0 %611, %v594
  %v613 = vpop.permute.xlu0 %612
  %616 = vset.pattern.permute.xlu0 0
  %617 = vperm.xlu0 %616, %v595
  %v618 = vpop.permute.xlu0 %617
  %621 = vset.pattern.permute.xlu0 0
  %622 = vperm.xlu0 %621, %v596
  %v623 = vpop.permute.xlu0 %622
  %626 = vset.pattern.permute.xlu0 0
  %627 = vperm.xlu0 %626, %v597
  %v628 = vpop.permute.xlu0 %627
  %631 = vset.pattern.permute.xlu0 0
  %632 = vperm.xlu0 %631, %v598
  %v633 = vpop.permute.xlu0 %632
  %636 = vset.pattern.permute.xlu0 0
  %637 = vperm.xlu0 %636, %v599
  %v638 = vpop.permute.xlu0 %637
  %v640 = vadd.f32 %v584, %v603
  %v641 = vadd.f32 %v585, %v608
  %v642 = vadd.f32 %v586, %v613
  %v643 = vadd.f32 %v587, %v618
  %v644 = vadd.f32 %v588, %v623
  %v645 = vadd.f32 %v589, %v628
  %v646 = vadd.f32 %v590, %v633
  %v647 = vadd.f32 %v591, %v638
  %v648 = vmax.f32 %v640, 0.0
  %v649 = vmax.f32 %v641, 0.0
  %v650 = vmax.f32 %v642, 0.0
  %v651 = vmax.f32 %v643, 0.0
  %v652 = vmax.f32 %v644, 0.0
  %v653 = vmax.f32 %v645, 0.0
  %v654 = vmax.f32 %v646, 0.0
  %v655 = vmax.f32 %v647, 0.0
  %656 = vst.msk [vmem:[%s4] sm:$0xff] %vm359, %v648
  %657 = vst.msk [vmem:[%s4 + $0x8] sm:$0xff] %vm359, %v649
  %658 = vst.msk [vmem:[%s4 + $0x10] sm:$0xff] %vm359, %v650
  %659 = vst.msk [vmem:[%s4 + $0x18] sm:$0xff] %vm359, %v651
  %660 = vst.msk [vmem:[%s4 + $0x20] sm:$0xff] %vm359, %v652
  %661 = vst.msk [vmem:[%s4 + $0x28] sm:$0xff] %vm359, %v653
  %662 = vst.msk [vmem:[%s4 + $0x30] sm:$0xff] %vm359, %v654
  %663 = vst.msk [vmem:[%s4 + $0x38] sm:$0xff] %vm359, %v655
  // Predicated region
  $region18: #{resnet_generator_forward.18} parent=0 // pred_check
    _
  $region19: #{resnet_generator_forward.18} parent=0 // pred_check_branch
    %665 = sbr.rel (0) target = $region21
  $region20: #{resnet_generator_forward.18} parent=0 // pred_region
    _
  $region21: #{resnet_generator_forward.18} parent=0 // pred_fallthru
    _
  // Predicated region
  $region22: #{resnet_generator_forward.18} parent=0 // pred_check
    _
  $region23: #{resnet_generator_forward.18} parent=0 // pred_check_branch
    %667 = sbr.rel (0) target = $region25
  $region24: #{resnet_generator_forward.18} parent=0 // pred_region
    _
  $region25: #{resnet_generator_forward.18} parent=0 // pred_fallthru
    _

// kernel: resnet_generator_forward.24
$region0: #{resnet_generator_forward.24}
  #allocation0 [shape = 'u32[]', space=smem, size = 0x4, offset = 0x4, fixed_abs, tag = 'smem constant byte address 0x4 - core index']
  #allocation1 [shape = 'u32[72,128]{1,0:T(1,128)}', space=vmem, size = 0x9000, scoped, tag = 'internal scratch']
  %s0 = inlined_call_operand.vmem [shape: f32[32,576], index: 0, kind: input, shape index: {}]
  %s1 = inlined_call_operand.vmem [shape: f32[576,32], index: 1, kind: input, shape index: {}]
  %s2 = inlined_call_operand.vmem [shape: f32[32,1], index: 2, kind: input, shape index: {}]
  %s3 = inlined_call_operand.vmem [shape: f32[32,1], index: 3, kind: input, shape index: {}]
  %s4 = inlined_call_operand.vmem [shape: f32[32,32], index: 4, kind: output, shape index: {}]
  %s5 = sld [smem:[#allocation0]]
  $region26: #{resnet_generator_forward.24} parent=0
    _
  %s7 = ssub.s32 1, %s5
  %s8 = scalar_select 0, %s7, %s5
  // Predicated region
  $region2: #{resnet_generator_forward.24} parent=0 // pred_check
    _
  $region3: #{resnet_generator_forward.24} parent=0 // pred_check_branch
    %10 = sbr.rel (0) target = $region5
  $region4: #{resnet_generator_forward.24} parent=0 // pred_region
    _
  $region5: #{resnet_generator_forward.24} parent=0 // pred_fallthru
    _
  // Predicated region
  $region6: #{resnet_generator_forward.24} parent=0 // pred_check
    _
  $region7: #{resnet_generator_forward.24} parent=0 // pred_check_branch
    %12 = sbr.rel (0) target = $region9
  $region8: #{resnet_generator_forward.24} parent=0 // pred_region
    _
  $region9: #{resnet_generator_forward.24} parent=0 // pred_fallthru
    _
  // Predicated region
  $region10: #{resnet_generator_forward.24} parent=0 // pred_check
    _
  $region11: #{resnet_generator_forward.24} parent=0 // pred_check_branch
    %14 = sbr.rel (0) target = $region13
  $region12: #{resnet_generator_forward.24} parent=0 // pred_region
    _
  $region13: #{resnet_generator_forward.24} parent=0 // pred_fallthru
    _
  // Predicated region
  $region14: #{resnet_generator_forward.24} parent=0 // pred_check
    _
  $region15: #{resnet_generator_forward.24} parent=0 // pred_check_branch
    %16 = sbr.rel (0) target = $region17
  $region16: #{resnet_generator_forward.24} parent=0 // pred_region
    _
  $region17: #{resnet_generator_forward.24} parent=0 // pred_fallthru
    _
  %v17 = vld [vmem:[%s0] sm:$0xff]
  %v18 = vld [vmem:[%s0 + $0x8] sm:$0xff]
  %v19 = vld [vmem:[%s0 + $0x10] sm:$0xff]
  %v20 = vld [vmem:[%s0 + $0x18] sm:$0xff]
  %v21 = vld [vmem:[%s0 + $0x20] sm:$0xff]
  %v22 = vld [vmem:[%s0 + $0x28] sm:$0xff]
  %v23 = vld [vmem:[%s0 + $0x30] sm:$0xff]
  %v24 = vld [vmem:[%s0 + $0x38] sm:$0xff]
  %v25 = vld [vmem:[%s0 + $0x40] sm:$0xff]
  %v26 = vld [vmem:[%s0 + $0x48] sm:$0xff]
  %v27 = vld [vmem:[%s0 + $0x50] sm:$0xff]
  %v28 = vld [vmem:[%s0 + $0x58] sm:$0xff]
  %v29 = vld [vmem:[%s0 + $0x60] sm:$0xff]
  %v30 = vld [vmem:[%s0 + $0x68] sm:$0xff]
  %v31 = vld [vmem:[%s0 + $0x70] sm:$0xff]
  %v32 = vld [vmem:[%s0 + $0x78] sm:$0xff]
  %v33 = vld [vmem:[%s0 + $0x80] sm:$0xff]
  %v34 = vld [vmem:[%s0 + $0x88] sm:$0xff]
  %v35 = vld [vmem:[%s0 + $0x90] sm:$0xff]
  %v36 = vld [vmem:[%s0 + $0x98] sm:$0xff]
  %v37 = vld [vmem:[%s1] sm:$0xff]
  %v38 = vld [vmem:[%s1 + $0x8] sm:$0xff]
  %v39 = vld [vmem:[%s1 + $0x10] sm:$0xff]
  %v40 = vld [vmem:[%s1 + $0x18] sm:$0xff]
  %v41 = vld [vmem:[%s1 + $0x20] sm:$0xff]
  %v42 = vld [vmem:[%s1 + $0x28] sm:$0xff]
  %v43 = vld [vmem:[%s1 + $0x30] sm:$0xff]
  %v44 = vld [vmem:[%s1 + $0x38] sm:$0xff]
  %v45 = vld [vmem:[%s1 + $0x40] sm:$0xff]
  %v46 = vld [vmem:[%s1 + $0x48] sm:$0xff]
  %v47 = vld [vmem:[%s1 + $0x50] sm:$0xff]
  %v48 = vld [vmem:[%s1 + $0x58] sm:$0xff]
  %v49 = vld [vmem:[%s1 + $0x60] sm:$0xff]
  %v50 = vld [vmem:[%s1 + $0x68] sm:$0xff]
  %v51 = vld [vmem:[%s1 + $0x70] sm:$0xff]
  %v52 = vld [vmem:[%s1 + $0x78] sm:$0xff]
  %v53 = vld [vmem:[%s1 + $0x80] sm:$0xff]
  %v54 = vld [vmem:[%s1 + $0x88] sm:$0xff]
  %v55 = vld [vmem:[%s1 + $0x90] sm:$0xff]
  %v56 = vld [vmem:[%s1 + $0x98] sm:$0xff]
  %v57 = vld [vmem:[%s1 + $0xa0] sm:$0xff]
  %v58 = vld [vmem:[%s1 + $0xa8] sm:$0xff]
  %v59 = vld [vmem:[%s1 + $0xb0] sm:$0xff]
  %v60 = vld [vmem:[%s1 + $0xb8] sm:$0xff]
  %v61 = vld [vmem:[%s1 + $0xc0] sm:$0xff]
  %v62 = vld [vmem:[%s1 + $0xc8] sm:$0xff]
  %v63 = vld [vmem:[%s1 + $0xd0] sm:$0xff]
  %v64 = vld [vmem:[%s1 + $0xd8] sm:$0xff]
  %v65 = vld [vmem:[%s1 + $0xe0] sm:$0xff]
  %v66 = vld [vmem:[%s1 + $0xe8] sm:$0xff]
  %v67 = vld [vmem:[%s1 + $0xf0] sm:$0xff]
  %v68 = vld [vmem:[%s1 + $0xf8] sm:$0xff]
  %v69 = vld [vmem:[%s1 + $0x100] sm:$0xff]
  %v70 = vld [vmem:[%s1 + $0x108] sm:$0xff]
  %v71 = vld [vmem:[%s1 + $0x110] sm:$0xff]
  %v72 = vld [vmem:[%s1 + $0x118] sm:$0xff]
  %v73 = vld [vmem:[%s1 + $0x120] sm:$0xff]
  %v74 = vld [vmem:[%s1 + $0x128] sm:$0xff]
  %v75 = vld [vmem:[%s1 + $0x130] sm:$0xff]
  %v76 = vld [vmem:[%s1 + $0x138] sm:$0xff]
  %v77 = vld [vmem:[%s1 + $0x140] sm:$0xff]
  %v78 = vld [vmem:[%s1 + $0x148] sm:$0xff]
  %v79 = vld [vmem:[%s1 + $0x150] sm:$0xff]
  %v80 = vld [vmem:[%s1 + $0x158] sm:$0xff]
  %v81 = vld [vmem:[%s1 + $0x160] sm:$0xff]
  %v82 = vld [vmem:[%s1 + $0x168] sm:$0xff]
  %v83 = vld [vmem:[%s1 + $0x170] sm:$0xff]
  %v84 = vld [vmem:[%s1 + $0x178] sm:$0xff]
  %v85 = vld [vmem:[%s1 + $0x180] sm:$0xff]
  %v86 = vld [vmem:[%s1 + $0x188] sm:$0xff]
  %v87 = vld [vmem:[%s1 + $0x190] sm:$0xff]
  %v88 = vld [vmem:[%s1 + $0x198] sm:$0xff]
  %v89 = vld [vmem:[%s1 + $0x1a0] sm:$0xff]
  %v90 = vld [vmem:[%s1 + $0x1a8] sm:$0xff]
  %v91 = vld [vmem:[%s1 + $0x1b0] sm:$0xff]
  %v92 = vld [vmem:[%s1 + $0x1b8] sm:$0xff]
  %v93 = vld [vmem:[%s1 + $0x1c0] sm:$0xff]
  %v94 = vld [vmem:[%s1 + $0x1c8] sm:$0xff]
  %v95 = vld [vmem:[%s1 + $0x1d0] sm:$0xff]
  %v96 = vld [vmem:[%s1 + $0x1d8] sm:$0xff]
  %v97 = vld [vmem:[%s1 + $0x1e0] sm:$0xff]
  %v98 = vld [vmem:[%s1 + $0x1e8] sm:$0xff]
  %v99 = vld [vmem:[%s1 + $0x1f0] sm:$0xff]
  %v100 = vld [vmem:[%s1 + $0x1f8] sm:$0xff]
  %v101 = vld [vmem:[%s1 + $0x200] sm:$0xff]
  %v102 = vld [vmem:[%s1 + $0x208] sm:$0xff]
  %v103 = vld [vmem:[%s1 + $0x210] sm:$0xff]
  %v104 = vld [vmem:[%s1 + $0x218] sm:$0xff]
  %v105 = vld [vmem:[%s1 + $0x220] sm:$0xff]
  %v106 = vld [vmem:[%s1 + $0x228] sm:$0xff]
  %v107 = vld [vmem:[%s1 + $0x230] sm:$0xff]
  %v108 = vld [vmem:[%s1 + $0x238] sm:$0xff]
  %vm109 = vcmask 523264
  %v111 = vsel %vm109, %v21, 0
  %v114 = vsel %vm109, %v26, 0
  %v117 = vsel %vm109, %v31, 0
  %v120 = vsel %vm109, %v36, 0
  %122 = vmatpush.msra.mxu0 %v52
  %123 = vmatpush.msra.mxu0 %v51
  %124 = vmatpush.msra.mxu0 %v50
  %125 = vmatpush.msra.mxu0 %v49
  %126 = vmatpush.msra.mxu0 %v48
  %127 = vmatpush.msra.mxu0 %v47
  %128 = vmatpush.msra.mxu0 %v46
  %129 = vmatpush.msra.mxu0 %v45
  %130 = vmatpush.msra.mxu0 %v44
  %131 = vmatpush.msra.mxu0 %v43
  %132 = vmatpush.msra.mxu0 %v42
  %133 = vmatpush.msra.mxu0 %v41
  %134 = vmatpush.msra.mxu0 %v40
  %135 = vmatpush.msra.mxu0 %v39
  %136 = vmatpush.msra.mxu0 %v38
  %137 = vmatpush.msra.mxu0 %v37
  %138 = vmatmul.f32.gmra.mxu0 %v17
  %v139 = vpop.f32.mrf.mxu0
  %v140 = vadd.f32 0.0, %v139
  %141 = vmatmul.f32.gmra.mxu0 %v22
  %v142 = vpop.f32.mrf.mxu0
  %v143 = vadd.f32 0.0, %v142
  %144 = vmatmul.f32.gmra.mxu0 %v27
  %v145 = vpop.f32.mrf.mxu0
  %v146 = vadd.f32 0.0, %v145
  %147 = vmatmul.f32.gmra.mxu0 %v32
  %v148 = vpop.f32.mrf.mxu0
  %v149 = vadd.f32 0.0, %v148
  %150 = vdwg.mxu0
  %151 = vmatpush.msra.mxu0 %v68
  %152 = vmatpush.msra.mxu0 %v67
  %153 = vmatpush.msra.mxu0 %v66
  %154 = vmatpush.msra.mxu0 %v65
  %155 = vmatpush.msra.mxu0 %v64
  %156 = vmatpush.msra.mxu0 %v63
  %157 = vmatpush.msra.mxu0 %v62
  %158 = vmatpush.msra.mxu0 %v61
  %159 = vmatpush.msra.mxu0 %v60
  %160 = vmatpush.msra.mxu0 %v59
  %161 = vmatpush.msra.mxu0 %v58
  %162 = vmatpush.msra.mxu0 %v57
  %163 = vmatpush.msra.mxu0 %v56
  %164 = vmatpush.msra.mxu0 %v55
  %165 = vmatpush.msra.mxu0 %v54
  %166 = vmatpush.msra.mxu0 %v53
  %167 = vmatmul.f32.gmra.mxu0 %v18
  %v168 = vpop.f32.mrf.mxu0
  %v169 = vadd.f32 %v140, %v168
  %170 = vmatmul.f32.gmra.mxu0 %v23
  %v171 = vpop.f32.mrf.mxu0
  %v172 = vadd.f32 %v143, %v171
  %173 = vmatmul.f32.gmra.mxu0 %v28
  %v174 = vpop.f32.mrf.mxu0
  %v175 = vadd.f32 %v146, %v174
  %176 = vmatmul.f32.gmra.mxu0 %v33
  %v177 = vpop.f32.mrf.mxu0
  %v178 = vadd.f32 %v149, %v177
  %179 = vdwg.mxu0
  %180 = vmatpush.msra.mxu0 %v84
  %181 = vmatpush.msra.mxu0 %v83
  %182 = vmatpush.msra.mxu0 %v82
  %183 = vmatpush.msra.mxu0 %v81
  %184 = vmatpush.msra.mxu0 %v80
  %185 = vmatpush.msra.mxu0 %v79
  %186 = vmatpush.msra.mxu0 %v78
  %187 = vmatpush.msra.mxu0 %v77
  %188 = vmatpush.msra.mxu0 %v76
  %189 = vmatpush.msra.mxu0 %v75
  %190 = vmatpush.msra.mxu0 %v74
  %191 = vmatpush.msra.mxu0 %v73
  %192 = vmatpush.msra.mxu0 %v72
  %193 = vmatpush.msra.mxu0 %v71
  %194 = vmatpush.msra.mxu0 %v70
  %195 = vmatpush.msra.mxu0 %v69
  %196 = vmatmul.f32.gmra.mxu0 %v19
  %v197 = vpop.f32.mrf.mxu0
  %v198 = vadd.f32 %v169, %v197
  %199 = vmatmul.f32.gmra.mxu0 %v24
  %v200 = vpop.f32.mrf.mxu0
  %v201 = vadd.f32 %v172, %v200
  %202 = vmatmul.f32.gmra.mxu0 %v29
  %v203 = vpop.f32.mrf.mxu0
  %v204 = vadd.f32 %v175, %v203
  %205 = vmatmul.f32.gmra.mxu0 %v34
  %v206 = vpop.f32.mrf.mxu0
  %v207 = vadd.f32 %v178, %v206
  %208 = vdwg.mxu0
  %209 = vmatpush.msra.mxu0 %v100
  %210 = vmatpush.msra.mxu0 %v99
  %211 = vmatpush.msra.mxu0 %v98
  %212 = vmatpush.msra.mxu0 %v97
  %213 = vmatpush.msra.mxu0 %v96
  %214 = vmatpush.msra.mxu0 %v95
  %215 = vmatpush.msra.mxu0 %v94
  %216 = vmatpush.msra.mxu0 %v93
  %217 = vmatpush.msra.mxu0 %v92
  %218 = vmatpush.msra.mxu0 %v91
  %219 = vmatpush.msra.mxu0 %v90
  %220 = vmatpush.msra.mxu0 %v89
  %221 = vmatpush.msra.mxu0 %v88
  %222 = vmatpush.msra.mxu0 %v87
  %223 = vmatpush.msra.mxu0 %v86
  %224 = vmatpush.msra.mxu0 %v85
  %225 = vmatmul.f32.gmra.mxu0 %v20
  %v226 = vpop.f32.mrf.mxu0
  %v227 = vadd.f32 %v198, %v226
  %228 = vmatmul.f32.gmra.mxu0 %v25
  %v229 = vpop.f32.mrf.mxu0
  %v230 = vadd.f32 %v201, %v229
  %231 = vmatmul.f32.gmra.mxu0 %v30
  %v232 = vpop.f32.mrf.mxu0
  %v233 = vadd.f32 %v204, %v232
  %234 = vmatmul.f32.gmra.mxu0 %v35
  %v235 = vpop.f32.mrf.mxu0
  %v236 = vadd.f32 %v207, %v235
  %237 = vdwg.mxu0
  %238 = vmatpush.msra.mxu0 0.0
  %239 = vmatpush.msra.mxu0 0.0
  %240 = vmatpush.msra.mxu0 0.0
  %241 = vmatpush.msra.mxu0 0.0
  %242 = vmatpush.msra.mxu0 0.0
  %243 = vmatpush.msra.mxu0 0.0
  %244 = vmatpush.msra.mxu0 0.0
  %245 = vmatpush.msra.mxu0 0.0
  %246 = vmatpush.msra.mxu0 %v108
  %247 = vmatpush.msra.mxu0 %v107
  %248 = vmatpush.msra.mxu0 %v106
  %249 = vmatpush.msra.mxu0 %v105
  %250 = vmatpush.msra.mxu0 %v104
  %251 = vmatpush.msra.mxu0 %v103
  %252 = vmatpush.msra.mxu0 %v102
  %253 = vmatpush.msra.mxu0 %v101
  %254 = vmatmul.f32.gmra.mxu0 %v111
  %v255 = vpop.f32.mrf.mxu0
  %v256 = vadd.f32 %v227, %v255
  %257 = vmatmul.f32.gmra.mxu0 %v114
  %v258 = vpop.f32.mrf.mxu0
  %v259 = vadd.f32 %v230, %v258
  %260 = vmatmul.f32.gmra.mxu0 %v117
  %v261 = vpop.f32.mrf.mxu0
  %v262 = vadd.f32 %v233, %v261
  %263 = vmatmul.f32.gmra.mxu0 %v120
  %v264 = vpop.f32.mrf.mxu0
  %v265 = vadd.f32 %v236, %v264
  %266 = vdwg.mxu0
  %vm267 = vcmask 261120
  %v268 = vsel %vm267, %v256, 0.0
  %269 = vadd.xlane.f32.xlu0 %v268
  %v270 = vpop.xlane.xlu0 %269
  %v271 = vsel %vm267, %v259, 0.0
  %272 = vadd.xlane.f32.xlu0 %v271
  %v273 = vpop.xlane.xlu0 %272
  %v274 = vsel %vm267, %v262, 0.0
  %275 = vadd.xlane.f32.xlu0 %v274
  %v276 = vpop.xlane.xlu0 %275
  %v277 = vsel %vm267, %v265, 0.0
  %278 = vadd.xlane.f32.xlu0 %v277
  %v279 = vpop.xlane.xlu0 %278
  %v280 = vmul.f32 %v270, 0.03125
  %v281 = vmul.f32 %v273, 0.03125
  %v282 = vmul.f32 %v276, 0.03125
  %v283 = vmul.f32 %v279, 0.03125
  %v284 = vsub.f32 %v256, %v280
  %v285 = vsub.f32 %v259, %v281
  %v286 = vsub.f32 %v262, %v282
  %v287 = vsub.f32 %v265, %v283
  %v288 = vmul.f32 %v284, %v284
  %v289 = vmul.f32 %v285, %v285
  %v290 = vmul.f32 %v286, %v286
  %v291 = vmul.f32 %v287, %v287
  %v292 = vsel %vm267, %v288, 0.0
  %293 = vadd.xlane.f32.xlu0 %v292
  %v294 = vpop.xlane.xlu0 %293
  %v295 = vsel %vm267, %v289, 0.0
  %296 = vadd.xlane.f32.xlu0 %v295
  %v297 = vpop.xlane.xlu0 %296
  %v298 = vsel %vm267, %v290, 0.0
  %299 = vadd.xlane.f32.xlu0 %v298
  %v300 = vpop.xlane.xlu0 %299
  %v301 = vsel %vm267, %v291, 0.0
  %302 = vadd.xlane.f32.xlu0 %v301
  %v303 = vpop.xlane.xlu0 %302
  %v304 = vmul.f32 %v294, 0.03125
  %v305 = vmul.f32 %v297, 0.03125
  %v306 = vmul.f32 %v300, 0.03125
  %v307 = vmul.f32 %v303, 0.03125
  %v308 = vld [vmem:[%s2] sm:$0xff]
  %v309 = vld [vmem:[%s2 + $0x8] sm:$0xff]
  %v310 = vld [vmem:[%s2 + $0x10] sm:$0xff]
  %v311 = vld [vmem:[%s2 + $0x18] sm:$0xff]
  %v312 = vadd.f32 %v304, 1e-05
  %v313 = vadd.f32 %v305, 1e-05
  %v314 = vadd.f32 %v306, 1e-05
  %v315 = vadd.f32 %v307, 1e-05
  %v316 = vrsqrt.pop %v312
  %v317 = vmul.f32 %v316, %v312
  %v318 = vmul.f32 %v317, %v316
  %v319 = vmul.f32 0.5, %v318
  %v320 = vsub.f32 1.5, %v319
  %v321 = vmul.f32 %v316, %v320
  %vm322 = vweird.f32 %v312
  %vm323 = vweird.f32 %v316
  %vm324 = vmor %vm322, %vm323
  %v325 = vsel %vm324, %v316, %v321
  %v326 = vrsqrt.pop %v313
  %v327 = vmul.f32 %v326, %v313
  %v328 = vmul.f32 %v327, %v326
  %v329 = vmul.f32 0.5, %v328
  %v330 = vsub.f32 1.5, %v329
  %v331 = vmul.f32 %v326, %v330
  %vm332 = vweird.f32 %v313
  %vm333 = vweird.f32 %v326
  %vm334 = vmor %vm332, %vm333
  %v335 = vsel %vm334, %v326, %v331
  %v336 = vrsqrt.pop %v314
  %v337 = vmul.f32 %v336, %v314
  %v338 = vmul.f32 %v337, %v336
  %v339 = vmul.f32 0.5, %v338
  %v340 = vsub.f32 1.5, %v339
  %v341 = vmul.f32 %v336, %v340
  %vm342 = vweird.f32 %v314
  %vm343 = vweird.f32 %v336
  %vm344 = vmor %vm342, %vm343
  %v345 = vsel %vm344, %v336, %v341
  %v346 = vrsqrt.pop %v315
  %v347 = vmul.f32 %v346, %v315
  %v348 = vmul.f32 %v347, %v346
  %v349 = vmul.f32 0.5, %v348
  %v350 = vsub.f32 1.5, %v349
  %v351 = vmul.f32 %v346, %v350
  %vm352 = vweird.f32 %v315
  %vm353 = vweird.f32 %v346
  %vm354 = vmor %vm352, %vm353
  %v355 = vsel %vm354, %v346, %v351
  %v356 = vmul.f32 %v308, %v325
  %v357 = vmul.f32 %v309, %v335
  %v358 = vmul.f32 %v310, %v345
  %v359 = vmul.f32 %v311, %v355
  %361 = vset.pattern.permute.xlu0 0
  %362 = vperm.xlu0 %361, %v356
  %v363 = vpop.permute.xlu0 %362
  %366 = vset.pattern.permute.xlu0 0
  %367 = vperm.xlu0 %366, %v357
  %v368 = vpop.permute.xlu0 %367
  %371 = vset.pattern.permute.xlu0 0
  %372 = vperm.xlu0 %371, %v358
  %v373 = vpop.permute.xlu0 %372
  %376 = vset.pattern.permute.xlu0 0
  %377 = vperm.xlu0 %376, %v359
  %v378 = vpop.permute.xlu0 %377
  %v380 = vmul.f32 %v284, %v363
  %v381 = vmul.f32 %v285, %v368
  %v382 = vmul.f32 %v286, %v373
  %v383 = vmul.f32 %v287, %v378
  %v384 = vld [vmem:[%s3] sm:$0xff]
  %v385 = vld [vmem:[%s3 + $0x8] sm:$0xff]
  %v386 = vld [vmem:[%s3 + $0x10] sm:$0xff]
  %v387 = vld [vmem:[%s3 + $0x18] sm:$0xff]
  %389 = vset.pattern.permute.xlu0 0
  %390 = vperm.xlu0 %389, %v384
  %v391 = vpop.permute.xlu0 %390
  %394 = vset.pattern.permute.xlu0 0
  %395 = vperm.xlu0 %394, %v385
  %v396 = vpop.permute.xlu0 %395
  %399 = vset.pattern.permute.xlu0 0
  %400 = vperm.xlu0 %399, %v386
  %v401 = vpop.permute.xlu0 %400
  %404 = vset.pattern.permute.xlu0 0
  %405 = vperm.xlu0 %404, %v387
  %v406 = vpop.permute.xlu0 %405
  %v408 = vadd.f32 %v380, %v391
  %v409 = vadd.f32 %v381, %v396
  %v410 = vadd.f32 %v382, %v401
  %v411 = vadd.f32 %v383, %v406
  %v412 = vmax.f32 %v408, 0.0
  %v413 = vmax.f32 %v409, 0.0
  %v414 = vmax.f32 %v410, 0.0
  %v415 = vmax.f32 %v411, 0.0
  %416 = vst.msk [vmem:[%s4] sm:$0xff] %vm267, %v412
  %417 = vst.msk [vmem:[%s4 + $0x8] sm:$0xff] %vm267, %v413
  %418 = vst.msk [vmem:[%s4 + $0x10] sm:$0xff] %vm267, %v414
  %419 = vst.msk [vmem:[%s4 + $0x18] sm:$0xff] %vm267, %v415
  // Predicated region
  $region18: #{resnet_generator_forward.24} parent=0 // pred_check
    _
  $region19: #{resnet_generator_forward.24} parent=0 // pred_check_branch
    %421 = sbr.rel (0) target = $region21
  $region20: #{resnet_generator_forward.24} parent=0 // pred_region
    _
  $region21: #{resnet_generator_forward.24} parent=0 // pred_fallthru
    _
  // Predicated region
  $region22: #{resnet_generator_forward.24} parent=0 // pred_check
    _
  $region23: #{resnet_generator_forward.24} parent=0 // pred_check_branch
    %423 = sbr.rel (0) target = $region25
  $region24: #{resnet_generator_forward.24} parent=0 // pred_region
    _
  $region25: #{resnet_generator_forward.24} parent=0 // pred_fallthru
    _

// kernel: resnet_generator_forward.25
$region0: #{resnet_generator_forward.25}
  #allocation0 [shape = 'u32[]', space=smem, size = 0x4, offset = 0x4, fixed_abs, tag = 'smem constant byte address 0x4 - core index']
  #allocation1 [shape = 'u32[72,128]{1,0:T(1,128)}', space=vmem, size = 0x9000, scoped, tag = 'internal scratch']
  %s0 = inlined_call_operand.vmem [shape: f32[16,288], index: 0, kind: input, shape index: {}]
  %s1 = inlined_call_operand.vmem [shape: f32[288,128], index: 1, kind: input, shape index: {}]
  %s2 = inlined_call_operand.vmem [shape: f32[16,1], index: 2, kind: input, shape index: {}]
  %s3 = inlined_call_operand.vmem [shape: f32[16,1], index: 3, kind: input, shape index: {}]
  %s4 = inlined_call_operand.vmem [shape: f32[16,128], index: 4, kind: output, shape index: {}]
  %s5 = sld [smem:[#allocation0]]
  $region26: #{resnet_generator_forward.25} parent=0
    _
  %s7 = ssub.s32 1, %s5
  %s8 = scalar_select 0, %s7, %s5
  // Predicated region
  $region2: #{resnet_generator_forward.25} parent=0 // pred_check
    _
  $region3: #{resnet_generator_forward.25} parent=0 // pred_check_branch
    %10 = sbr.rel (0) target = $region5
  $region4: #{resnet_generator_forward.25} parent=0 // pred_region
    _
  $region5: #{resnet_generator_forward.25} parent=0 // pred_fallthru
    _
  // Predicated region
  $region6: #{resnet_generator_forward.25} parent=0 // pred_check
    _
  $region7: #{resnet_generator_forward.25} parent=0 // pred_check_branch
    %12 = sbr.rel (0) target = $region9
  $region8: #{resnet_generator_forward.25} parent=0 // pred_region
    _
  $region9: #{resnet_generator_forward.25} parent=0 // pred_fallthru
    _
  // Predicated region
  $region10: #{resnet_generator_forward.25} parent=0 // pred_check
    _
  $region11: #{resnet_generator_forward.25} parent=0 // pred_check_branch
    %14 = sbr.rel (0) target = $region13
  $region12: #{resnet_generator_forward.25} parent=0 // pred_region
    _
  $region13: #{resnet_generator_forward.25} parent=0 // pred_fallthru
    _
  // Predicated region
  $region14: #{resnet_generator_forward.25} parent=0 // pred_check
    _
  $region15: #{resnet_generator_forward.25} parent=0 // pred_check_branch
    %16 = sbr.rel (0) target = $region17
  $region16: #{resnet_generator_forward.25} parent=0 // pred_region
    _
  $region17: #{resnet_generator_forward.25} parent=0 // pred_fallthru
    _
  %v17 = vld [vmem:[%s0] sm:$0xff]
  %v18 = vld [vmem:[%s0 + $0x8] sm:$0xff]
  %v19 = vld [vmem:[%s0 + $0x10] sm:$0xff]
  %v20 = vld [vmem:[%s0 + $0x18] sm:$0xff]
  %v21 = vld [vmem:[%s0 + $0x20] sm:$0xff]
  %v22 = vld [vmem:[%s0 + $0x28] sm:$0xff]
  %v23 = vld [vmem:[%s1] sm:$0xff]
  %v24 = vld [vmem:[%s1 + $0x8] sm:$0xff]
  %v25 = vld [vmem:[%s1 + $0x10] sm:$0xff]
  %v26 = vld [vmem:[%s1 + $0x18] sm:$0xff]
  %v27 = vld [vmem:[%s1 + $0x20] sm:$0xff]
  %v28 = vld [vmem:[%s1 + $0x28] sm:$0xff]
  %v29 = vld [vmem:[%s1 + $0x30] sm:$0xff]
  %v30 = vld [vmem:[%s1 + $0x38] sm:$0xff]
  %v31 = vld [vmem:[%s1 + $0x40] sm:$0xff]
  %v32 = vld [vmem:[%s1 + $0x48] sm:$0xff]
  %v33 = vld [vmem:[%s1 + $0x50] sm:$0xff]
  %v34 = vld [vmem:[%s1 + $0x58] sm:$0xff]
  %v35 = vld [vmem:[%s1 + $0x60] sm:$0xff]
  %v36 = vld [vmem:[%s1 + $0x68] sm:$0xff]
  %v37 = vld [vmem:[%s1 + $0x70] sm:$0xff]
  %v38 = vld [vmem:[%s1 + $0x78] sm:$0xff]
  %v39 = vld [vmem:[%s1 + $0x80] sm:$0xff]
  %v40 = vld [vmem:[%s1 + $0x88] sm:$0xff]
  %v41 = vld [vmem:[%s1 + $0x90] sm:$0xff]
  %v42 = vld [vmem:[%s1 + $0x98] sm:$0xff]
  %v43 = vld [vmem:[%s1 + $0xa0] sm:$0xff]
  %v44 = vld [vmem:[%s1 + $0xa8] sm:$0xff]
  %v45 = vld [vmem:[%s1 + $0xb0] sm:$0xff]
  %v46 = vld [vmem:[%s1 + $0xb8] sm:$0xff]
  %v47 = vld [vmem:[%s1 + $0xc0] sm:$0xff]
  %v48 = vld [vmem:[%s1 + $0xc8] sm:$0xff]
  %v49 = vld [vmem:[%s1 + $0xd0] sm:$0xff]
  %v50 = vld [vmem:[%s1 + $0xd8] sm:$0xff]
  %v51 = vld [vmem:[%s1 + $0xe0] sm:$0xff]
  %v52 = vld [vmem:[%s1 + $0xe8] sm:$0xff]
  %v53 = vld [vmem:[%s1 + $0xf0] sm:$0xff]
  %v54 = vld [vmem:[%s1 + $0xf8] sm:$0xff]
  %v55 = vld [vmem:[%s1 + $0x100] sm:$0xff]
  %v56 = vld [vmem:[%s1 + $0x108] sm:$0xff]
  %v57 = vld [vmem:[%s1 + $0x110] sm:$0xff]
  %v58 = vld [vmem:[%s1 + $0x118] sm:$0xff]
  %vm59 = vcmask 261120
  %v61 = vsel %vm59, %v19, 0
  %v64 = vsel %vm59, %v22, 0
  %66 = vmatpush.msra.mxu0 %v38
  %67 = vmatpush.msra.mxu0 %v37
  %68 = vmatpush.msra.mxu0 %v36
  %69 = vmatpush.msra.mxu0 %v35
  %70 = vmatpush.msra.mxu0 %v34
  %71 = vmatpush.msra.mxu0 %v33
  %72 = vmatpush.msra.mxu0 %v32
  %73 = vmatpush.msra.mxu0 %v31
  %74 = vmatpush.msra.mxu0 %v30
  %75 = vmatpush.msra.mxu0 %v29
  %76 = vmatpush.msra.mxu0 %v28
  %77 = vmatpush.msra.mxu0 %v27
  %78 = vmatpush.msra.mxu0 %v26
  %79 = vmatpush.msra.mxu0 %v25
  %80 = vmatpush.msra.mxu0 %v24
  %81 = vmatpush.msra.mxu0 %v23
  %82 = vmatmul.f32.gmra.mxu0 %v17
  %v83 = vpop.f32.mrf.mxu0
  %v84 = vadd.f32 0.0, %v83
  %85 = vmatmul.f32.gmra.mxu0 %v20
  %v86 = vpop.f32.mrf.mxu0
  %v87 = vadd.f32 0.0, %v86
  %88 = vdwg.mxu0
  %89 = vmatpush.msra.mxu0 %v54
  %90 = vmatpush.msra.mxu0 %v53
  %91 = vmatpush.msra.mxu0 %v52
  %92 = vmatpush.msra.mxu0 %v51
  %93 = vmatpush.msra.mxu0 %v50
  %94 = vmatpush.msra.mxu0 %v49
  %95 = vmatpush.msra.mxu0 %v48
  %96 = vmatpush.msra.mxu0 %v47
  %97 = vmatpush.msra.mxu0 %v46
  %98 = vmatpush.msra.mxu0 %v45
  %99 = vmatpush.msra.mxu0 %v44
  %100 = vmatpush.msra.mxu0 %v43
  %101 = vmatpush.msra.mxu0 %v42
  %102 = vmatpush.msra.mxu0 %v41
  %103 = vmatpush.msra.mxu0 %v40
  %104 = vmatpush.msra.mxu0 %v39
  %105 = vmatmul.f32.gmra.mxu0 %v18
  %v106 = vpop.f32.mrf.mxu0
  %v107 = vadd.f32 %v84, %v106
  %108 = vmatmul.f32.gmra.mxu0 %v21
  %v109 = vpop.f32.mrf.mxu0
  %v110 = vadd.f32 %v87, %v109
  %111 = vdwg.mxu0
  %112 = vmatpush.msra.mxu0 0.0
  %113 = vmatpush.msra.mxu0 0.0
  %114 = vmatpush.msra.mxu0 0.0
  %115 = vmatpush.msra.mxu0 0.0
  %116 = vmatpush.msra.mxu0 0.0
  %117 = vmatpush.msra.mxu0 0.0
  %118 = vmatpush.msra.mxu0 0.0
  %119 = vmatpush.msra.mxu0 0.0
  %120 = vmatpush.msra.mxu0 0.0
  %121 = vmatpush.msra.mxu0 0.0
  %122 = vmatpush.msra.mxu0 0.0
  %123 = vmatpush.msra.mxu0 0.0
  %124 = vmatpush.msra.mxu0 %v58
  %125 = vmatpush.msra.mxu0 %v57
  %126 = vmatpush.msra.mxu0 %v56
  %127 = vmatpush.msra.mxu0 %v55
  %128 = vmatmul.f32.gmra.mxu0 %v61
  %v129 = vpop.f32.mrf.mxu0
  %v130 = vadd.f32 %v107, %v129
  %131 = vmatmul.f32.gmra.mxu0 %v64
  %v132 = vpop.f32.mrf.mxu0
  %v133 = vadd.f32 %v110, %v132
  %134 = vdwg.mxu0
  %135 = vadd.xlane.f32.xlu0 %v130
  %v136 = vpop.xlane.xlu0 %135
  %137 = vadd.xlane.f32.xlu0 %v133
  %v138 = vpop.xlane.xlu0 %137
  %v139 = vmul.f32 %v136, 0.0078125
  %v140 = vmul.f32 %v138, 0.0078125
  %v141 = vsub.f32 %v130, %v139
  %v142 = vsub.f32 %v133, %v140
  %v143 = vmul.f32 %v141, %v141
  %v144 = vmul.f32 %v142, %v142
  %145 = vadd.xlane.f32.xlu0 %v143
  %v146 = vpop.xlane.xlu0 %145
  %147 = vadd.xlane.f32.xlu0 %v144
  %v148 = vpop.xlane.xlu0 %147
  %v149 = vmul.f32 %v146, 0.0078125
  %v150 = vmul.f32 %v148, 0.0078125
  %v151 = vld [vmem:[%s2] sm:$0xff]
  %v152 = vld [vmem:[%s2 + $0x8] sm:$0xff]
  %v153 = vadd.f32 %v149, 1e-05
  %v154 = vadd.f32 %v150, 1e-05
  %v155 = vrsqrt.pop %v153
  %v156 = vmul.f32 %v155, %v153
  %v157 = vmul.f32 %v156, %v155
  %v158 = vmul.f32 0.5, %v157
  %v159 = vsub.f32 1.5, %v158
  %v160 = vmul.f32 %v155, %v159
  %vm161 = vweird.f32 %v153
  %vm162 = vweird.f32 %v155
  %vm163 = vmor %vm161, %vm162
  %v164 = vsel %vm163, %v155, %v160
  %v165 = vrsqrt.pop %v154
  %v166 = vmul.f32 %v165, %v154
  %v167 = vmul.f32 %v166, %v165
  %v168 = vmul.f32 0.5, %v167
  %v169 = vsub.f32 1.5, %v168
  %v170 = vmul.f32 %v165, %v169
  %vm171 = vweird.f32 %v154
  %vm172 = vweird.f32 %v165
  %vm173 = vmor %vm171, %vm172
  %v174 = vsel %vm173, %v165, %v170
  %v175 = vmul.f32 %v151, %v164
  %v176 = vmul.f32 %v152, %v174
  %178 = vset.pattern.permute.xlu0 0
  %179 = vperm.xlu0 %178, %v175
  %v180 = vpop.permute.xlu0 %179
  %183 = vset.pattern.permute.xlu0 0
  %184 = vperm.xlu0 %183, %v176
  %v185 = vpop.permute.xlu0 %184
  %v187 = vmul.f32 %v141, %v180
  %v188 = vmul.f32 %v142, %v185
  %v189 = vld [vmem:[%s3] sm:$0xff]
  %v190 = vld [vmem:[%s3 + $0x8] sm:$0xff]
  %192 = vset.pattern.permute.xlu0 0
  %193 = vperm.xlu0 %192, %v189
  %v194 = vpop.permute.xlu0 %193
  %197 = vset.pattern.permute.xlu0 0
  %198 = vperm.xlu0 %197, %v190
  %v199 = vpop.permute.xlu0 %198
  %v201 = vadd.f32 %v187, %v194
  %v202 = vadd.f32 %v188, %v199
  %v203 = vmax.f32 %v201, 0.0
  %v204 = vmax.f32 %v202, 0.0
  %205 = vst [vmem:[%s4] sm:$0xff] %v203
  %206 = vst [vmem:[%s4 + $0x8] sm:$0xff] %v204
  // Predicated region
  $region18: #{resnet_generator_forward.25} parent=0 // pred_check
    _
  $region19: #{resnet_generator_forward.25} parent=0 // pred_check_branch
    %208 = sbr.rel (0) target = $region21
  $region20: #{resnet_generator_forward.25} parent=0 // pred_region
    _
  $region21: #{resnet_generator_forward.25} parent=0 // pred_fallthru
    _
  // Predicated region
  $region22: #{resnet_generator_forward.25} parent=0 // pred_check
    _
  $region23: #{resnet_generator_forward.25} parent=0 // pred_check_branch
    %210 = sbr.rel (0) target = $region25
  $region24: #{resnet_generator_forward.25} parent=0 // pred_region
    _
  $region25: #{resnet_generator_forward.25} parent=0 // pred_fallthru
    _

// kernel: resnet_generator_forward.26
$region0: #{resnet_generator_forward.26}
  #allocation0 [shape = 'u32[]', space=smem, size = 0x4, offset = 0x4, fixed_abs, tag = 'smem constant byte address 0x4 - core index']
  #allocation1 [shape = 'u32[72,128]{1,0:T(1,128)}', space=vmem, size = 0x9000, scoped, tag = 'internal scratch']
  %s0 = inlined_call_operand.vmem [shape: f32[8,144], index: 0, kind: input, shape index: {}]
  %s1 = inlined_call_operand.vmem [shape: f32[144,512], index: 1, kind: input, shape index: {}]
  %s2 = inlined_call_operand.vmem [shape: f32[8,1], index: 2, kind: input, shape index: {}]
  %s3 = inlined_call_operand.vmem [shape: f32[8,1], index: 3, kind: input, shape index: {}]
  %s4 = inlined_call_operand.vmem [shape: f32[8,512], index: 4, kind: output, shape index: {}]
  %s5 = sld [smem:[#allocation0]]
  $region26: #{resnet_generator_forward.26} parent=0
    _
  %s7 = ssub.s32 1, %s5
  %s8 = scalar_select 0, %s7, %s5
  // Predicated region
  $region2: #{resnet_generator_forward.26} parent=0 // pred_check
    _
  $region3: #{resnet_generator_forward.26} parent=0 // pred_check_branch
    %10 = sbr.rel (0) target = $region5
  $region4: #{resnet_generator_forward.26} parent=0 // pred_region
    _
  $region5: #{resnet_generator_forward.26} parent=0 // pred_fallthru
    _
  // Predicated region
  $region6: #{resnet_generator_forward.26} parent=0 // pred_check
    _
  $region7: #{resnet_generator_forward.26} parent=0 // pred_check_branch
    %12 = sbr.rel (0) target = $region9
  $region8: #{resnet_generator_forward.26} parent=0 // pred_region
    _
  $region9: #{resnet_generator_forward.26} parent=0 // pred_fallthru
    _
  // Predicated region
  $region10: #{resnet_generator_forward.26} parent=0 // pred_check
    _
  $region11: #{resnet_generator_forward.26} parent=0 // pred_check_branch
    %14 = sbr.rel (0) target = $region13
  $region12: #{resnet_generator_forward.26} parent=0 // pred_region
    _
  $region13: #{resnet_generator_forward.26} parent=0 // pred_fallthru
    _
  // Predicated region
  $region14: #{resnet_generator_forward.26} parent=0 // pred_check
    _
  $region15: #{resnet_generator_forward.26} parent=0 // pred_check_branch
    %16 = sbr.rel (0) target = $region17
  $region16: #{resnet_generator_forward.26} parent=0 // pred_region
    _
  $region17: #{resnet_generator_forward.26} parent=0 // pred_fallthru
    _
  %v17 = vld [vmem:[%s0] sm:$0xff]
  %v18 = vld [vmem:[%s0 + $0x8] sm:$0xff]
  %v19 = vld [vmem:[%s1] sm:$0xff]
  %v20 = vld [vmem:[%s1 + $0x8] sm:$0xff]
  %v21 = vld [vmem:[%s1 + $0x10] sm:$0xff]
  %v22 = vld [vmem:[%s1 + $0x18] sm:$0xff]
  %v23 = vld [vmem:[%s1 + $0x20] sm:$0xff]
  %v24 = vld [vmem:[%s1 + $0x28] sm:$0xff]
  %v25 = vld [vmem:[%s1 + $0x30] sm:$0xff]
  %v26 = vld [vmem:[%s1 + $0x38] sm:$0xff]
  %v27 = vld [vmem:[%s1 + $0x40] sm:$0xff]
  %v28 = vld [vmem:[%s1 + $0x48] sm:$0xff]
  %v29 = vld [vmem:[%s1 + $0x50] sm:$0xff]
  %v30 = vld [vmem:[%s1 + $0x58] sm:$0xff]
  %v31 = vld [vmem:[%s1 + $0x60] sm:$0xff]
  %v32 = vld [vmem:[%s1 + $0x68] sm:$0xff]
  %v33 = vld [vmem:[%s1 + $0x70] sm:$0xff]
  %v34 = vld [vmem:[%s1 + $0x78] sm:$0xff]
  %v35 = vld [vmem:[%s1 + $0x80] sm:$0xff]
  %v36 = vld [vmem:[%s1 + $0x88] sm:$0xff]
  %v37 = vld [vmem:[%s1 + $0x90] sm:$0xff]
  %v38 = vld [vmem:[%s1 + $0x98] sm:$0xff]
  %v39 = vld [vmem:[%s1 + $0xa0] sm:$0xff]
  %v40 = vld [vmem:[%s1 + $0xa8] sm:$0xff]
  %v41 = vld [vmem:[%s1 + $0xb0] sm:$0xff]
  %v42 = vld [vmem:[%s1 + $0xb8] sm:$0xff]
  %v43 = vld [vmem:[%s1 + $0xc0] sm:$0xff]
  %v44 = vld [vmem:[%s1 + $0xc8] sm:$0xff]
  %v45 = vld [vmem:[%s1 + $0xd0] sm:$0xff]
  %v46 = vld [vmem:[%s1 + $0xd8] sm:$0xff]
  %v47 = vld [vmem:[%s1 + $0xe0] sm:$0xff]
  %v48 = vld [vmem:[%s1 + $0xe8] sm:$0xff]
  %v49 = vld [vmem:[%s1 + $0xf0] sm:$0xff]
  %v50 = vld [vmem:[%s1 + $0xf8] sm:$0xff]
  %v51 = vld [vmem:[%s1 + $0x100] sm:$0xff]
  %v52 = vld [vmem:[%s1 + $0x108] sm:$0xff]
  %v53 = vld [vmem:[%s1 + $0x110] sm:$0xff]
  %v54 = vld [vmem:[%s1 + $0x118] sm:$0xff]
  %v55 = vld [vmem:[%s1 + $0x120] sm:$0xff]
  %v56 = vld [vmem:[%s1 + $0x128] sm:$0xff]
  %v57 = vld [vmem:[%s1 + $0x130] sm:$0xff]
  %v58 = vld [vmem:[%s1 + $0x138] sm:$0xff]
  %v59 = vld [vmem:[%s1 + $0x140] sm:$0xff]
  %v60 = vld [vmem:[%s1 + $0x148] sm:$0xff]
  %v61 = vld [vmem:[%s1 + $0x150] sm:$0xff]
  %v62 = vld [vmem:[%s1 + $0x158] sm:$0xff]
  %v63 = vld [vmem:[%s1 + $0x160] sm:$0xff]
  %v64 = vld [vmem:[%s1 + $0x168] sm:$0xff]
  %v65 = vld [vmem:[%s1 + $0x170] sm:$0xff]
  %v66 = vld [vmem:[%s1 + $0x178] sm:$0xff]
  %v67 = vld [vmem:[%s1 + $0x180] sm:$0xff]
  %v68 = vld [vmem:[%s1 + $0x188] sm:$0xff]
  %v69 = vld [vmem:[%s1 + $0x190] sm:$0xff]
  %v70 = vld [vmem:[%s1 + $0x198] sm:$0xff]
  %v71 = vld [vmem:[%s1 + $0x1a0] sm:$0xff]
  %v72 = vld [vmem:[%s1 + $0x1a8] sm:$0xff]
  %v73 = vld [vmem:[%s1 + $0x1b0] sm:$0xff]
  %v74 = vld [vmem:[%s1 + $0x1b8] sm:$0xff]
  %v75 = vld [vmem:[%s1 + $0x1c0] sm:$0xff]
  %v76 = vld [vmem:[%s1 + $0x1c8] sm:$0xff]
  %v77 = vld [vmem:[%s1 + $0x1d0] sm:$0xff]
  %v78 = vld [vmem:[%s1 + $0x1d8] sm:$0xff]
  %v79 = vld [vmem:[%s1 + $0x1e0] sm:$0xff]
  %v80 = vld [vmem:[%s1 + $0x1e8] sm:$0xff]
  %v81 = vld [vmem:[%s1 + $0x1f0] sm:$0xff]
  %v82 = vld [vmem:[%s1 + $0x1f8] sm:$0xff]
  %v83 = vld [vmem:[%s1 + $0x200] sm:$0xff]
  %v84 = vld [vmem:[%s1 + $0x208] sm:$0xff]
  %v85 = vld [vmem:[%s1 + $0x210] sm:$0xff]
  %v86 = vld [vmem:[%s1 + $0x218] sm:$0xff]
  %v87 = vld [vmem:[%s1 + $0x220] sm:$0xff]
  %v88 = vld [vmem:[%s1 + $0x228] sm:$0xff]
  %v89 = vld [vmem:[%s1 + $0x230] sm:$0xff]
  %v90 = vld [vmem:[%s1 + $0x238] sm:$0xff]
  %vm91 = vcmask 130048
  %v93 = vsel %vm91, %v18, 0
  %95 = vmatpush.msra.mxu0 %v79
  %96 = vmatpush.msra.mxu0 %v75
  %97 = vmatpush.msra.mxu0 %v71
  %98 = vmatpush.msra.mxu0 %v67
  %99 = vmatpush.msra.mxu0 %v63
  %100 = vmatpush.msra.mxu0 %v59
  %101 = vmatpush.msra.mxu0 %v55
  %102 = vmatpush.msra.mxu0 %v51
  %103 = vmatpush.msra.mxu0 %v47
  %104 = vmatpush.msra.mxu0 %v43
  %105 = vmatpush.msra.mxu0 %v39
  %106 = vmatpush.msra.mxu0 %v35
  %107 = vmatpush.msra.mxu0 %v31
  %108 = vmatpush.msra.mxu0 %v27
  %109 = vmatpush.msra.mxu0 %v23
  %110 = vmatpush.msra.mxu0 %v19
  %111 = vmatmul.f32.gmra.mxu0 %v17
  %v112 = vpop.f32.mrf.mxu0
  %v113 = vadd.f32 0.0, %v112
  %114 = vdwg.mxu0
  %115 = vmatpush.msra.mxu0 0.0
  %116 = vmatpush.msra.mxu0 0.0
  %117 = vmatpush.msra.mxu0 0.0
  %118 = vmatpush.msra.mxu0 0.0
  %119 = vmatpush.msra.mxu0 0.0
  %120 = vmatpush.msra.mxu0 0.0
  %121 = vmatpush.msra.mxu0 0.0
  %122 = vmatpush.msra.mxu0 0.0
  %123 = vmatpush.msra.mxu0 0.0
  %124 = vmatpush.msra.mxu0 0.0
  %125 = vmatpush.msra.mxu0 0.0
  %126 = vmatpush.msra.mxu0 0.0
  %127 = vmatpush.msra.mxu0 0.0
  %128 = vmatpush.msra.mxu0 0.0
  %129 = vmatpush.msra.mxu0 %v87
  %130 = vmatpush.msra.mxu0 %v83
  %131 = vmatmul.f32.gmra.mxu0 %v93
  %v132 = vpop.f32.mrf.mxu0
  %v133 = vadd.f32 %v113, %v132
  %134 = vdwg.mxu0
  %135 = vmatpush.msra.mxu0 %v80
  %136 = vmatpush.msra.mxu0 %v76
  %137 = vmatpush.msra.mxu0 %v72
  %138 = vmatpush.msra.mxu0 %v68
  %139 = vmatpush.msra.mxu0 %v64
  %140 = vmatpush.msra.mxu0 %v60
  %141 = vmatpush.msra.mxu0 %v56
  %142 = vmatpush.msra.mxu0 %v52
  %143 = vmatpush.msra.mxu0 %v48
  %144 = vmatpush.msra.mxu0 %v44
  %145 = vmatpush.msra.mxu0 %v40
  %146 = vmatpush.msra.mxu0 %v36
  %147 = vmatpush.msra.mxu0 %v32
  %148 = vmatpush.msra.mxu0 %v28
  %149 = vmatpush.msra.mxu0 %v24
  %150 = vmatpush.msra.mxu0 %v20
  %151 = vmatmul.f32.gmra.mxu0 %v17
  %v152 = vpop.f32.mrf.mxu0
  %v153 = vadd.f32 0.0, %v152
  %154 = vdwg.mxu0
  %155 = vmatpush.msra.mxu0 0.0
  %156 = vmatpush.msra.mxu0 0.0
  %157 = vmatpush.msra.mxu0 0.0
  %158 = vmatpush.msra.mxu0 0.0
  %159 = vmatpush.msra.mxu0 0.0
  %160 = vmatpush.msra.mxu0 0.0
  %161 = vmatpush.msra.mxu0 0.0
  %162 = vmatpush.msra.mxu0 0.0
  %163 = vmatpush.msra.mxu0 0.0
  %164 = vmatpush.msra.mxu0 0.0
  %165 = vmatpush.msra.mxu0 0.0
  %166 = vmatpush.msra.mxu0 0.0
  %167 = vmatpush.msra.mxu0 0.0
  %168 = vmatpush.msra.mxu0 0.0
  %169 = vmatpush.msra.mxu0 %v88
  %170 = vmatpush.msra.mxu0 %v84
  %171 = vmatmul.f32.gmra.mxu0 %v93
  %v172 = vpop.f32.mrf.mxu0
  %v173 = vadd.f32 %v153, %v172
  %174 = vdwg.mxu0
  %175 = vmatpush.msra.mxu0 %v81
  %176 = vmatpush.msra.mxu0 %v77
  %177 = vmatpush.msra.mxu0 %v73
  %178 = vmatpush.msra.mxu0 %v69
  %179 = vmatpush.msra.mxu0 %v65
  %180 = vmatpush.msra.mxu0 %v61
  %181 = vmatpush.msra.mxu0 %v57
  %182 = vmatpush.msra.mxu0 %v53
  %183 = vmatpush.msra.mxu0 %v49
  %184 = vmatpush.msra.mxu0 %v45
  %185 = vmatpush.msra.mxu0 %v41
  %186 = vmatpush.msra.mxu0 %v37
  %187 = vmatpush.msra.mxu0 %v33
  %188 = vmatpush.msra.mxu0 %v29
  %189 = vmatpush.msra.mxu0 %v25
  %190 = vmatpush.msra.mxu0 %v21
  %191 = vmatmul.f32.gmra.mxu0 %v17
  %v192 = vpop.f32.mrf.mxu0
  %v193 = vadd.f32 0.0, %v192
  %194 = vdwg.mxu0
  %195 = vmatpush.msra.mxu0 0.0
  %196 = vmatpush.msra.mxu0 0.0
  %197 = vmatpush.msra.mxu0 0.0
  %198 = vmatpush.msra.mxu0 0.0
  %199 = vmatpush.msra.mxu0 0.0
  %200 = vmatpush.msra.mxu0 0.0
  %201 = vmatpush.msra.mxu0 0.0
  %202 = vmatpush.msra.mxu0 0.0
  %203 = vmatpush.msra.mxu0 0.0
  %204 = vmatpush.msra.mxu0 0.0
  %205 = vmatpush.msra.mxu0 0.0
  %206 = vmatpush.msra.mxu0 0.0
  %207 = vmatpush.msra.mxu0 0.0
  %208 = vmatpush.msra.mxu0 0.0
  %209 = vmatpush.msra.mxu0 %v89
  %210 = vmatpush.msra.mxu0 %v85
  %211 = vmatmul.f32.gmra.mxu0 %v93
  %v212 = vpop.f32.mrf.mxu0
  %v213 = vadd.f32 %v193, %v212
  %214 = vdwg.mxu0
  %215 = vmatpush.msra.mxu0 %v82
  %216 = vmatpush.msra.mxu0 %v78
  %217 = vmatpush.msra.mxu0 %v74
  %218 = vmatpush.msra.mxu0 %v70
  %219 = vmatpush.msra.mxu0 %v66
  %220 = vmatpush.msra.mxu0 %v62
  %221 = vmatpush.msra.mxu0 %v58
  %222 = vmatpush.msra.mxu0 %v54
  %223 = vmatpush.msra.mxu0 %v50
  %224 = vmatpush.msra.mxu0 %v46
  %225 = vmatpush.msra.mxu0 %v42
  %226 = vmatpush.msra.mxu0 %v38
  %227 = vmatpush.msra.mxu0 %v34
  %228 = vmatpush.msra.mxu0 %v30
  %229 = vmatpush.msra.mxu0 %v26
  %230 = vmatpush.msra.mxu0 %v22
  %231 = vmatmul.f32.gmra.mxu0 %v17
  %v232 = vpop.f32.mrf.mxu0
  %v233 = vadd.f32 0.0, %v232
  %234 = vdwg.mxu0
  %235 = vmatpush.msra.mxu0 0.0
  %236 = vmatpush.msra.mxu0 0.0
  %237 = vmatpush.msra.mxu0 0.0
  %238 = vmatpush.msra.mxu0 0.0
  %239 = vmatpush.msra.mxu0 0.0
  %240 = vmatpush.msra.mxu0 0.0
  %241 = vmatpush.msra.mxu0 0.0
  %242 = vmatpush.msra.mxu0 0.0
  %243 = vmatpush.msra.mxu0 0.0
  %244 = vmatpush.msra.mxu0 0.0
  %245 = vmatpush.msra.mxu0 0.0
  %246 = vmatpush.msra.mxu0 0.0
  %247 = vmatpush.msra.mxu0 0.0
  %248 = vmatpush.msra.mxu0 0.0
  %249 = vmatpush.msra.mxu0 %v90
  %250 = vmatpush.msra.mxu0 %v86
  %251 = vmatmul.f32.gmra.mxu0 %v93
  %v252 = vpop.f32.mrf.mxu0
  %v253 = vadd.f32 %v233, %v252
  %254 = vdwg.mxu0
  %v255 = vadd.f32 %v133, %v173
  %v256 = vadd.f32 %v255, %v213
  %v257 = vadd.f32 %v256, %v253
  %258 = vadd.xlane.f32.xlu0 %v257
  %v259 = vpop.xlane.xlu0 %258
  %v260 = vmul.f32 %v259, 0.001953125
  %v261 = vsub.f32 %v133, %v260
  %v262 = vsub.f32 %v173, %v260
  %v263 = vsub.f32 %v213, %v260
  %v264 = vsub.f32 %v253, %v260
  %v265 = vmul.f32 %v261, %v261
  %v266 = vmul.f32 %v262, %v262
  %v267 = vmul.f32 %v263, %v263
  %v268 = vmul.f32 %v264, %v264
  %v269 = vadd.f32 %v265, %v266
  %v270 = vadd.f32 %v269, %v267
  %v271 = vadd.f32 %v270, %v268
  %272 = vadd.xlane.f32.xlu0 %v271
  %v273 = vpop.xlane.xlu0 %272
  %v274 = vmul.f32 %v273, 0.001953125
  %v275 = vld [vmem:[%s2] sm:$0xff]
  %v276 = vadd.f32 %v274, 1e-05
  %v277 = vrsqrt.pop %v276
  %v278 = vmul.f32 %v277, %v276
  %v279 = vmul.f32 %v278, %v277
  %v280 = vmul.f32 0.5, %v279
  %v281 = vsub.f32 1.5, %v280
  %v282 = vmul.f32 %v277, %v281
  %vm283 = vweird.f32 %v276
  %vm284 = vweird.f32 %v277
  %vm285 = vmor %vm283, %vm284
  %v286 = vsel %vm285, %v277, %v282
  %v287 = vmul.f32 %v275, %v286
  %289 = vset.pattern.permute.xlu0 0
  %290 = vperm.xlu0 %289, %v287
  %v291 = vpop.permute.xlu0 %290
  %v293 = vmul.f32 %v261, %v291
  %v294 = vmul.f32 %v262, %v291
  %v295 = vmul.f32 %v263, %v291
  %v296 = vmul.f32 %v264, %v291
  %v297 = vld [vmem:[%s3] sm:$0xff]
  %299 = vset.pattern.permute.xlu0 0
  %300 = vperm.xlu0 %299, %v297
  %v301 = vpop.permute.xlu0 %300
  %v303 = vadd.f32 %v293, %v301
  %v304 = vadd.f32 %v294, %v301
  %v305 = vadd.f32 %v295, %v301
  %v306 = vadd.f32 %v296, %v301
  %v307 = vmax.f32 %v303, 0.0
  %v308 = vmax.f32 %v304, 0.0
  %v309 = vmax.f32 %v305, 0.0
  %v310 = vmax.f32 %v306, 0.0
  %311 = vst [vmem:[%s4] sm:$0xff] %v307
  %312 = vst [vmem:[%s4 + $0x8] sm:$0xff] %v308
  %313 = vst [vmem:[%s4 + $0x10] sm:$0xff] %v309
  %314 = vst [vmem:[%s4 + $0x18] sm:$0xff] %v310
  // Predicated region
  $region18: #{resnet_generator_forward.26} parent=0 // pred_check
    _
  $region19: #{resnet_generator_forward.26} parent=0 // pred_check_branch
    %316 = sbr.rel (0) target = $region21
  $region20: #{resnet_generator_forward.26} parent=0 // pred_region
    _
  $region21: #{resnet_generator_forward.26} parent=0 // pred_fallthru
    _
  // Predicated region
  $region22: #{resnet_generator_forward.26} parent=0 // pred_check
    _
  $region23: #{resnet_generator_forward.26} parent=0 // pred_check_branch
    %318 = sbr.rel (0) target = $region25
  $region24: #{resnet_generator_forward.26} parent=0 // pred_region
    _
  $region25: #{resnet_generator_forward.26} parent=0 // pred_fallthru
    _

// kernel: resnet_generator_forward.27
$region0: #{resnet_generator_forward.27}
  #allocation0 [shape = 'u32[]', space=smem, size = 0x4, offset = 0x4, fixed_abs, tag = 'smem constant byte address 0x4 - core index']
  #allocation1 [shape = 'u32[72,128]{1,0:T(1,128)}', space=vmem, size = 0x9000, scoped, tag = 'internal scratch']
  %s0 = inlined_call_operand.vmem [shape: f32[3,392], index: 0, kind: input, shape index: {}]
  %s1 = inlined_call_operand.vmem [shape: f32[392,512], index: 1, kind: input, shape index: {}]
  %s2 = inlined_call_operand.vmem [shape: f32[3,1], index: 2, kind: input, shape index: {}]
  %s3 = inlined_call_operand.vmem [shape: f32[3,512], index: 3, kind: output, shape index: {}]
  %s4 = sld [smem:[#allocation0]]
  $region68: #{resnet_generator_forward.27} parent=0
    _
  %s6 = ssub.s32 1, %s4
  %s7 = scalar_select 0, %s6, %s4
  $region1: #{resnet_generator_forward.27} parent=0
    #allocation2 [shape = 'u8[802816]{0}', space=vmem, size = 0xc4000, scoped, tag = 'input window, operand 1']
    loop: start=0, step=1, limit=4
    $region2: #{resnet_generator_forward.27} parent=1 // loop_pre_header
      _
    $region3: #{resnet_generator_forward.27} parent=1 // loop_header
      %s9 = sphi 0, %s13
      %p10 = scmp.ge.s32.totalorder %s9, 4
      %s17 = sphi 0, %s17
      %s19 = sphi 0, %s17
      %s20 = sphi 0, %s19
      %s34 = sphi 0, %s20
      %s40 = sphi 0, %s42
      %s43 = sphi 0, %s40
      %s44 = sphi 0, %s43
      %s60 = sphi 0, %s44
      %s64 = sphi 0, %s64
      %s66 = sphi 0, %s64
      %s67 = sphi 0, %s66
      %s81 = sphi 0, %s67
      %s87 = sphi 0, %s89
      %s90 = sphi 0, %s87
      %s91 = sphi 0, %s90
      %s107 = sphi 0, %s91
    $region4: #{resnet_generator_forward.27} parent=1 // loop_header_branch
      %12 = sbr.rel (%p10) target = $region8
    $region5: #{resnet_generator_forward.27} parent=1 // loop_body
      %s14 = ssub.s32 %s9, 1
      %s15 = ssub.s32 %s9, 2
      %s16 = sadd.s32 %s9, 1
      %s18 = sadd.s32 %s17, 1
      %p21 = scmp.eq.s32.totalorder %s9, 1
      %p22 = scmp.ne.s32.totalorder %s17, %s19
      %p23 = scmp.eq.s32.totalorder %s9, 0
      %p24 = por %p22, %p23
      %p25 = scmp.ne.s32.totalorder %s17, %s19
      %p26 = scmp.eq.s32.totalorder %s14, 1
      %p27 = por %p25, %p26
      %p28 = scmp.ne.s32.totalorder %s19, %s20
      %p29 = scmp.eq.s32.totalorder %s14, 0
      %p30 = por %p28, %p29
      %p31 = scmp.ne.s32.totalorder %s19, %s20
      %p32 = scmp.eq.s32.totalorder %s15, 1
      %p33 = por %p31, %p32
      %p35 = scmp.ne.s32.totalorder %s20, %s34
      %p36 = scmp.eq.s32.totalorder %s15, 0
      %p37 = por %p35, %p36
      %s38 = ssub.s32 %s9, %s16
      %p39 = scmp.eq.s32.totalorder %s38, 0
      %s41 = sadd.s32 %s40, 1
      %s42 = scalar_select %p39, %s40, %s41
      %p45 = pneg %p39
      %p46 = scmp.eq.s32.totalorder %s9, 1
      %p47 = por %p45, %p46
      %p48 = scmp.ne.s32.totalorder %s40, %s43
      %p49 = scmp.eq.s32.totalorder %s9, 0
      %p50 = por %p48, %p49
      %p51 = scmp.ne.s32.totalorder %s40, %s43
      %p52 = scmp.eq.s32.totalorder %s14, 1
      %p53 = por %p51, %p52
      %p54 = scmp.ne.s32.totalorder %s43, %s44
      %p55 = scmp.eq.s32.totalorder %s14, 0
      %p56 = por %p54, %p55
      %p57 = scmp.ne.s32.totalorder %s43, %s44
      %p58 = scmp.eq.s32.totalorder %s15, 1
      %p59 = por %p57, %p58
      %p61 = scmp.ne.s32.totalorder %s44, %s60
      %p62 = scmp.eq.s32.totalorder %s15, 0
      %p63 = por %p61, %p62
      %s65 = sadd.s32 %s64, 1
      %p68 = scmp.eq.s32.totalorder %s9, 1
      %p69 = scmp.ne.s32.totalorder %s64, %s66
      %p70 = scmp.eq.s32.totalorder %s9, 0
      %p71 = por %p69, %p70
      %p72 = scmp.ne.s32.totalorder %s64, %s66
      %p73 = scmp.eq.s32.totalorder %s14, 1
      %p74 = por %p72, %p73
      %p75 = scmp.ne.s32.totalorder %s66, %s67
      %p76 = scmp.eq.s32.totalorder %s14, 0
      %p77 = por %p75, %p76
      %p78 = scmp.ne.s32.totalorder %s66, %s67
      %p79 = scmp.eq.s32.totalorder %s15, 1
      %p80 = por %p78, %p79
      %p82 = scmp.ne.s32.totalorder %s67, %s81
      %p83 = scmp.eq.s32.totalorder %s15, 0
      %p84 = por %p82, %p83
      %s85 = ssub.s32 %s9, %s16
      %p86 = scmp.eq.s32.totalorder %s85, 0
      %s88 = sadd.s32 %s87, 1
      %s89 = scalar_select %p86, %s87, %s88
      %p92 = pneg %p86
      %p93 = scmp.eq.s32.totalorder %s9, 1
      %p94 = por %p92, %p93
      %p95 = scmp.ne.s32.totalorder %s87, %s90
      %p96 = scmp.eq.s32.totalorder %s9, 0
      %p97 = por %p95, %p96
      %p98 = scmp.ne.s32.totalorder %s87, %s90
      %p99 = scmp.eq.s32.totalorder %s14, 1
      %p100 = por %p98, %p99
      %p101 = scmp.ne.s32.totalorder %s90, %s91
      %p102 = scmp.eq.s32.totalorder %s14, 0
      %p103 = por %p101, %p102
      %p104 = scmp.ne.s32.totalorder %s90, %s91
      %p105 = scmp.eq.s32.totalorder %s15, 1
      %p106 = por %p104, %p105
      %p108 = scmp.ne.s32.totalorder %s91, %s107
      %p109 = scmp.eq.s32.totalorder %s15, 0
      %p110 = por %p108, %p109
      %p111 = scmp.le.s32.totalorder 1, %s9
      %p112 = scmp.lt.s32.totalorder %s9, 3
      %p113 = pnand %p111, %p112
      %p114 = pneg %p113
      // Predicated region
      $region9: #{resnet_generator_forward.27} parent=5 // pred_check
        _
      $region10: #{resnet_generator_forward.27} parent=5 // pred_check_branch
        %116 = sbr.rel (%p113) target = $region12
      $region11: #{resnet_generator_forward.27} parent=5 // pred_region
        %s117 = ssub.s32 %s9, 1
        // Predicated region
        $region13: #{resnet_generator_forward.27} parent=11 // pred_check
          %p118 = pneg %p30
        $region14: #{resnet_generator_forward.27} parent=11 // pred_check_branch
          %120 = sbr.rel (%p118) target = $region16
        $region15: #{resnet_generator_forward.27} parent=11 // pred_region
          _
        $region16: #{resnet_generator_forward.27} parent=11 // pred_fallthru
          _
        // Predicated region
        $region17: #{resnet_generator_forward.27} parent=11 // pred_check
          %p121 = pneg %p77
        $region18: #{resnet_generator_forward.27} parent=11 // pred_check_branch
          %123 = sbr.rel (%p121) target = $region20
        $region19: #{resnet_generator_forward.27} parent=11 // pred_region
          _
        $region20: #{resnet_generator_forward.27} parent=11 // pred_fallthru
          _
      $region12: #{resnet_generator_forward.27} parent=5 // pred_fallthru
        _
      %p124 = scmp.lt.s32.totalorder %s9, 2
      // Predicated region
      $region21: #{resnet_generator_forward.27} parent=5 // pred_check
        %p125 = pneg %p124
      $region22: #{resnet_generator_forward.27} parent=5 // pred_check_branch
        %127 = sbr.rel (%p125) target = $region24
      $region23: #{resnet_generator_forward.27} parent=5 // pred_region
        // Predicated region
        $region25: #{resnet_generator_forward.27} parent=23 // pred_check
          %p128 = pneg %p50
        $region26: #{resnet_generator_forward.27} parent=23 // pred_check_branch
          %130 = sbr.rel (%p128) target = $region28
        $region27: #{resnet_generator_forward.27} parent=23 // pred_region
          %s131 = sand.u32 %s40, 1
          %s132 = sand.u32 %s40, 1
          %s133 = smul.addr %s132, 784
          %s134 = scalar_lea.vmem [#allocation2], %s133
          %s135 = smul.u32 2, %s9
          %s136 = smul.addr %s135, 8
          %s137 = scalar_lea.vmem %s1, %s136
          // Predicated region
          $region29: #{resnet_generator_forward.27} parent=27 // pred_check
            _
          $region30: #{resnet_generator_forward.27} parent=27 // pred_check_branch
            %139 = sbr.rel (0) target = $region32
          $region31: #{resnet_generator_forward.27} parent=27 // pred_region
            // Predicated region
            $region33: #{resnet_generator_forward.27} parent=31 // pred_check
              _
            $region34: #{resnet_generator_forward.27} parent=31 // pred_check_branch
              %141 = sbr.rel (0) target = $region36
            $region35: #{resnet_generator_forward.27} parent=31 // pred_region
              loop: start=0, step=1, limit=1
              $region37: #{resnet_generator_forward.27} parent=35 // loop_pre_header
                _
              $region38: #{resnet_generator_forward.27} parent=35 // loop_header
                %s143 = sphi 0, %s147
                %p144 = scmp.ge.s32.totalorder %s143, 1
                %s148 = sphi %s137, %s137
                %s149 = sphi %s134, %s134
              $region39: #{resnet_generator_forward.27} parent=35 // loop_header_branch
                %146 = sbr.rel (%p144) target = $region43
              $region40: #{resnet_generator_forward.27} parent=35 // loop_body
                %v150 = vld [vmem:[%s148] sm:$0xff]
                %151 = vst [vmem:[%s149] sm:$0xff] %v150
                %v152 = vld [vmem:[%s148 + $0x8] sm:$0xff]
                %153 = vst [vmem:[%s149 + $0x8] sm:$0xff] %v152
                %v154 = vld [vmem:[%s148 + $0x20] sm:$0xff]
                %155 = vst [vmem:[%s149 + $0x10] sm:$0xff] %v154
                %v156 = vld [vmem:[%s148 + $0x28] sm:$0xff]
                %157 = vst [vmem:[%s149 + $0x18] sm:$0xff] %v156
                %v158 = vld [vmem:[%s148 + $0x40] sm:$0xff]
                %159 = vst [vmem:[%s149 + $0x20] sm:$0xff] %v158
                %v160 = vld [vmem:[%s148 + $0x48] sm:$0xff]
                %161 = vst [vmem:[%s149 + $0x28] sm:$0xff] %v160
                %v162 = vld [vmem:[%s148 + $0x60] sm:$0xff]
                %163 = vst [vmem:[%s149 + $0x30] sm:$0xff] %v162
                %v164 = vld [vmem:[%s148 + $0x68] sm:$0xff]
                %165 = vst [vmem:[%s149 + $0x38] sm:$0xff] %v164
                %v166 = vld [vmem:[%s148 + $0x80] sm:$0xff]
                %167 = vst [vmem:[%s149 + $0x40] sm:$0xff] %v166
                %v168 = vld [vmem:[%s148 + $0x88] sm:$0xff]
                %169 = vst [vmem:[%s149 + $0x48] sm:$0xff] %v168
                %v170 = vld [vmem:[%s148 + $0xa0] sm:$0xff]
                %171 = vst [vmem:[%s149 + $0x50] sm:$0xff] %v170
                %v172 = vld [vmem:[%s148 + $0xa8] sm:$0xff]
                %173 = vst [vmem:[%s149 + $0x58] sm:$0xff] %v172
                %v174 = vld [vmem:[%s148 + $0xc0] sm:$0xff]
                %175 = vst [vmem:[%s149 + $0x60] sm:$0xff] %v174
                %v176 = vld [vmem:[%s148 + $0xc8] sm:$0xff]
                %177 = vst [vmem:[%s149 + $0x68] sm:$0xff] %v176
                %v178 = vld [vmem:[%s148 + $0xe0] sm:$0xff]
                %179 = vst [vmem:[%s149 + $0x70] sm:$0xff] %v178
                %v180 = vld [vmem:[%s148 + $0xe8] sm:$0xff]
                %181 = vst [vmem:[%s149 + $0x78] sm:$0xff] %v180
                %v182 = vld [vmem:[%s148 + $0x100] sm:$0xff]
                %183 = vst [vmem:[%s149 + $0x80] sm:$0xff] %v182
                %v184 = vld [vmem:[%s148 + $0x108] sm:$0xff]
                %185 = vst [vmem:[%s149 + $0x88] sm:$0xff] %v184
                %v186 = vld [vmem:[%s148 + $0x120] sm:$0xff]
                %187 = vst [vmem:[%s149 + $0x90] sm:$0xff] %v186
                %v188 = vld [vmem:[%s148 + $0x128] sm:$0xff]
                %189 = vst [vmem:[%s149 + $0x98] sm:$0xff] %v188
                %v190 = vld [vmem:[%s148 + $0x140] sm:$0xff]
                %191 = vst [vmem:[%s149 + $0xa0] sm:$0xff] %v190
                %v192 = vld [vmem:[%s148 + $0x148] sm:$0xff]
                %193 = vst [vmem:[%s149 + $0xa8] sm:$0xff] %v192
                %v194 = vld [vmem:[%s148 + $0x160] sm:$0xff]
                %195 = vst [vmem:[%s149 + $0xb0] sm:$0xff] %v194
                %v196 = vld [vmem:[%s148 + $0x168] sm:$0xff]
                %197 = vst [vmem:[%s149 + $0xb8] sm:$0xff] %v196
                %v198 = vld [vmem:[%s148 + $0x180] sm:$0xff]
                %199 = vst [vmem:[%s149 + $0xc0] sm:$0xff] %v198
                %v200 = vld [vmem:[%s148 + $0x188] sm:$0xff]
                %201 = vst [vmem:[%s149 + $0xc8] sm:$0xff] %v200
                %v202 = vld [vmem:[%s148 + $0x1a0] sm:$0xff]
                %203 = vst [vmem:[%s149 + $0xd0] sm:$0xff] %v202
                %v204 = vld [vmem:[%s148 + $0x1a8] sm:$0xff]
                %205 = vst [vmem:[%s149 + $0xd8] sm:$0xff] %v204
                %v206 = vld [vmem:[%s148 + $0x1c0] sm:$0xff]
                %207 = vst [vmem:[%s149 + $0xe0] sm:$0xff] %v206
                %v208 = vld [vmem:[%s148 + $0x1c8] sm:$0xff]
                %209 = vst [vmem:[%s149 + $0xe8] sm:$0xff] %v208
                %v210 = vld [vmem:[%s148 + $0x1e0] sm:$0xff]
                %211 = vst [vmem:[%s149 + $0xf0] sm:$0xff] %v210
                %v212 = vld [vmem:[%s148 + $0x1e8] sm:$0xff]
                %213 = vst [vmem:[%s149 + $0xf8] sm:$0xff] %v212
                %v214 = vld [vmem:[%s148 + $0x200] sm:$0xff]
                %215 = vst [vmem:[%s149 + $0x100] sm:$0xff] %v214
                %v216 = vld [vmem:[%s148 + $0x208] sm:$0xff]
                %217 = vst [vmem:[%s149 + $0x108] sm:$0xff] %v216
                %v218 = vld [vmem:[%s148 + $0x220] sm:$0xff]
                %219 = vst [vmem:[%s149 + $0x110] sm:$0xff] %v218
                %v220 = vld [vmem:[%s148 + $0x228] sm:$0xff]
                %221 = vst [vmem:[%s149 + $0x118] sm:$0xff] %v220
                %v222 = vld [vmem:[%s148 + $0x240] sm:$0xff]
                %223 = vst [vmem:[%s149 + $0x120] sm:$0xff] %v222
                %v224 = vld [vmem:[%s148 + $0x248] sm:$0xff]
                %225 = vst [vmem:[%s149 + $0x128] sm:$0xff] %v224
                %v226 = vld [vmem:[%s148 + $0x260] sm:$0xff]
                %227 = vst [vmem:[%s149 + $0x130] sm:$0xff] %v226
                %v228 = vld [vmem:[%s148 + $0x268] sm:$0xff]
                %229 = vst [vmem:[%s149 + $0x138] sm:$0xff] %v228
                %v230 = vld [vmem:[%s148 + $0x280] sm:$0xff]
                %231 = vst [vmem:[%s149 + $0x140] sm:$0xff] %v230
                %v232 = vld [vmem:[%s148 + $0x288] sm:$0xff]
                %233 = vst [vmem:[%s149 + $0x148] sm:$0xff] %v232
                %v234 = vld [vmem:[%s148 + $0x2a0] sm:$0xff]
                %235 = vst [vmem:[%s149 + $0x150] sm:$0xff] %v234
                %v236 = vld [vmem:[%s148 + $0x2a8] sm:$0xff]
                %237 = vst [vmem:[%s149 + $0x158] sm:$0xff] %v236
                %v238 = vld [vmem:[%s148 + $0x2c0] sm:$0xff]
                %239 = vst [vmem:[%s149 + $0x160] sm:$0xff] %v238
                %v240 = vld [vmem:[%s148 + $0x2c8] sm:$0xff]
                %241 = vst [vmem:[%s149 + $0x168] sm:$0xff] %v240
                %v242 = vld [vmem:[%s148 + $0x2e0] sm:$0xff]
                %243 = vst [vmem:[%s149 + $0x170] sm:$0xff] %v242
                %v244 = vld [vmem:[%s148 + $0x2e8] sm:$0xff]
                %245 = vst [vmem:[%s149 + $0x178] sm:$0xff] %v244
                %v246 = vld [vmem:[%s148 + $0x300] sm:$0xff]
                %247 = vst [vmem:[%s149 + $0x180] sm:$0xff] %v246
                %v248 = vld [vmem:[%s148 + $0x308] sm:$0xff]
                %249 = vst [vmem:[%s149 + $0x188] sm:$0xff] %v248
                %v250 = vld [vmem:[%s148 + $0x320] sm:$0xff]
                %251 = vst [vmem:[%s149 + $0x190] sm:$0xff] %v250
                %v252 = vld [vmem:[%s148 + $0x328] sm:$0xff]
                %253 = vst [vmem:[%s149 + $0x198] sm:$0xff] %v252
                %v254 = vld [vmem:[%s148 + $0x340] sm:$0xff]
                %255 = vst [vmem:[%s149 + $0x1a0] sm:$0xff] %v254
                %v256 = vld [vmem:[%s148 + $0x348] sm:$0xff]
                %257 = vst [vmem:[%s149 + $0x1a8] sm:$0xff] %v256
                %v258 = vld [vmem:[%s148 + $0x360] sm:$0xff]
                %259 = vst [vmem:[%s149 + $0x1b0] sm:$0xff] %v258
                %v260 = vld [vmem:[%s148 + $0x368] sm:$0xff]
                %261 = vst [vmem:[%s149 + $0x1b8] sm:$0xff] %v260
                %v262 = vld [vmem:[%s148 + $0x380] sm:$0xff]
                %263 = vst [vmem:[%s149 + $0x1c0] sm:$0xff] %v262
                %v264 = vld [vmem:[%s148 + $0x388] sm:$0xff]
                %265 = vst [vmem:[%s149 + $0x1c8] sm:$0xff] %v264
                %v266 = vld [vmem:[%s148 + $0x3a0] sm:$0xff]
                %267 = vst [vmem:[%s149 + $0x1d0] sm:$0xff] %v266
                %v268 = vld [vmem:[%s148 + $0x3a8] sm:$0xff]
                %269 = vst [vmem:[%s149 + $0x1d8] sm:$0xff] %v268
                %v270 = vld [vmem:[%s148 + $0x3c0] sm:$0xff]
                %271 = vst [vmem:[%s149 + $0x1e0] sm:$0xff] %v270
                %v272 = vld [vmem:[%s148 + $0x3c8] sm:$0xff]
                %273 = vst [vmem:[%s149 + $0x1e8] sm:$0xff] %v272
                %v274 = vld [vmem:[%s148 + $0x3e0] sm:$0xff]
                %275 = vst [vmem:[%s149 + $0x1f0] sm:$0xff] %v274
                %v276 = vld [vmem:[%s148 + $0x3e8] sm:$0xff]
                %277 = vst [vmem:[%s149 + $0x1f8] sm:$0xff] %v276
                %v278 = vld [vmem:[%s148 + $0x400] sm:$0xff]
                %279 = vst [vmem:[%s149 + $0x200] sm:$0xff] %v278
                %v280 = vld [vmem:[%s148 + $0x408] sm:$0xff]
                %281 = vst [vmem:[%s149 + $0x208] sm:$0xff] %v280
                %v282 = vld [vmem:[%s148 + $0x420] sm:$0xff]
                %283 = vst [vmem:[%s149 + $0x210] sm:$0xff] %v282
                %v284 = vld [vmem:[%s148 + $0x428] sm:$0xff]
                %285 = vst [vmem:[%s149 + $0x218] sm:$0xff] %v284
                %v286 = vld [vmem:[%s148 + $0x440] sm:$0xff]
                %287 = vst [vmem:[%s149 + $0x220] sm:$0xff] %v286
                %v288 = vld [vmem:[%s148 + $0x448] sm:$0xff]
                %289 = vst [vmem:[%s149 + $0x228] sm:$0xff] %v288
                %v290 = vld [vmem:[%s148 + $0x460] sm:$0xff]
                %291 = vst [vmem:[%s149 + $0x230] sm:$0xff] %v290
                %v292 = vld [vmem:[%s148 + $0x468] sm:$0xff]
                %293 = vst [vmem:[%s149 + $0x238] sm:$0xff] %v292
                %v294 = vld [vmem:[%s148 + $0x480] sm:$0xff]
                %295 = vst [vmem:[%s149 + $0x240] sm:$0xff] %v294
                %v296 = vld [vmem:[%s148 + $0x488] sm:$0xff]
                %297 = vst [vmem:[%s149 + $0x248] sm:$0xff] %v296
                %v298 = vld [vmem:[%s148 + $0x4a0] sm:$0xff]
                %299 = vst [vmem:[%s149 + $0x250] sm:$0xff] %v298
                %v300 = vld [vmem:[%s148 + $0x4a8] sm:$0xff]
                %301 = vst [vmem:[%s149 + $0x258] sm:$0xff] %v300
                %v302 = vld [vmem:[%s148 + $0x4c0] sm:$0xff]
                %303 = vst [vmem:[%s149 + $0x260] sm:$0xff] %v302
                %v304 = vld [vmem:[%s148 + $0x4c8] sm:$0xff]
                %305 = vst [vmem:[%s149 + $0x268] sm:$0xff] %v304
                %v306 = vld [vmem:[%s148 + $0x4e0] sm:$0xff]
                %307 = vst [vmem:[%s149 + $0x270] sm:$0xff] %v306
                %v308 = vld [vmem:[%s148 + $0x4e8] sm:$0xff]
                %309 = vst [vmem:[%s149 + $0x278] sm:$0xff] %v308
                %v310 = vld [vmem:[%s148 + $0x500] sm:$0xff]
                %311 = vst [vmem:[%s149 + $0x280] sm:$0xff] %v310
                %v312 = vld [vmem:[%s148 + $0x508] sm:$0xff]
                %313 = vst [vmem:[%s149 + $0x288] sm:$0xff] %v312
                %v314 = vld [vmem:[%s148 + $0x520] sm:$0xff]
                %315 = vst [vmem:[%s149 + $0x290] sm:$0xff] %v314
                %v316 = vld [vmem:[%s148 + $0x528] sm:$0xff]
                %317 = vst [vmem:[%s149 + $0x298] sm:$0xff] %v316
                %v318 = vld [vmem:[%s148 + $0x540] sm:$0xff]
                %319 = vst [vmem:[%s149 + $0x2a0] sm:$0xff] %v318
                %v320 = vld [vmem:[%s148 + $0x548] sm:$0xff]
                %321 = vst [vmem:[%s149 + $0x2a8] sm:$0xff] %v320
                %v322 = vld [vmem:[%s148 + $0x560] sm:$0xff]
                %323 = vst [vmem:[%s149 + $0x2b0] sm:$0xff] %v322
                %v324 = vld [vmem:[%s148 + $0x568] sm:$0xff]
                %325 = vst [vmem:[%s149 + $0x2b8] sm:$0xff] %v324
                %v326 = vld [vmem:[%s148 + $0x580] sm:$0xff]
                %327 = vst [vmem:[%s149 + $0x2c0] sm:$0xff] %v326
                %v328 = vld [vmem:[%s148 + $0x588] sm:$0xff]
                %329 = vst [vmem:[%s149 + $0x2c8] sm:$0xff] %v328
                %v330 = vld [vmem:[%s148 + $0x5a0] sm:$0xff]
                %331 = vst [vmem:[%s149 + $0x2d0] sm:$0xff] %v330
                %v332 = vld [vmem:[%s148 + $0x5a8] sm:$0xff]
                %333 = vst [vmem:[%s149 + $0x2d8] sm:$0xff] %v332
                %v334 = vld [vmem:[%s148 + $0x5c0] sm:$0xff]
                %335 = vst [vmem:[%s149 + $0x2e0] sm:$0xff] %v334
                %v336 = vld [vmem:[%s148 + $0x5c8] sm:$0xff]
                %337 = vst [vmem:[%s149 + $0x2e8] sm:$0xff] %v336
                %v338 = vld [vmem:[%s148 + $0x5e0] sm:$0xff]
                %339 = vst [vmem:[%s149 + $0x2f0] sm:$0xff] %v338
                %v340 = vld [vmem:[%s148 + $0x5e8] sm:$0xff]
                %341 = vst [vmem:[%s149 + $0x2f8] sm:$0xff] %v340
                %v342 = vld [vmem:[%s148 + $0x600] sm:$0xff]
                %343 = vst [vmem:[%s149 + $0x300] sm:$0xff] %v342
                %v344 = vld [vmem:[%s148 + $0x608] sm:$0xff]
                %345 = vst [vmem:[%s149 + $0x308] sm:$0xff] %v344
              $region41: #{resnet_generator_forward.27} parent=35 // loop_footer
                %s147 = sadd.s32 1, %s143
              $region42: #{resnet_generator_forward.27} parent=35 // loop_footer_branch
                %142 = sbr.rel target = $region38
              $region43: #{resnet_generator_forward.27} parent=35 // loop_exit
                _
            $region36: #{resnet_generator_forward.27} parent=31 // pred_fallthru
              _
            // Predicated region
            $region44: #{resnet_generator_forward.27} parent=31 // pred_check
              _
            $region45: #{resnet_generator_forward.27} parent=31 // pred_check_branch
              %347 = sbr.rel target = $region47
            $region46: #{resnet_generator_forward.27} parent=31 // pred_region
              _
            $region47: #{resnet_generator_forward.27} parent=31 // pred_fallthru
              _
          $region32: #{resnet_generator_forward.27} parent=27 // pred_fallthru
            _
          %348 = vnop
        $region28: #{resnet_generator_forward.27} parent=23 // pred_fallthru
          _
      $region24: #{resnet_generator_forward.27} parent=5 // pred_fallthru
        _
      %p349 = scmp.le.s32.totalorder 1, %s9
      %p350 = scmp.lt.s32.totalorder %s9, 3
      %p351 = pnand %p349, %p350
      %p352 = pneg %p351
      // Predicated region
      $region48: #{resnet_generator_forward.27} parent=5 // pred_check
        _
      $region49: #{resnet_generator_forward.27} parent=5 // pred_check_branch
        %354 = sbr.rel (%p351) target = $region51
      $region50: #{resnet_generator_forward.27} parent=5 // pred_region
        %s355 = ssub.s32 %s9, 1
        %s356 = sand.u32 %s43, 1
        %s357 = sand.u32 %s43, 1
        %s358 = smul.addr %s357, 784
        %s359 = scalar_lea.vmem [#allocation2], %s358
        // Predicated region
        $region52: #{resnet_generator_forward.27} parent=50 // pred_check
          %p360 = pneg %p56
        $region53: #{resnet_generator_forward.27} parent=50 // pred_check_branch
          %362 = sbr.rel (%p360) target = $region55
        $region54: #{resnet_generator_forward.27} parent=50 // pred_region
          _
        $region55: #{resnet_generator_forward.27} parent=50 // pred_fallthru
          _
        %p363 = pneg %p30
        %p364 = pneg %p27
        %s365 = sand.u32 %s43, 1
        %s366 = sand.u32 %s43, 1
        %s367 = smul.addr %s366, 784
        %s368 = scalar_lea.vmem [#allocation2], %s367
        %p369 = pneg %p56
        %p370 = pneg %p53
        %p371 = pneg %p77
        %p372 = pneg %p74
        %p373 = pneg %p103
        %p374 = pneg %p100
        %s375 = smul.u32 2, %s14
        %p376 = scmp.lt.s32.totalorder %s375, 3
        %s377 = scalar_select %p376, %s375, 3
        %s378 = smul.addr %s377, 4
        %s379 = scalar_lea.vmem %s3, %s378
        %s380 = smul.u32 2, %s14
        %s381 = smul.u32 2, %s14
        %p382 = scmp.lt.s32.totalorder %s381, 3
        %s383 = scalar_select %p382, %s381, 3
        %s384 = smul.addr %s383, 4
        %s385 = scalar_lea.vmem %s3, %s384
        %s386 = smul.u32 2, %s14
        %v387 = vld [vmem:[%s0] sm:$0x77]
        %v388 = vld [vmem:[%s0 + $0x8] sm:$0x77]
        %v389 = vld [vmem:[%s359] sm:$0xff]
        %v390 = vld [vmem:[%s359 + $0x8] sm:$0xff]
        %v391 = vld [vmem:[%s359 + $0x10] sm:$0xff]
        %v392 = vld [vmem:[%s359 + $0x18] sm:$0xff]
        %v393 = vld [vmem:[%s359 + $0x20] sm:$0xff]
        %v394 = vld [vmem:[%s359 + $0x28] sm:$0xff]
        %v395 = vld [vmem:[%s359 + $0x30] sm:$0xff]
        %v396 = vld [vmem:[%s359 + $0x38] sm:$0xff]
        %v397 = vld [vmem:[%s359 + $0x40] sm:$0xff]
        %v398 = vld [vmem:[%s359 + $0x48] sm:$0xff]
        %v399 = vld [vmem:[%s359 + $0x50] sm:$0xff]
        %v400 = vld [vmem:[%s359 + $0x58] sm:$0xff]
        %v401 = vld [vmem:[%s359 + $0x60] sm:$0xff]
        %v402 = vld [vmem:[%s359 + $0x68] sm:$0xff]
        %v403 = vld [vmem:[%s359 + $0x70] sm:$0xff]
        %v404 = vld [vmem:[%s359 + $0x78] sm:$0xff]
        %v405 = vld [vmem:[%s359 + $0x80] sm:$0xff]
        %v406 = vld [vmem:[%s359 + $0x88] sm:$0xff]
        %v407 = vld [vmem:[%s359 + $0x90] sm:$0xff]
        %v408 = vld [vmem:[%s359 + $0x98] sm:$0xff]
        %v409 = vld [vmem:[%s359 + $0xa0] sm:$0xff]
        %v410 = vld [vmem:[%s359 + $0xa8] sm:$0xff]
        %v411 = vld [vmem:[%s359 + $0xb0] sm:$0xff]
        %v412 = vld [vmem:[%s359 + $0xb8] sm:$0xff]
        %v413 = vld [vmem:[%s359 + $0xc0] sm:$0xff]
        %v414 = vld [vmem:[%s359 + $0xc8] sm:$0xff]
        %v415 = vld [vmem:[%s359 + $0xd0] sm:$0xff]
        %v416 = vld [vmem:[%s359 + $0xd8] sm:$0xff]
        %v417 = vld [vmem:[%s359 + $0xe0] sm:$0xff]
        %v418 = vld [vmem:[%s359 + $0xe8] sm:$0xff]
        %v419 = vld [vmem:[%s359 + $0xf0] sm:$0xff]
        %v420 = vld [vmem:[%s359 + $0xf8] sm:$0xff]
        %v421 = vld [vmem:[%s359 + $0x100] sm:$0xff]
        %v422 = vld [vmem:[%s359 + $0x108] sm:$0xff]
        %v423 = vld [vmem:[%s359 + $0x110] sm:$0xff]
        %v424 = vld [vmem:[%s359 + $0x118] sm:$0xff]
        %v425 = vld [vmem:[%s359 + $0x120] sm:$0xff]
        %v426 = vld [vmem:[%s359 + $0x128] sm:$0xff]
        %v427 = vld [vmem:[%s359 + $0x130] sm:$0xff]
        %v428 = vld [vmem:[%s359 + $0x138] sm:$0xff]
        %v429 = vld [vmem:[%s359 + $0x140] sm:$0xff]
        %v430 = vld [vmem:[%s359 + $0x148] sm:$0xff]
        %v431 = vld [vmem:[%s359 + $0x150] sm:$0xff]
        %v432 = vld [vmem:[%s359 + $0x158] sm:$0xff]
        %v433 = vld [vmem:[%s359 + $0x160] sm:$0xff]
        %v434 = vld [vmem:[%s359 + $0x168] sm:$0xff]
        %v435 = vld [vmem:[%s359 + $0x170] sm:$0xff]
        %v436 = vld [vmem:[%s359 + $0x178] sm:$0xff]
        %v437 = vld [vmem:[%s359 + $0x180] sm:$0xff]
        %v438 = vld [vmem:[%s359 + $0x188] sm:$0xff]
        %v439 = vld [vmem:[%s359 + $0x190] sm:$0xff]
        %v440 = vld [vmem:[%s359 + $0x198] sm:$0xff]
        %v441 = vld [vmem:[%s359 + $0x1a0] sm:$0xff]
        %v442 = vld [vmem:[%s359 + $0x1a8] sm:$0xff]
        %v443 = vld [vmem:[%s359 + $0x1b0] sm:$0xff]
        %v444 = vld [vmem:[%s359 + $0x1b8] sm:$0xff]
        %v445 = vld [vmem:[%s359 + $0x1c0] sm:$0xff]
        %v446 = vld [vmem:[%s359 + $0x1c8] sm:$0xff]
        %v447 = vld [vmem:[%s359 + $0x1d0] sm:$0xff]
        %v448 = vld [vmem:[%s359 + $0x1d8] sm:$0xff]
        %v449 = vld [vmem:[%s359 + $0x1e0] sm:$0xff]
        %v450 = vld [vmem:[%s359 + $0x1e8] sm:$0xff]
        %v451 = vld [vmem:[%s359 + $0x1f0] sm:$0xff]
        %v452 = vld [vmem:[%s359 + $0x1f8] sm:$0xff]
        %v453 = vld [vmem:[%s359 + $0x200] sm:$0xff]
        %v454 = vld [vmem:[%s359 + $0x208] sm:$0xff]
        %v455 = vld [vmem:[%s359 + $0x210] sm:$0xff]
        %v456 = vld [vmem:[%s359 + $0x218] sm:$0xff]
        %v457 = vld [vmem:[%s359 + $0x220] sm:$0xff]
        %v458 = vld [vmem:[%s359 + $0x228] sm:$0xff]
        %v459 = vld [vmem:[%s359 + $0x230] sm:$0xff]
        %v460 = vld [vmem:[%s359 + $0x238] sm:$0xff]
        %v461 = vld [vmem:[%s359 + $0x240] sm:$0xff]
        %v462 = vld [vmem:[%s359 + $0x248] sm:$0xff]
        %v463 = vld [vmem:[%s359 + $0x250] sm:$0xff]
        %v464 = vld [vmem:[%s359 + $0x258] sm:$0xff]
        %v465 = vld [vmem:[%s359 + $0x260] sm:$0xff]
        %v466 = vld [vmem:[%s359 + $0x268] sm:$0xff]
        %v467 = vld [vmem:[%s359 + $0x270] sm:$0xff]
        %v468 = vld [vmem:[%s359 + $0x278] sm:$0xff]
        %v469 = vld [vmem:[%s359 + $0x280] sm:$0xff]
        %v470 = vld [vmem:[%s359 + $0x288] sm:$0xff]
        %v471 = vld [vmem:[%s359 + $0x290] sm:$0xff]
        %v472 = vld [vmem:[%s359 + $0x298] sm:$0xff]
        %v473 = vld [vmem:[%s359 + $0x2a0] sm:$0xff]
        %v474 = vld [vmem:[%s359 + $0x2a8] sm:$0xff]
        %v475 = vld [vmem:[%s359 + $0x2b0] sm:$0xff]
        %v476 = vld [vmem:[%s359 + $0x2b8] sm:$0xff]
        %v477 = vld [vmem:[%s359 + $0x2c0] sm:$0xff]
        %v478 = vld [vmem:[%s359 + $0x2c8] sm:$0xff]
        %v479 = vld [vmem:[%s359 + $0x2d0] sm:$0xff]
        %v480 = vld [vmem:[%s359 + $0x2d8] sm:$0xff]
        %v481 = vld [vmem:[%s359 + $0x2e0] sm:$0xff]
        %v482 = vld [vmem:[%s359 + $0x2e8] sm:$0xff]
        %v483 = vld [vmem:[%s359 + $0x2f0] sm:$0xff]
        %v484 = vld [vmem:[%s359 + $0x2f8] sm:$0xff]
        %v485 = vld [vmem:[%s359 + $0x300] sm:$0xff]
        %v486 = vld [vmem:[%s359 + $0x308] sm:$0xff]
        %v487 = vld [vmem:[%s2] sm:$0x7]
        %489 = vset.pattern.permute.xlu0 0
        %490 = vperm.xlu0 %489, %v487
        %v491 = vpop.permute.xlu0 %490
        %495 = vst [vmem:[#allocation1] ss:$2 sm:$0xff] %v387
        %s496 = scalar_lea.vmem [#allocation1], 16
        %497 = vst [vmem:[%s496] ss:$2 sm:$0xff] %v388
        %v498 = vld.sshfl [vmem:[#allocation1] sm:$0xff pattern:$0x75316420]
        %v499 = vld.sshfl [vmem:[#allocation1 + $0x8] sm:$0xff pattern:$0x75316420]
        %v500 = vld.sshfl [vmem:[#allocation1 + $0x10] sm:$0xff pattern:$0x75316420]
        %v501 = vld.sshfl [vmem:[#allocation1 + $0x18] sm:$0xff pattern:$0x75316420]
        %vm505 = vcmask 64512
        %v506 = vsel %vm505, %v501, 0
        %508 = vmatpush.msra.mxu0 %v419
        %509 = vmatpush.msra.mxu0 %v417
        %510 = vmatpush.msra.mxu0 %v415
        %511 = vmatpush.msra.mxu0 %v413
        %512 = vmatpush.msra.mxu0 %v411
        %513 = vmatpush.msra.mxu0 %v409
        %514 = vmatpush.msra.mxu0 %v407
        %515 = vmatpush.msra.mxu0 %v405
        %516 = vmatpush.msra.mxu0 %v403
        %517 = vmatpush.msra.mxu0 %v401
        %518 = vmatpush.msra.mxu0 %v399
        %519 = vmatpush.msra.mxu0 %v397
        %520 = vmatpush.msra.mxu0 %v395
        %521 = vmatpush.msra.mxu0 %v393
        %522 = vmatpush.msra.mxu0 %v391
        %523 = vmatpush.msra.mxu0 %v389
        %524 = vmatmul.f32.gmra.mxu0 %v498
        %v525 = vpop.f32.mrf.mxu0
        %v526 = vadd.f32 %v491, %v525
        %527 = vdwg.mxu0
        %528 = vmatpush.msra.mxu0 %v451
        %529 = vmatpush.msra.mxu0 %v449
        %530 = vmatpush.msra.mxu0 %v447
        %531 = vmatpush.msra.mxu0 %v445
        %532 = vmatpush.msra.mxu0 %v443
        %533 = vmatpush.msra.mxu0 %v441
        %534 = vmatpush.msra.mxu0 %v439
        %535 = vmatpush.msra.mxu0 %v437
        %536 = vmatpush.msra.mxu0 %v435
        %537 = vmatpush.msra.mxu0 %v433
        %538 = vmatpush.msra.mxu0 %v431
        %539 = vmatpush.msra.mxu0 %v429
        %540 = vmatpush.msra.mxu0 %v427
        %541 = vmatpush.msra.mxu0 %v425
        %542 = vmatpush.msra.mxu0 %v423
        %543 = vmatpush.msra.mxu0 %v421
        %544 = vmatmul.f32.gmra.mxu0 %v499
        %v545 = vpop.f32.mrf.mxu0
        %v546 = vadd.f32 %v526, %v545
        %547 = vdwg.mxu0
        %548 = vmatpush.msra.mxu0 %v483
        %549 = vmatpush.msra.mxu0 %v481
        %550 = vmatpush.msra.mxu0 %v479
        %551 = vmatpush.msra.mxu0 %v477
        %552 = vmatpush.msra.mxu0 %v475
        %553 = vmatpush.msra.mxu0 %v473
        %554 = vmatpush.msra.mxu0 %v471
        %555 = vmatpush.msra.mxu0 %v469
        %556 = vmatpush.msra.mxu0 %v467
        %557 = vmatpush.msra.mxu0 %v465
        %558 = vmatpush.msra.mxu0 %v463
        %559 = vmatpush.msra.mxu0 %v461
        %560 = vmatpush.msra.mxu0 %v459
        %561 = vmatpush.msra.mxu0 %v457
        %562 = vmatpush.msra.mxu0 %v455
        %563 = vmatpush.msra.mxu0 %v453
        %564 = vmatmul.f32.gmra.mxu0 %v500
        %v565 = vpop.f32.mrf.mxu0
        %v566 = vadd.f32 %v546, %v565
        %567 = vdwg.mxu0
        %568 = vmatpush.msra.mxu0 0.0
        %569 = vmatpush.msra.mxu0 0.0
        %570 = vmatpush.msra.mxu0 0.0
        %571 = vmatpush.msra.mxu0 0.0
        %572 = vmatpush.msra.mxu0 0.0
        %573 = vmatpush.msra.mxu0 0.0
        %574 = vmatpush.msra.mxu0 0.0
        %575 = vmatpush.msra.mxu0 0.0
        %576 = vmatpush.msra.mxu0 0.0
        %577 = vmatpush.msra.mxu0 0.0
        %578 = vmatpush.msra.mxu0 0.0
        %579 = vmatpush.msra.mxu0 0.0
        %580 = vmatpush.msra.mxu0 0.0
        %581 = vmatpush.msra.mxu0 0.0
        %582 = vmatpush.msra.mxu0 0.0
        %583 = vmatpush.msra.mxu0 %v485
        %584 = vmatmul.f32.gmra.mxu0 %v506
        %v585 = vpop.f32.mrf.mxu0
        %v586 = vadd.f32 %v566, %v585
        %587 = vdwg.mxu0
        %588 = vmatpush.msra.mxu0 %v420
        %589 = vmatpush.msra.mxu0 %v418
        %590 = vmatpush.msra.mxu0 %v416
        %591 = vmatpush.msra.mxu0 %v414
        %592 = vmatpush.msra.mxu0 %v412
        %593 = vmatpush.msra.mxu0 %v410
        %594 = vmatpush.msra.mxu0 %v408
        %595 = vmatpush.msra.mxu0 %v406
        %596 = vmatpush.msra.mxu0 %v404
        %597 = vmatpush.msra.mxu0 %v402
        %598 = vmatpush.msra.mxu0 %v400
        %599 = vmatpush.msra.mxu0 %v398
        %600 = vmatpush.msra.mxu0 %v396
        %601 = vmatpush.msra.mxu0 %v394
        %602 = vmatpush.msra.mxu0 %v392
        %603 = vmatpush.msra.mxu0 %v390
        %604 = vmatmul.f32.gmra.mxu0 %v498
        %v605 = vpop.f32.mrf.mxu0
        %v606 = vadd.f32 %v491, %v605
        %607 = vdwg.mxu0
        %608 = vmatpush.msra.mxu0 %v452
        %609 = vmatpush.msra.mxu0 %v450
        %610 = vmatpush.msra.mxu0 %v448
        %611 = vmatpush.msra.mxu0 %v446
        %612 = vmatpush.msra.mxu0 %v444
        %613 = vmatpush.msra.mxu0 %v442
        %614 = vmatpush.msra.mxu0 %v440
        %615 = vmatpush.msra.mxu0 %v438
        %616 = vmatpush.msra.mxu0 %v436
        %617 = vmatpush.msra.mxu0 %v434
        %618 = vmatpush.msra.mxu0 %v432
        %619 = vmatpush.msra.mxu0 %v430
        %620 = vmatpush.msra.mxu0 %v428
        %621 = vmatpush.msra.mxu0 %v426
        %622 = vmatpush.msra.mxu0 %v424
        %623 = vmatpush.msra.mxu0 %v422
        %624 = vmatmul.f32.gmra.mxu0 %v499
        %v625 = vpop.f32.mrf.mxu0
        %v626 = vadd.f32 %v606, %v625
        %627 = vdwg.mxu0
        %628 = vmatpush.msra.mxu0 %v484
        %629 = vmatpush.msra.mxu0 %v482
        %630 = vmatpush.msra.mxu0 %v480
        %631 = vmatpush.msra.mxu0 %v478
        %632 = vmatpush.msra.mxu0 %v476
        %633 = vmatpush.msra.mxu0 %v474
        %634 = vmatpush.msra.mxu0 %v472
        %635 = vmatpush.msra.mxu0 %v470
        %636 = vmatpush.msra.mxu0 %v468
        %637 = vmatpush.msra.mxu0 %v466
        %638 = vmatpush.msra.mxu0 %v464
        %639 = vmatpush.msra.mxu0 %v462
        %640 = vmatpush.msra.mxu0 %v460
        %641 = vmatpush.msra.mxu0 %v458
        %642 = vmatpush.msra.mxu0 %v456
        %643 = vmatpush.msra.mxu0 %v454
        %644 = vmatmul.f32.gmra.mxu0 %v500
        %v645 = vpop.f32.mrf.mxu0
        %v646 = vadd.f32 %v626, %v645
        %647 = vdwg.mxu0
        %648 = vmatpush.msra.mxu0 0.0
        %649 = vmatpush.msra.mxu0 0.0
        %650 = vmatpush.msra.mxu0 0.0
        %651 = vmatpush.msra.mxu0 0.0
        %652 = vmatpush.msra.mxu0 0.0
        %653 = vmatpush.msra.mxu0 0.0
        %654 = vmatpush.msra.mxu0 0.0
        %655 = vmatpush.msra.mxu0 0.0
        %656 = vmatpush.msra.mxu0 0.0
        %657 = vmatpush.msra.mxu0 0.0
        %658 = vmatpush.msra.mxu0 0.0
        %659 = vmatpush.msra.mxu0 0.0
        %660 = vmatpush.msra.mxu0 0.0
        %661 = vmatpush.msra.mxu0 0.0
        %662 = vmatpush.msra.mxu0 0.0
        %663 = vmatpush.msra.mxu0 %v486
        %664 = vmatmul.f32.gmra.mxu0 %v506
        %v665 = vpop.f32.mrf.mxu0
        %v666 = vadd.f32 %v646, %v665
        %667 = vdwg.mxu0
        %v668 = vtanh.pop %v586
        %v669 = vtanh.pop %v666
        %v672 = vrot.slane %v669, 4
        %vm673 = vcmask 1043456
        %v674 = vsel %vm673, %v668, %v672
        %676 = vst [vmem:[%s385] sm:$0x77] %v674
        %s677 = smul.u32 2, %s14
        %p678 = scmp.lt.s32.totalorder %s677, 3
        %s679 = scalar_select %p678, %s677, 3
        %s680 = smul.addr %s679, 4
        %s681 = scalar_lea.vmem %s3, %s680
        // Predicated region
        $region56: #{resnet_generator_forward.27} parent=50 // pred_check
          %p682 = pneg %p100
        $region57: #{resnet_generator_forward.27} parent=50 // pred_check_branch
          %684 = sbr.rel (%p682) target = $region59
        $region58: #{resnet_generator_forward.27} parent=50 // pred_region
          %s685 = smul.u32 2, %s14
        $region59: #{resnet_generator_forward.27} parent=50 // pred_fallthru
          _
      $region51: #{resnet_generator_forward.27} parent=5 // pred_fallthru
        _
      %p686 = scmp.le.s32.totalorder 2, %s9
      // Predicated region
      $region60: #{resnet_generator_forward.27} parent=5 // pred_check
        %p687 = pneg %p686
      $region61: #{resnet_generator_forward.27} parent=5 // pred_check_branch
        %689 = sbr.rel (%p687) target = $region63
      $region62: #{resnet_generator_forward.27} parent=5 // pred_region
        %s690 = ssub.s32 %s9, 2
        // Predicated region
        $region64: #{resnet_generator_forward.27} parent=62 // pred_check
          %p691 = pneg %p106
        $region65: #{resnet_generator_forward.27} parent=62 // pred_check_branch
          %693 = sbr.rel (%p691) target = $region67
        $region66: #{resnet_generator_forward.27} parent=62 // pred_region
          %s694 = smul.u32 2, %s15
          %p695 = scmp.lt.s32.totalorder %s694, 3
          %s696 = scalar_select %p695, %s694, 3
          %s697 = smul.addr %s696, 4
          %s698 = scalar_lea.vmem %s3, %s697
        $region67: #{resnet_generator_forward.27} parent=62 // pred_fallthru
          _
      $region63: #{resnet_generator_forward.27} parent=5 // pred_fallthru
        _
    $region6: #{resnet_generator_forward.27} parent=1 // loop_footer
      %s13 = sadd.s32 1, %s9
    $region7: #{resnet_generator_forward.27} parent=1 // loop_footer_branch
      %8 = sbr.rel target = $region3
    $region8: #{resnet_generator_forward.27} parent=1 // loop_exit
      _

</llo_original>
